<compile_context>
chip_gen: v7x
topology: tpu7x:2x2x1
jax: 0.10.0
libtpu: 0.0.40
codegen_flags: <defaults>
</compile_context>

<pallas_src>
import jax
import jax.numpy as jnp
from jax import lax
from jax.experimental import pallas as pl
from jax.experimental.pallas import tpu as pltpu

# ---------------- model hyper-params (match the PyTorch module) --------------
VOCAB = 128          # nums_embedding
EMB_DIM = 16         # embedding_dim
HIDDEN = 32          # hidden_size
NUM_LAYERS = 2
SEQ = 8              # sequence_size
BATCH = 2

# ---------------- kernel layout constants ------------------------------------
BP = 8               # padded batch: one full sublane group (each h state = 1 vreg)
GW = 128             # packed gate width: 3*HIDDEN = 96 gate lanes in one 128-lane slab


# ---------------------------- fused Pallas kernel ----------------------------
def fused_gru_kernel(tok_ref, m0_ref, whh0_ref, bhn0_ref,
                     wih1_ref, bi1_ref, whh1_ref, bhn1_ref,
                     wh_ref, bh_ref, o_ref):
    """Whole forward pass in one kernel.

    tok_ref  : (T*BP, 1)  int32  padded token ids (padded rows = -1 -> zero one-hot)
    m0_ref   : (VOCAB, GW) bf16  fused [embedding @ W_ih0^T + combined ih/hh biases]
    whh0/1   : (H, GW)     bf16  recurrent weights, gates packed in lanes [0:96)
    bhn0/1   : (1, H)      f32   hh n-gate bias (applied inside the r* term)
    wih1_ref : (H, GW)     bf16  layer-1 input weights (packed gates)
    bi1_ref  : (1, GW)     f32   layer-1 combined ih/hh biases (n part = ih only)
    wh_ref   : (T*H, VOCAB) bf16 head weight = linear_w.T (flatten(t,h) folded in)
    bh_ref   : (1, VOCAB)  f32
    o_ref    : (BP, VOCAB) f32   log-probs (padded batch rows sliced off outside)
    """
    f32, bf16 = jnp.float32, jnp.bfloat16
    T, H = SEQ, HIDDEN

    # one-hot of all tokens (cheap VPU); padded rows (tok = -1) are all-zero
    tok = tok_ref[...]                                               # (T*BP, 1)
    iota = lax.broadcasted_iota(jnp.int32, (T * BP, VOCAB), 1)
    onehot = (iota == tok).astype(bf16)                              # (T*BP, V)

    bhn0 = bhn0_ref[...]
    bhn1 = bhn1_ref[...]
    bi1 = bi1_ref[...]

    def gru_step(h, h_bf, gi, whh_ref_, bhn):
        # gi / gh carry the three gates packed in lanes [0:96): r | z | n
        gh = jnp.dot(h_bf, whh_ref_[...], preferred_element_type=f32)    # (BP, GW)
        s = jax.nn.sigmoid(gi + gh)            # r and z in ONE EUP push (lanes 0:64)
        r = s[:, 0:H]
        z = s[:, H:2 * H]
        n = jnp.tanh(gi[:, 2 * H:3 * H] + r * (gh[:, 2 * H:3 * H] + bhn))
        h_new = (1.0 - z) * n + z * h                                    # (BP, H) f32
        return h_new, h_new.astype(bf16)

    # ---- layer 0: per-step fused embedding+input-projection lookup ---------
    # gi0_t depends only on the tokens, so the LLO scheduler hoists/hides these
    # matmuls under the serial recurrence (no monolithic prologue stall).
    h0 = jnp.zeros((BP, H), f32)
    h0_bf = h0.astype(bf16)
    h0_hist = []
    for t in range(T):                                               # unrolled
        gi0 = jnp.dot(onehot[t * BP:(t + 1) * BP, :], m0_ref[...],
                      preferred_element_type=f32)                    # bias folded in m0
        h0, h0_bf = gru_step(h0, h0_bf, gi0, whh0_ref, bhn0)
        h0_hist.append(h0_bf)

    # ---- layer 1: wavefront — step t needs only h0[t] and h1[t-1] ----------
    # Head contributions are accumulated per step so they overlap the recurrence.
    h1 = jnp.zeros((BP, H), f32)
    h1_bf = h1.astype(bf16)
    acc = jnp.zeros((BP, VOCAB), f32)
    for t in range(T):                                               # unrolled
        gi1 = jnp.dot(h0_hist[t], wih1_ref[...],
                      preferred_element_type=f32) + bi1
        h1, h1_bf = gru_step(h1, h1_bf, gi1, whh1_ref, bhn1)
        acc = acc + jnp.dot(h1_bf, wh_ref[pl.ds(t * H, H), :],
                            preferred_element_type=f32)

    logits = acc + bh_ref[...]

    # ---- log_softmax over V = 128 (lane-dense output) ----------------------
    m = jnp.max(logits, axis=-1, keepdims=True)
    shifted = logits - m
    lse = jnp.log(jnp.sum(jnp.exp(shifted), axis=-1, keepdims=True))
    o_ref[...] = (shifted - lse).astype(o_ref.dtype)


# ------------------------- one-time parameter prep ---------------------------
def prepare_params(params):
    """Fold / pack / pre-cast weights ONCE (not per forward call)."""
    assert NUM_LAYERS == 2, "fused kernel is specialised for 2 GRU layers"
    H = HIDDEN
    f32, bf16 = jnp.float32, jnp.bfloat16

    def combined_ih_bias(b_ih, b_hh):
        # r/z hh-biases pre-summed into the input-path bias; the n-gate hh-bias
        # must stay separate (it sits inside the r* term).
        b_ih = jnp.asarray(b_ih, f32)
        b_hh = jnp.asarray(b_hh, f32)
        return jnp.concatenate([b_ih[:2 * H] + b_hh[:2 * H], b_ih[2 * H:]])

    def pack_gate_cols(w):           # (3H, in_dim) PyTorch layout -> (in_dim, GW)
        wt = jnp.asarray(w, f32).T   # gate order r|z|n stays contiguous in lanes 0:96
        return jnp.zeros((wt.shape[0], GW), f32).at[:, :3 * H].set(wt)

    l0, l1 = params["gru_layers"]

    # Fuse (frozen) embedding + layer-0 input projection + combined biases into
    # one lookup table: m0[v] = emb[v] @ W_ih0^T + b_i0   (exact, done in f32).
    emb = jnp.asarray(params["embedding"], f32)                       # (V, E)
    gi0 = emb @ jnp.asarray(l0["w_ih"], f32).T \
        + combined_ih_bias(l0["b_ih"], l0["b_hh"])[None, :]           # (V, 3H)
    m0 = jnp.zeros((VOCAB, GW), f32).at[:, :3 * H].set(gi0).astype(bf16)

    whh0 = pack_gate_cols(l0["w_hh"]).astype(bf16)                    # (H, GW)
    bhn0 = jnp.asarray(l0["b_hh"], f32)[2 * H:].reshape(1, H)

    wih1 = pack_gate_cols(l1["w_ih"]).astype(bf16)                    # (H, GW)
    bi1 = jnp.zeros((1, GW), f32).at[0, :3 * H].set(
        combined_ih_bias(l1["b_ih"], l1["b_hh"]))
    whh1 = pack_gate_cols(l1["w_hh"]).astype(bf16)
    bhn1 = jnp.asarray(l1["b_hh"], f32)[2 * H:].reshape(1, H)

    # head: logits[b,v] = sum_{t,h} y1[b,t,h] * W[v, t*H+h] + b[v]
    wh = jnp.asarray(params["linear_w"], f32).T.astype(bf16)          # (T*H, V)
    bh = jnp.asarray(params["linear_b"], f32).reshape(1, VOCAB)

    return dict(m0=m0, whh0=whh0, bhn0=bhn0, wih1=wih1, bi1=bi1,
                whh1=whh1, bhn1=bhn1, wh=wh, bh=bh)


# ------------------------------ forward wrapper -------------------------------
def gru_model_forward(token_ids, p):
    B, T = token_ids.shape
    # pad token ids to (T, BP) time-major; padded rows get -1 -> zero one-hot
    tok_p = jnp.full((T, BP), -1, jnp.int32).at[:, :B].set(token_ids.T.astype(jnp.int32))
    tok_p = tok_p.reshape(T * BP, 1)

    out = pl.pallas_call(
        fused_gru_kernel,
        out_shape=jax.ShapeDtypeStruct((BP, VOCAB), jnp.float32),
        in_specs=[pl.BlockSpec(memory_space=pltpu.MemorySpace.VMEM)] * 10,
        out_specs=pl.BlockSpec(memory_space=pltpu.MemorySpace.VMEM),
    )(tok_p, p["m0"], p["whh0"], p["bhn0"], p["wih1"], p["bi1"],
      p["whh1"], p["bhn1"], p["wh"], p["bh"])
    return out[:B]                                        # drop padded batch rows


# ------------------------- pure-JAX reference ---------------------------------
def gru_model_reference(token_ids, params):
    x = jnp.take(params["embedding"], token_ids, axis=0)      # (B, T, E)
    for lw in params["gru_layers"]:
        w_ih, w_hh = lw["w_ih"], lw["w_hh"]
        b_ih, b_hh = lw["b_ih"], lw["b_hh"]
        B = x.shape[0]
        h = jnp.zeros((B, HIDDEN), jnp.float32)
        outs = []
        for t in range(x.shape[1]):
            x_t = x[:, t, :]
            gi = x_t @ w_ih.T + b_ih
            gh = h @ w_hh.T + b_hh
            i_r, i_z, i_n = jnp.split(gi, 3, axis=-1)
            h_r, h_z, h_n = jnp.split(gh, 3, axis=-1)
            r = jax.nn.sigmoid(i_r + h_r)
            z = jax.nn.sigmoid(i_z + h_z)
            n = jnp.tanh(i_n + r * h_n)
            h = (1.0 - z) * n + z * h
            outs.append(h)
        x = jnp.stack(outs, axis=1)                            # (B, T, H)
    y = x.reshape(token_ids.shape[0], -1)
    logits = y @ params["linear_w"].T + params["linear_b"]
    return jax.nn.log_softmax(logits, axis=1)


# ------------------------------- params ---------------------------------------
def init_params(key):
    ks = jax.random.split(key, 3 + 4 * NUM_LAYERS)
    params = {
        "embedding": jax.random.normal(ks[0], (VOCAB, EMB_DIM), jnp.float32) * 0.1,
        "linear_w": jax.random.normal(ks[1], (VOCAB, HIDDEN * SEQ), jnp.float32) * 0.05,
        "linear_b": jax.random.normal(ks[2], (VOCAB,), jnp.float32) * 0.05,
        "gru_layers": [],
    }
    for l in range(NUM_LAYERS):
        in_dim = EMB_DIM if l == 0 else HIDDEN
        k0, k1, k2, k3 = ks[3 + 4 * l: 3 + 4 * (l + 1)]
        params["gru_layers"].append({
            "w_ih": jax.random.normal(k0, (3 * HIDDEN, in_dim), jnp.float32) * 0.1,
            "w_hh": jax.random.normal(k1, (3 * HIDDEN, HIDDEN), jnp.float32) * 0.1,
            "b_ih": jax.random.normal(k2, (3 * HIDDEN,), jnp.float32) * 0.1,
            "b_hh": jax.random.normal(k3, (3 * HIDDEN,), jnp.float32) * 0.1,
        })
    return params


# -------------------------------- main -----------------------------------------
if __name__ == "__main__":
    root = jax.random.PRNGKey(0)
    pkey, ikey = jax.random.split(root)
    params = init_params(pkey)
    prepped = prepare_params(params)                     # one-time weight prep
    token_ids = jax.random.randint(ikey, (BATCH, SEQ), 0, VOCAB, dtype=jnp.int32)

    fwd = jax.jit(gru_model_forward)
    out = jax.block_until_ready(fwd(token_ids, prepped))
    ref = jax.block_until_ready(gru_model_reference(token_ids, params))

    assert out.shape == (BATCH, VOCAB), out.shape
    max_err = float(jnp.max(jnp.abs(out - ref)))
    # bf16 MXU operands -> tolerance relaxed vs the f32 reference (per review)
    assert jnp.allclose(out, ref, rtol=2e-2, atol=2e-2), max_err
    print("KERNEL_OK")
</pallas_src>

<mosaic_0001>
module attributes {stable_mosaic.version = 11 : i64} {
  func.func @fused_gru_kernel(%arg0: memref<64x1xi32, #tpu.memory_space<vmem>>, %arg1: memref<128x128xbf16, #tpu.memory_space<vmem>>, %arg2: memref<32x128xbf16, #tpu.memory_space<vmem>>, %arg3: memref<1x32xf32, #tpu.memory_space<vmem>>, %arg4: memref<32x128xbf16, #tpu.memory_space<vmem>>, %arg5: memref<1x128xf32, #tpu.memory_space<vmem>>, %arg6: memref<32x128xbf16, #tpu.memory_space<vmem>>, %arg7: memref<1x32xf32, #tpu.memory_space<vmem>>, %arg8: memref<256x128xbf16, #tpu.memory_space<vmem>>, %arg9: memref<1x128xf32, #tpu.memory_space<vmem>>, %arg10: memref<8x128xf32, #tpu.memory_space<vmem>>) attributes {dimension_semantics = [], scalar_prefetch = 0 : i64, scratch_operands = 0 : i64, tpu.core_type = #tpu.core_type<tc>} {
    %c0 = arith.constant 0 : index
    %c0_0 = arith.constant 0 : index
    %0 = vector.load %arg0[%c0, %c0_0] : memref<64x1xi32, #tpu.memory_space<vmem>>, vector<64x1xi32>
    %1 = tpu.iota {dimensions = array<i32: 1>} : vector<64x128xi32>
    %2 = vector.broadcast %0 : vector<64x1xi32> to vector<64x128xi32>
    %3 = arith.cmpi eq, %1, %2 : vector<64x128xi32>
    %4 = arith.extui %3 : vector<64x128xi1> to vector<64x128xi32>
    %5 = arith.sitofp %4 : vector<64x128xi32> to vector<64x128xf32>
    %6 = arith.truncf %5 : vector<64x128xf32> to vector<64x128xbf16>
    %c0_1 = arith.constant 0 : index
    %c0_2 = arith.constant 0 : index
    %7 = vector.load %arg3[%c0_1, %c0_2] : memref<1x32xf32, #tpu.memory_space<vmem>>, vector<1x32xf32>
    %c0_3 = arith.constant 0 : index
    %c0_4 = arith.constant 0 : index
    %8 = vector.load %arg7[%c0_3, %c0_4] : memref<1x32xf32, #tpu.memory_space<vmem>>, vector<1x32xf32>
    %c0_5 = arith.constant 0 : index
    %c0_6 = arith.constant 0 : index
    %9 = vector.load %arg5[%c0_5, %c0_6] : memref<1x128xf32, #tpu.memory_space<vmem>>, vector<1x128xf32>
    %cst = arith.constant 0.000000e+00 : f32
    %10 = vector.broadcast %cst : f32 to vector<8x32xf32>
    %11 = arith.truncf %10 : vector<8x32xf32> to vector<8x32xbf16>
    %12 = vector.extract_strided_slice %6 {offsets = [0, 0], sizes = [8, 128], strides = [1, 1]} : vector<64x128xbf16> to vector<8x128xbf16>
    %c0_7 = arith.constant 0 : index
    %c0_8 = arith.constant 0 : index
    %13 = vector.load %arg1[%c0_7, %c0_8] : memref<128x128xbf16, #tpu.memory_space<vmem>>, vector<128x128xbf16>
    %cst_9 = arith.constant dense<0.000000e+00> : vector<8x128xf32>
    %14 = tpu.matmul %12, %13, %cst_9 {dimension_numbers = #tpu.dot_dimension_numbers<[1], [0], [0], [1], [0, 0, 1, 1], [], []>} : vector<8x128xbf16>, vector<128x128xbf16>, vector<8x128xf32> -> vector<8x128xf32>
    %c0_10 = arith.constant 0 : index
    %c0_11 = arith.constant 0 : index
    %15 = vector.load %arg2[%c0_10, %c0_11] : memref<32x128xbf16, #tpu.memory_space<vmem>>, vector<32x128xbf16>
    %cst_12 = arith.constant dense<0.000000e+00> : vector<8x128xf32>
    %16 = tpu.matmul %11, %15, %cst_12 {dimension_numbers = #tpu.dot_dimension_numbers<[1], [0], [0], [1], [0, 0, 1, 1], [], []>} : vector<8x32xbf16>, vector<32x128xbf16>, vector<8x128xf32> -> vector<8x128xf32>
    %17 = arith.addf %14, %16 : vector<8x128xf32>
    %18 = arith.negf %17 : vector<8x128xf32>
    %19 = math.exp %18 : vector<8x128xf32>
    %cst_13 = arith.constant 1.000000e+00 : f32
    %20 = vector.broadcast %cst_13 : f32 to vector<8x128xf32>
    %21 = arith.addf %20, %19 : vector<8x128xf32>
    %22 = arith.divf %20, %21 : vector<8x128xf32>
    %23 = vector.extract_strided_slice %22 {offsets = [0, 0], sizes = [8, 32], strides = [1, 1]} : vector<8x128xf32> to vector<8x32xf32>
    %24 = vector.extract_strided_slice %22 {offsets = [0, 32], sizes = [8, 32], strides = [1, 1]} : vector<8x128xf32> to vector<8x32xf32>
    %25 = vector.extract_strided_slice %14 {offsets = [0, 64], sizes = [8, 32], strides = [1, 1]} : vector<8x128xf32> to vector<8x32xf32>
    %26 = vector.extract_strided_slice %16 {offsets = [0, 64], sizes = [8, 32], strides = [1, 1]} : vector<8x128xf32> to vector<8x32xf32>
    %27 = vector.broadcast %7 : vector<1x32xf32> to vector<8x32xf32>
    %28 = arith.addf %26, %27 : vector<8x32xf32>
    %29 = arith.mulf %23, %28 : vector<8x32xf32>
    %30 = arith.addf %25, %29 : vector<8x32xf32>
    %31 = math.tanh %30 : vector<8x32xf32>
    %cst_14 = arith.constant 1.000000e+00 : f32
    %32 = vector.broadcast %cst_14 : f32 to vector<8x32xf32>
    %33 = arith.subf %32, %24 : vector<8x32xf32>
    %34 = arith.mulf %33, %31 : vector<8x32xf32>
    %35 = arith.mulf %24, %10 : vector<8x32xf32>
    %36 = arith.addf %34, %35 : vector<8x32xf32>
    %37 = arith.truncf %36 : vector<8x32xf32> to vector<8x32xbf16>
    %38 = vector.extract_strided_slice %6 {offsets = [8, 0], sizes = [8, 128], strides = [1, 1]} : vector<64x128xbf16> to vector<8x128xbf16>
    %c0_15 = arith.constant 0 : index
    %c0_16 = arith.constant 0 : index
    %39 = vector.load %arg1[%c0_15, %c0_16] : memref<128x128xbf16, #tpu.memory_space<vmem>>, vector<128x128xbf16>
    %cst_17 = arith.constant dense<0.000000e+00> : vector<8x128xf32>
    %40 = tpu.matmul %38, %39, %cst_17 {dimension_numbers = #tpu.dot_dimension_numbers<[1], [0], [0], [1], [0, 0, 1, 1], [], []>} : vector<8x128xbf16>, vector<128x128xbf16>, vector<8x128xf32> -> vector<8x128xf32>
    %c0_18 = arith.constant 0 : index
    %c0_19 = arith.constant 0 : index
    %41 = vector.load %arg2[%c0_18, %c0_19] : memref<32x128xbf16, #tpu.memory_space<vmem>>, vector<32x128xbf16>
    %cst_20 = arith.constant dense<0.000000e+00> : vector<8x128xf32>
    %42 = tpu.matmul %37, %41, %cst_20 {dimension_numbers = #tpu.dot_dimension_numbers<[1], [0], [0], [1], [0, 0, 1, 1], [], []>} : vector<8x32xbf16>, vector<32x128xbf16>, vector<8x128xf32> -> vector<8x128xf32>
    %43 = arith.addf %40, %42 : vector<8x128xf32>
    %44 = arith.negf %43 : vector<8x128xf32>
    %45 = math.exp %44 : vector<8x128xf32>
    %cst_21 = arith.constant 1.000000e+00 : f32
    %46 = vector.broadcast %cst_21 : f32 to vector<8x128xf32>
    %47 = arith.addf %46, %45 : vector<8x128xf32>
    %48 = arith.divf %46, %47 : vector<8x128xf32>
    %49 = vector.extract_strided_slice %48 {offsets = [0, 0], sizes = [8, 32], strides = [1, 1]} : vector<8x128xf32> to vector<8x32xf32>
    %50 = vector.extract_strided_slice %48 {offsets = [0, 32], sizes = [8, 32], strides = [1, 1]} : vector<8x128xf32> to vector<8x32xf32>
    %51 = vector.extract_strided_slice %40 {offsets = [0, 64], sizes = [8, 32], strides = [1, 1]} : vector<8x128xf32> to vector<8x32xf32>
    %52 = vector.extract_strided_slice %42 {offsets = [0, 64], sizes = [8, 32], strides = [1, 1]} : vector<8x128xf32> to vector<8x32xf32>
    %53 = vector.broadcast %7 : vector<1x32xf32> to vector<8x32xf32>
    %54 = arith.addf %52, %53 : vector<8x32xf32>
    %55 = arith.mulf %49, %54 : vector<8x32xf32>
    %56 = arith.addf %51, %55 : vector<8x32xf32>
    %57 = math.tanh %56 : vector<8x32xf32>
    %cst_22 = arith.constant 1.000000e+00 : f32
    %58 = vector.broadcast %cst_22 : f32 to vector<8x32xf32>
    %59 = arith.subf %58, %50 : vector<8x32xf32>
    %60 = arith.mulf %59, %57 : vector<8x32xf32>
    %61 = arith.mulf %50, %36 : vector<8x32xf32>
    %62 = arith.addf %60, %61 : vector<8x32xf32>
    %63 = arith.truncf %62 : vector<8x32xf32> to vector<8x32xbf16>
    %64 = vector.extract_strided_slice %6 {offsets = [16, 0], sizes = [8, 128], strides = [1, 1]} : vector<64x128xbf16> to vector<8x128xbf16>
    %c0_23 = arith.constant 0 : index
    %c0_24 = arith.constant 0 : index
    %65 = vector.load %arg1[%c0_23, %c0_24] : memref<128x128xbf16, #tpu.memory_space<vmem>>, vector<128x128xbf16>
    %cst_25 = arith.constant dense<0.000000e+00> : vector<8x128xf32>
    %66 = tpu.matmul %64, %65, %cst_25 {dimension_numbers = #tpu.dot_dimension_numbers<[1], [0], [0], [1], [0, 0, 1, 1], [], []>} : vector<8x128xbf16>, vector<128x128xbf16>, vector<8x128xf32> -> vector<8x128xf32>
    %c0_26 = arith.constant 0 : index
    %c0_27 = arith.constant 0 : index
    %67 = vector.load %arg2[%c0_26, %c0_27] : memref<32x128xbf16, #tpu.memory_space<vmem>>, vector<32x128xbf16>
    %cst_28 = arith.constant dense<0.000000e+00> : vector<8x128xf32>
    %68 = tpu.matmul %63, %67, %cst_28 {dimension_numbers = #tpu.dot_dimension_numbers<[1], [0], [0], [1], [0, 0, 1, 1], [], []>} : vector<8x32xbf16>, vector<32x128xbf16>, vector<8x128xf32> -> vector<8x128xf32>
    %69 = arith.addf %66, %68 : vector<8x128xf32>
    %70 = arith.negf %69 : vector<8x128xf32>
    %71 = math.exp %70 : vector<8x128xf32>
    %cst_29 = arith.constant 1.000000e+00 : f32
    %72 = vector.broadcast %cst_29 : f32 to vector<8x128xf32>
    %73 = arith.addf %72, %71 : vector<8x128xf32>
    %74 = arith.divf %72, %73 : vector<8x128xf32>
    %75 = vector.extract_strided_slice %74 {offsets = [0, 0], sizes = [8, 32], strides = [1, 1]} : vector<8x128xf32> to vector<8x32xf32>
    %76 = vector.extract_strided_slice %74 {offsets = [0, 32], sizes = [8, 32], strides = [1, 1]} : vector<8x128xf32> to vector<8x32xf32>
    %77 = vector.extract_strided_slice %66 {offsets = [0, 64], sizes = [8, 32], strides = [1, 1]} : vector<8x128xf32> to vector<8x32xf32>
    %78 = vector.extract_strided_slice %68 {offsets = [0, 64], sizes = [8, 32], strides = [1, 1]} : vector<8x128xf32> to vector<8x32xf32>
    %79 = vector.broadcast %7 : vector<1x32xf32> to vector<8x32xf32>
    %80 = arith.addf %78, %79 : vector<8x32xf32>
    %81 = arith.mulf %75, %80 : vector<8x32xf32>
    %82 = arith.addf %77, %81 : vector<8x32xf32>
    %83 = math.tanh %82 : vector<8x32xf32>
    %cst_30 = arith.constant 1.000000e+00 : f32
    %84 = vector.broadcast %cst_30 : f32 to vector<8x32xf32>
    %85 = arith.subf %84, %76 : vector<8x32xf32>
    %86 = arith.mulf %85, %83 : vector<8x32xf32>
    %87 = arith.mulf %76, %62 : vector<8x32xf32>
    %88 = arith.addf %86, %87 : vector<8x32xf32>
    %89 = arith.truncf %88 : vector<8x32xf32> to vector<8x32xbf16>
    %90 = vector.extract_strided_slice %6 {offsets = [24, 0], sizes = [8, 128], strides = [1, 1]} : vector<64x128xbf16> to vector<8x128xbf16>
    %c0_31 = arith.constant 0 : index
    %c0_32 = arith.constant 0 : index
    %91 = vector.load %arg1[%c0_31, %c0_32] : memref<128x128xbf16, #tpu.memory_space<vmem>>, vector<128x128xbf16>
    %cst_33 = arith.constant dense<0.000000e+00> : vector<8x128xf32>
    %92 = tpu.matmul %90, %91, %cst_33 {dimension_numbers = #tpu.dot_dimension_numbers<[1], [0], [0], [1], [0, 0, 1, 1], [], []>} : vector<8x128xbf16>, vector<128x128xbf16>, vector<8x128xf32> -> vector<8x128xf32>
    %c0_34 = arith.constant 0 : index
    %c0_35 = arith.constant 0 : index
    %93 = vector.load %arg2[%c0_34, %c0_35] : memref<32x128xbf16, #tpu.memory_space<vmem>>, vector<32x128xbf16>
    %cst_36 = arith.constant dense<0.000000e+00> : vector<8x128xf32>
    %94 = tpu.matmul %89, %93, %cst_36 {dimension_numbers = #tpu.dot_dimension_numbers<[1], [0], [0], [1], [0, 0, 1, 1], [], []>} : vector<8x32xbf16>, vector<32x128xbf16>, vector<8x128xf32> -> vector<8x128xf32>
    %95 = arith.addf %92, %94 : vector<8x128xf32>
    %96 = arith.negf %95 : vector<8x128xf32>
    %97 = math.exp %96 : vector<8x128xf32>
    %cst_37 = arith.constant 1.000000e+00 : f32
    %98 = vector.broadcast %cst_37 : f32 to vector<8x128xf32>
    %99 = arith.addf %98, %97 : vector<8x128xf32>
    %100 = arith.divf %98, %99 : vector<8x128xf32>
    %101 = vector.extract_strided_slice %100 {offsets = [0, 0], sizes = [8, 32], strides = [1, 1]} : vector<8x128xf32> to vector<8x32xf32>
    %102 = vector.extract_strided_slice %100 {offsets = [0, 32], sizes = [8, 32], strides = [1, 1]} : vector<8x128xf32> to vector<8x32xf32>
    %103 = vector.extract_strided_slice %92 {offsets = [0, 64], sizes = [8, 32], strides = [1, 1]} : vector<8x128xf32> to vector<8x32xf32>
    %104 = vector.extract_strided_slice %94 {offsets = [0, 64], sizes = [8, 32], strides = [1, 1]} : vector<8x128xf32> to vector<8x32xf32>
    %105 = vector.broadcast %7 : vector<1x32xf32> to vector<8x32xf32>
    %106 = arith.addf %104, %105 : vector<8x32xf32>
    %107 = arith.mulf %101, %106 : vector<8x32xf32>
    %108 = arith.addf %103, %107 : vector<8x32xf32>
    %109 = math.tanh %108 : vector<8x32xf32>
    %cst_38 = arith.constant 1.000000e+00 : f32
    %110 = vector.broadcast %cst_38 : f32 to vector<8x32xf32>
    %111 = arith.subf %110, %102 : vector<8x32xf32>
    %112 = arith.mulf %111, %109 : vector<8x32xf32>
    %113 = arith.mulf %102, %88 : vector<8x32xf32>
    %114 = arith.addf %112, %113 : vector<8x32xf32>
    %115 = arith.truncf %114 : vector<8x32xf32> to vector<8x32xbf16>
    %116 = vector.extract_strided_slice %6 {offsets = [32, 0], sizes = [8, 128], strides = [1, 1]} : vector<64x128xbf16> to vector<8x128xbf16>
    %c0_39 = arith.constant 0 : index
    %c0_40 = arith.constant 0 : index
    %117 = vector.load %arg1[%c0_39, %c0_40] : memref<128x128xbf16, #tpu.memory_space<vmem>>, vector<128x128xbf16>
    %cst_41 = arith.constant dense<0.000000e+00> : vector<8x128xf32>
    %118 = tpu.matmul %116, %117, %cst_41 {dimension_numbers = #tpu.dot_dimension_numbers<[1], [0], [0], [1], [0, 0, 1, 1], [], []>} : vector<8x128xbf16>, vector<128x128xbf16>, vector<8x128xf32> -> vector<8x128xf32>
    %c0_42 = arith.constant 0 : index
    %c0_43 = arith.constant 0 : index
    %119 = vector.load %arg2[%c0_42, %c0_43] : memref<32x128xbf16, #tpu.memory_space<vmem>>, vector<32x128xbf16>
    %cst_44 = arith.constant dense<0.000000e+00> : vector<8x128xf32>
    %120 = tpu.matmul %115, %119, %cst_44 {dimension_numbers = #tpu.dot_dimension_numbers<[1], [0], [0], [1], [0, 0, 1, 1], [], []>} : vector<8x32xbf16>, vector<32x128xbf16>, vector<8x128xf32> -> vector<8x128xf32>
    %121 = arith.addf %118, %120 : vector<8x128xf32>
    %122 = arith.negf %121 : vector<8x128xf32>
    %123 = math.exp %122 : vector<8x128xf32>
    %cst_45 = arith.constant 1.000000e+00 : f32
    %124 = vector.broadcast %cst_45 : f32 to vector<8x128xf32>
    %125 = arith.addf %124, %123 : vector<8x128xf32>
    %126 = arith.divf %124, %125 : vector<8x128xf32>
    %127 = vector.extract_strided_slice %126 {offsets = [0, 0], sizes = [8, 32], strides = [1, 1]} : vector<8x128xf32> to vector<8x32xf32>
    %128 = vector.extract_strided_slice %126 {offsets = [0, 32], sizes = [8, 32], strides = [1, 1]} : vector<8x128xf32> to vector<8x32xf32>
    %129 = vector.extract_strided_slice %118 {offsets = [0, 64], sizes = [8, 32], strides = [1, 1]} : vector<8x128xf32> to vector<8x32xf32>
    %130 = vector.extract_strided_slice %120 {offsets = [0, 64], sizes = [8, 32], strides = [1, 1]} : vector<8x128xf32> to vector<8x32xf32>
    %131 = vector.broadcast %7 : vector<1x32xf32> to vector<8x32xf32>
    %132 = arith.addf %130, %131 : vector<8x32xf32>
    %133 = arith.mulf %127, %132 : vector<8x32xf32>
    %134 = arith.addf %129, %133 : vector<8x32xf32>
    %135 = math.tanh %134 : vector<8x32xf32>
    %cst_46 = arith.constant 1.000000e+00 : f32
    %136 = vector.broadcast %cst_46 : f32 to vector<8x32xf32>
    %137 = arith.subf %136, %128 : vector<8x32xf32>
    %138 = arith.mulf %137, %135 : vector<8x32xf32>
    %139 = arith.mulf %128, %114 : vector<8x32xf32>
    %140 = arith.addf %138, %139 : vector<8x32xf32>
    %141 = arith.truncf %140 : vector<8x32xf32> to vector<8x32xbf16>
    %142 = vector.extract_strided_slice %6 {offsets = [40, 0], sizes = [8, 128], strides = [1, 1]} : vector<64x128xbf16> to vector<8x128xbf16>
    %c0_47 = arith.constant 0 : index
    %c0_48 = arith.constant 0 : index
    %143 = vector.load %arg1[%c0_47, %c0_48] : memref<128x128xbf16, #tpu.memory_space<vmem>>, vector<128x128xbf16>
    %cst_49 = arith.constant dense<0.000000e+00> : vector<8x128xf32>
    %144 = tpu.matmul %142, %143, %cst_49 {dimension_numbers = #tpu.dot_dimension_numbers<[1], [0], [0], [1], [0, 0, 1, 1], [], []>} : vector<8x128xbf16>, vector<128x128xbf16>, vector<8x128xf32> -> vector<8x128xf32>
    %c0_50 = arith.constant 0 : index
    %c0_51 = arith.constant 0 : index
    %145 = vector.load %arg2[%c0_50, %c0_51] : memref<32x128xbf16, #tpu.memory_space<vmem>>, vector<32x128xbf16>
    %cst_52 = arith.constant dense<0.000000e+00> : vector<8x128xf32>
    %146 = tpu.matmul %141, %145, %cst_52 {dimension_numbers = #tpu.dot_dimension_numbers<[1], [0], [0], [1], [0, 0, 1, 1], [], []>} : vector<8x32xbf16>, vector<32x128xbf16>, vector<8x128xf32> -> vector<8x128xf32>
    %147 = arith.addf %144, %146 : vector<8x128xf32>
    %148 = arith.negf %147 : vector<8x128xf32>
    %149 = math.exp %148 : vector<8x128xf32>
    %cst_53 = arith.constant 1.000000e+00 : f32
    %150 = vector.broadcast %cst_53 : f32 to vector<8x128xf32>
    %151 = arith.addf %150, %149 : vector<8x128xf32>
    %152 = arith.divf %150, %151 : vector<8x128xf32>
    %153 = vector.extract_strided_slice %152 {offsets = [0, 0], sizes = [8, 32], strides = [1, 1]} : vector<8x128xf32> to vector<8x32xf32>
    %154 = vector.extract_strided_slice %152 {offsets = [0, 32], sizes = [8, 32], strides = [1, 1]} : vector<8x128xf32> to vector<8x32xf32>
    %155 = vector.extract_strided_slice %144 {offsets = [0, 64], sizes = [8, 32], strides = [1, 1]} : vector<8x128xf32> to vector<8x32xf32>
    %156 = vector.extract_strided_slice %146 {offsets = [0, 64], sizes = [8, 32], strides = [1, 1]} : vector<8x128xf32> to vector<8x32xf32>
    %157 = vector.broadcast %7 : vector<1x32xf32> to vector<8x32xf32>
    %158 = arith.addf %156, %157 : vector<8x32xf32>
    %159 = arith.mulf %153, %158 : vector<8x32xf32>
    %160 = arith.addf %155, %159 : vector<8x32xf32>
    %161 = math.tanh %160 : vector<8x32xf32>
    %cst_54 = arith.constant 1.000000e+00 : f32
    %162 = vector.broadcast %cst_54 : f32 to vector<8x32xf32>
    %163 = arith.subf %162, %154 : vector<8x32xf32>
    %164 = arith.mulf %163, %161 : vector<8x32xf32>
    %165 = arith.mulf %154, %140 : vector<8x32xf32>
    %166 = arith.addf %164, %165 : vector<8x32xf32>
    %167 = arith.truncf %166 : vector<8x32xf32> to vector<8x32xbf16>
    %168 = vector.extract_strided_slice %6 {offsets = [48, 0], sizes = [8, 128], strides = [1, 1]} : vector<64x128xbf16> to vector<8x128xbf16>
    %c0_55 = arith.constant 0 : index
    %c0_56 = arith.constant 0 : index
    %169 = vector.load %arg1[%c0_55, %c0_56] : memref<128x128xbf16, #tpu.memory_space<vmem>>, vector<128x128xbf16>
    %cst_57 = arith.constant dense<0.000000e+00> : vector<8x128xf32>
    %170 = tpu.matmul %168, %169, %cst_57 {dimension_numbers = #tpu.dot_dimension_numbers<[1], [0], [0], [1], [0, 0, 1, 1], [], []>} : vector<8x128xbf16>, vector<128x128xbf16>, vector<8x128xf32> -> vector<8x128xf32>
    %c0_58 = arith.constant 0 : index
    %c0_59 = arith.constant 0 : index
    %171 = vector.load %arg2[%c0_58, %c0_59] : memref<32x128xbf16, #tpu.memory_space<vmem>>, vector<32x128xbf16>
    %cst_60 = arith.constant dense<0.000000e+00> : vector<8x128xf32>
    %172 = tpu.matmul %167, %171, %cst_60 {dimension_numbers = #tpu.dot_dimension_numbers<[1], [0], [0], [1], [0, 0, 1, 1], [], []>} : vector<8x32xbf16>, vector<32x128xbf16>, vector<8x128xf32> -> vector<8x128xf32>
    %173 = arith.addf %170, %172 : vector<8x128xf32>
    %174 = arith.negf %173 : vector<8x128xf32>
    %175 = math.exp %174 : vector<8x128xf32>
    %cst_61 = arith.constant 1.000000e+00 : f32
    %176 = vector.broadcast %cst_61 : f32 to vector<8x128xf32>
    %177 = arith.addf %176, %175 : vector<8x128xf32>
    %178 = arith.divf %176, %177 : vector<8x128xf32>
    %179 = vector.extract_strided_slice %178 {offsets = [0, 0], sizes = [8, 32], strides = [1, 1]} : vector<8x128xf32> to vector<8x32xf32>
    %180 = vector.extract_strided_slice %178 {offsets = [0, 32], sizes = [8, 32], strides = [1, 1]} : vector<8x128xf32> to vector<8x32xf32>
    %181 = vector.extract_strided_slice %170 {offsets = [0, 64], sizes = [8, 32], strides = [1, 1]} : vector<8x128xf32> to vector<8x32xf32>
    %182 = vector.extract_strided_slice %172 {offsets = [0, 64], sizes = [8, 32], strides = [1, 1]} : vector<8x128xf32> to vector<8x32xf32>
    %183 = vector.broadcast %7 : vector<1x32xf32> to vector<8x32xf32>
    %184 = arith.addf %182, %183 : vector<8x32xf32>
    %185 = arith.mulf %179, %184 : vector<8x32xf32>
    %186 = arith.addf %181, %185 : vector<8x32xf32>
    %187 = math.tanh %186 : vector<8x32xf32>
    %cst_62 = arith.constant 1.000000e+00 : f32
    %188 = vector.broadcast %cst_62 : f32 to vector<8x32xf32>
    %189 = arith.subf %188, %180 : vector<8x32xf32>
    %190 = arith.mulf %189, %187 : vector<8x32xf32>
    %191 = arith.mulf %180, %166 : vector<8x32xf32>
    %192 = arith.addf %190, %191 : vector<8x32xf32>
    %193 = arith.truncf %192 : vector<8x32xf32> to vector<8x32xbf16>
    %194 = vector.extract_strided_slice %6 {offsets = [56, 0], sizes = [8, 128], strides = [1, 1]} : vector<64x128xbf16> to vector<8x128xbf16>
    %c0_63 = arith.constant 0 : index
    %c0_64 = arith.constant 0 : index
    %195 = vector.load %arg1[%c0_63, %c0_64] : memref<128x128xbf16, #tpu.memory_space<vmem>>, vector<128x128xbf16>
    %cst_65 = arith.constant dense<0.000000e+00> : vector<8x128xf32>
    %196 = tpu.matmul %194, %195, %cst_65 {dimension_numbers = #tpu.dot_dimension_numbers<[1], [0], [0], [1], [0, 0, 1, 1], [], []>} : vector<8x128xbf16>, vector<128x128xbf16>, vector<8x128xf32> -> vector<8x128xf32>
    %c0_66 = arith.constant 0 : index
    %c0_67 = arith.constant 0 : index
    %197 = vector.load %arg2[%c0_66, %c0_67] : memref<32x128xbf16, #tpu.memory_space<vmem>>, vector<32x128xbf16>
    %cst_68 = arith.constant dense<0.000000e+00> : vector<8x128xf32>
    %198 = tpu.matmul %193, %197, %cst_68 {dimension_numbers = #tpu.dot_dimension_numbers<[1], [0], [0], [1], [0, 0, 1, 1], [], []>} : vector<8x32xbf16>, vector<32x128xbf16>, vector<8x128xf32> -> vector<8x128xf32>
    %199 = arith.addf %196, %198 : vector<8x128xf32>
    %200 = arith.negf %199 : vector<8x128xf32>
    %201 = math.exp %200 : vector<8x128xf32>
    %cst_69 = arith.constant 1.000000e+00 : f32
    %202 = vector.broadcast %cst_69 : f32 to vector<8x128xf32>
    %203 = arith.addf %202, %201 : vector<8x128xf32>
    %204 = arith.divf %202, %203 : vector<8x128xf32>
    %205 = vector.extract_strided_slice %204 {offsets = [0, 0], sizes = [8, 32], strides = [1, 1]} : vector<8x128xf32> to vector<8x32xf32>
    %206 = vector.extract_strided_slice %204 {offsets = [0, 32], sizes = [8, 32], strides = [1, 1]} : vector<8x128xf32> to vector<8x32xf32>
    %207 = vector.extract_strided_slice %196 {offsets = [0, 64], sizes = [8, 32], strides = [1, 1]} : vector<8x128xf32> to vector<8x32xf32>
    %208 = vector.extract_strided_slice %198 {offsets = [0, 64], sizes = [8, 32], strides = [1, 1]} : vector<8x128xf32> to vector<8x32xf32>
    %209 = vector.broadcast %7 : vector<1x32xf32> to vector<8x32xf32>
    %210 = arith.addf %208, %209 : vector<8x32xf32>
    %211 = arith.mulf %205, %210 : vector<8x32xf32>
    %212 = arith.addf %207, %211 : vector<8x32xf32>
    %213 = math.tanh %212 : vector<8x32xf32>
    %cst_70 = arith.constant 1.000000e+00 : f32
    %214 = vector.broadcast %cst_70 : f32 to vector<8x32xf32>
    %215 = arith.subf %214, %206 : vector<8x32xf32>
    %216 = arith.mulf %215, %213 : vector<8x32xf32>
    %217 = arith.mulf %206, %192 : vector<8x32xf32>
    %218 = arith.addf %216, %217 : vector<8x32xf32>
    %219 = arith.truncf %218 : vector<8x32xf32> to vector<8x32xbf16>
    %cst_71 = arith.constant 0.000000e+00 : f32
    %220 = vector.broadcast %cst_71 : f32 to vector<8x32xf32>
    %221 = arith.truncf %220 : vector<8x32xf32> to vector<8x32xbf16>
    %cst_72 = arith.constant 0.000000e+00 : f32
    %222 = vector.broadcast %cst_72 : f32 to vector<8x128xf32>
    %c0_73 = arith.constant 0 : index
    %c0_74 = arith.constant 0 : index
    %223 = vector.load %arg4[%c0_73, %c0_74] : memref<32x128xbf16, #tpu.memory_space<vmem>>, vector<32x128xbf16>
    %cst_75 = arith.constant dense<0.000000e+00> : vector<8x128xf32>
    %224 = tpu.matmul %37, %223, %cst_75 {dimension_numbers = #tpu.dot_dimension_numbers<[1], [0], [0], [1], [0, 0, 1, 1], [], []>} : vector<8x32xbf16>, vector<32x128xbf16>, vector<8x128xf32> -> vector<8x128xf32>
    %225 = vector.broadcast %9 : vector<1x128xf32> to vector<8x128xf32>
    %226 = arith.addf %224, %225 : vector<8x128xf32>
    %c0_76 = arith.constant 0 : index
    %c0_77 = arith.constant 0 : index
    %227 = vector.load %arg6[%c0_76, %c0_77] : memref<32x128xbf16, #tpu.memory_space<vmem>>, vector<32x128xbf16>
    %cst_78 = arith.constant dense<0.000000e+00> : vector<8x128xf32>
    %228 = tpu.matmul %221, %227, %cst_78 {dimension_numbers = #tpu.dot_dimension_numbers<[1], [0], [0], [1], [0, 0, 1, 1], [], []>} : vector<8x32xbf16>, vector<32x128xbf16>, vector<8x128xf32> -> vector<8x128xf32>
    %229 = arith.addf %226, %228 : vector<8x128xf32>
    %230 = arith.negf %229 : vector<8x128xf32>
    %231 = math.exp %230 : vector<8x128xf32>
    %cst_79 = arith.constant 1.000000e+00 : f32
    %232 = vector.broadcast %cst_79 : f32 to vector<8x128xf32>
    %233 = arith.addf %232, %231 : vector<8x128xf32>
    %234 = arith.divf %232, %233 : vector<8x128xf32>
    %235 = vector.extract_strided_slice %234 {offsets = [0, 0], sizes = [8, 32], strides = [1, 1]} : vector<8x128xf32> to vector<8x32xf32>
    %236 = vector.extract_strided_slice %234 {offsets = [0, 32], sizes = [8, 32], strides = [1, 1]} : vector<8x128xf32> to vector<8x32xf32>
    %237 = vector.extract_strided_slice %226 {offsets = [0, 64], sizes = [8, 32], strides = [1, 1]} : vector<8x128xf32> to vector<8x32xf32>
    %238 = vector.extract_strided_slice %228 {offsets = [0, 64], sizes = [8, 32], strides = [1, 1]} : vector<8x128xf32> to vector<8x32xf32>
    %239 = vector.broadcast %8 : vector<1x32xf32> to vector<8x32xf32>
    %240 = arith.addf %238, %239 : vector<8x32xf32>
    %241 = arith.mulf %235, %240 : vector<8x32xf32>
    %242 = arith.addf %237, %241 : vector<8x32xf32>
    %243 = math.tanh %242 : vector<8x32xf32>
    %cst_80 = arith.constant 1.000000e+00 : f32
    %244 = vector.broadcast %cst_80 : f32 to vector<8x32xf32>
    %245 = arith.subf %244, %236 : vector<8x32xf32>
    %246 = arith.mulf %245, %243 : vector<8x32xf32>
    %247 = arith.mulf %236, %220 : vector<8x32xf32>
    %248 = arith.addf %246, %247 : vector<8x32xf32>
    %249 = arith.truncf %248 : vector<8x32xf32> to vector<8x32xbf16>
    %c0_81 = arith.constant 0 : index
    %c0_82 = arith.constant 0 : index
    %250 = vector.load %arg8[%c0_81, %c0_82] : memref<256x128xbf16, #tpu.memory_space<vmem>>, vector<32x128xbf16>
    %cst_83 = arith.constant dense<0.000000e+00> : vector<8x128xf32>
    %251 = tpu.matmul %249, %250, %cst_83 {dimension_numbers = #tpu.dot_dimension_numbers<[1], [0], [0], [1], [0, 0, 1, 1], [], []>} : vector<8x32xbf16>, vector<32x128xbf16>, vector<8x128xf32> -> vector<8x128xf32>
    %252 = arith.addf %222, %251 : vector<8x128xf32>
    %c0_84 = arith.constant 0 : index
    %c0_85 = arith.constant 0 : index
    %253 = vector.load %arg4[%c0_84, %c0_85] : memref<32x128xbf16, #tpu.memory_space<vmem>>, vector<32x128xbf16>
    %cst_86 = arith.constant dense<0.000000e+00> : vector<8x128xf32>
    %254 = tpu.matmul %63, %253, %cst_86 {dimension_numbers = #tpu.dot_dimension_numbers<[1], [0], [0], [1], [0, 0, 1, 1], [], []>} : vector<8x32xbf16>, vector<32x128xbf16>, vector<8x128xf32> -> vector<8x128xf32>
    %255 = vector.broadcast %9 : vector<1x128xf32> to vector<8x128xf32>
    %256 = arith.addf %254, %255 : vector<8x128xf32>
    %c0_87 = arith.constant 0 : index
    %c0_88 = arith.constant 0 : index
    %257 = vector.load %arg6[%c0_87, %c0_88] : memref<32x128xbf16, #tpu.memory_space<vmem>>, vector<32x128xbf16>
    %cst_89 = arith.constant dense<0.000000e+00> : vector<8x128xf32>
    %258 = tpu.matmul %249, %257, %cst_89 {dimension_numbers = #tpu.dot_dimension_numbers<[1], [0], [0], [1], [0, 0, 1, 1], [], []>} : vector<8x32xbf16>, vector<32x128xbf16>, vector<8x128xf32> -> vector<8x128xf32>
    %259 = arith.addf %256, %258 : vector<8x128xf32>
    %260 = arith.negf %259 : vector<8x128xf32>
    %261 = math.exp %260 : vector<8x128xf32>
    %cst_90 = arith.constant 1.000000e+00 : f32
    %262 = vector.broadcast %cst_90 : f32 to vector<8x128xf32>
    %263 = arith.addf %262, %261 : vector<8x128xf32>
    %264 = arith.divf %262, %263 : vector<8x128xf32>
    %265 = vector.extract_strided_slice %264 {offsets = [0, 0], sizes = [8, 32], strides = [1, 1]} : vector<8x128xf32> to vector<8x32xf32>
    %266 = vector.extract_strided_slice %264 {offsets = [0, 32], sizes = [8, 32], strides = [1, 1]} : vector<8x128xf32> to vector<8x32xf32>
    %267 = vector.extract_strided_slice %256 {offsets = [0, 64], sizes = [8, 32], strides = [1, 1]} : vector<8x128xf32> to vector<8x32xf32>
    %268 = vector.extract_strided_slice %258 {offsets = [0, 64], sizes = [8, 32], strides = [1, 1]} : vector<8x128xf32> to vector<8x32xf32>
    %269 = vector.broadcast %8 : vector<1x32xf32> to vector<8x32xf32>
    %270 = arith.addf %268, %269 : vector<8x32xf32>
    %271 = arith.mulf %265, %270 : vector<8x32xf32>
    %272 = arith.addf %267, %271 : vector<8x32xf32>
    %273 = math.tanh %272 : vector<8x32xf32>
    %cst_91 = arith.constant 1.000000e+00 : f32
    %274 = vector.broadcast %cst_91 : f32 to vector<8x32xf32>
    %275 = arith.subf %274, %266 : vector<8x32xf32>
    %276 = arith.mulf %275, %273 : vector<8x32xf32>
    %277 = arith.mulf %266, %248 : vector<8x32xf32>
    %278 = arith.addf %276, %277 : vector<8x32xf32>
    %279 = arith.truncf %278 : vector<8x32xf32> to vector<8x32xbf16>
    %c32 = arith.constant 32 : index
    %c0_92 = arith.constant 0 : index
    %280 = vector.load %arg8[%c32, %c0_92] : memref<256x128xbf16, #tpu.memory_space<vmem>>, vector<32x128xbf16>
    %cst_93 = arith.constant dense<0.000000e+00> : vector<8x128xf32>
    %281 = tpu.matmul %279, %280, %cst_93 {dimension_numbers = #tpu.dot_dimension_numbers<[1], [0], [0], [1], [0, 0, 1, 1], [], []>} : vector<8x32xbf16>, vector<32x128xbf16>, vector<8x128xf32> -> vector<8x128xf32>
    %282 = arith.addf %252, %281 : vector<8x128xf32>
    %c0_94 = arith.constant 0 : index
    %c0_95 = arith.constant 0 : index
    %283 = vector.load %arg4[%c0_94, %c0_95] : memref<32x128xbf16, #tpu.memory_space<vmem>>, vector<32x128xbf16>
    %cst_96 = arith.constant dense<0.000000e+00> : vector<8x128xf32>
    %284 = tpu.matmul %89, %283, %cst_96 {dimension_numbers = #tpu.dot_dimension_numbers<[1], [0], [0], [1], [0, 0, 1, 1], [], []>} : vector<8x32xbf16>, vector<32x128xbf16>, vector<8x128xf32> -> vector<8x128xf32>
    %285 = vector.broadcast %9 : vector<1x128xf32> to vector<8x128xf32>
    %286 = arith.addf %284, %285 : vector<8x128xf32>
    %c0_97 = arith.constant 0 : index
    %c0_98 = arith.constant 0 : index
    %287 = vector.load %arg6[%c0_97, %c0_98] : memref<32x128xbf16, #tpu.memory_space<vmem>>, vector<32x128xbf16>
    %cst_99 = arith.constant dense<0.000000e+00> : vector<8x128xf32>
    %288 = tpu.matmul %279, %287, %cst_99 {dimension_numbers = #tpu.dot_dimension_numbers<[1], [0], [0], [1], [0, 0, 1, 1], [], []>} : vector<8x32xbf16>, vector<32x128xbf16>, vector<8x128xf32> -> vector<8x128xf32>
    %289 = arith.addf %286, %288 : vector<8x128xf32>
    %290 = arith.negf %289 : vector<8x128xf32>
    %291 = math.exp %290 : vector<8x128xf32>
    %cst_100 = arith.constant 1.000000e+00 : f32
    %292 = vector.broadcast %cst_100 : f32 to vector<8x128xf32>
    %293 = arith.addf %292, %291 : vector<8x128xf32>
    %294 = arith.divf %292, %293 : vector<8x128xf32>
    %295 = vector.extract_strided_slice %294 {offsets = [0, 0], sizes = [8, 32], strides = [1, 1]} : vector<8x128xf32> to vector<8x32xf32>
    %296 = vector.extract_strided_slice %294 {offsets = [0, 32], sizes = [8, 32], strides = [1, 1]} : vector<8x128xf32> to vector<8x32xf32>
    %297 = vector.extract_strided_slice %286 {offsets = [0, 64], sizes = [8, 32], strides = [1, 1]} : vector<8x128xf32> to vector<8x32xf32>
    %298 = vector.extract_strided_slice %288 {offsets = [0, 64], sizes = [8, 32], strides = [1, 1]} : vector<8x128xf32> to vector<8x32xf32>
    %299 = vector.broadcast %8 : vector<1x32xf32> to vector<8x32xf32>
    %300 = arith.addf %298, %299 : vector<8x32xf32>
    %301 = arith.mulf %295, %300 : vector<8x32xf32>
    %302 = arith.addf %297, %301 : vector<8x32xf32>
    %303 = math.tanh %302 : vector<8x32xf32>
    %cst_101 = arith.constant 1.000000e+00 : f32
    %304 = vector.broadcast %cst_101 : f32 to vector<8x32xf32>
    %305 = arith.subf %304, %296 : vector<8x32xf32>
    %306 = arith.mulf %305, %303 : vector<8x32xf32>
    %307 = arith.mulf %296, %278 : vector<8x32xf32>
    %308 = arith.addf %306, %307 : vector<8x32xf32>
    %309 = arith.truncf %308 : vector<8x32xf32> to vector<8x32xbf16>
    %c64 = arith.constant 64 : index
    %c0_102 = arith.constant 0 : index
    %310 = vector.load %arg8[%c64, %c0_102] : memref<256x128xbf16, #tpu.memory_space<vmem>>, vector<32x128xbf16>
    %cst_103 = arith.constant dense<0.000000e+00> : vector<8x128xf32>
    %311 = tpu.matmul %309, %310, %cst_103 {dimension_numbers = #tpu.dot_dimension_numbers<[1], [0], [0], [1], [0, 0, 1, 1], [], []>} : vector<8x32xbf16>, vector<32x128xbf16>, vector<8x128xf32> -> vector<8x128xf32>
    %312 = arith.addf %282, %311 : vector<8x128xf32>
    %c0_104 = arith.constant 0 : index
    %c0_105 = arith.constant 0 : index
    %313 = vector.load %arg4[%c0_104, %c0_105] : memref<32x128xbf16, #tpu.memory_space<vmem>>, vector<32x128xbf16>
    %cst_106 = arith.constant dense<0.000000e+00> : vector<8x128xf32>
    %314 = tpu.matmul %115, %313, %cst_106 {dimension_numbers = #tpu.dot_dimension_numbers<[1], [0], [0], [1], [0, 0, 1, 1], [], []>} : vector<8x32xbf16>, vector<32x128xbf16>, vector<8x128xf32> -> vector<8x128xf32>
    %315 = vector.broadcast %9 : vector<1x128xf32> to vector<8x128xf32>
    %316 = arith.addf %314, %315 : vector<8x128xf32>
    %c0_107 = arith.constant 0 : index
    %c0_108 = arith.constant 0 : index
    %317 = vector.load %arg6[%c0_107, %c0_108] : memref<32x128xbf16, #tpu.memory_space<vmem>>, vector<32x128xbf16>
    %cst_109 = arith.constant dense<0.000000e+00> : vector<8x128xf32>
    %318 = tpu.matmul %309, %317, %cst_109 {dimension_numbers = #tpu.dot_dimension_numbers<[1], [0], [0], [1], [0, 0, 1, 1], [], []>} : vector<8x32xbf16>, vector<32x128xbf16>, vector<8x128xf32> -> vector<8x128xf32>
    %319 = arith.addf %316, %318 : vector<8x128xf32>
    %320 = arith.negf %319 : vector<8x128xf32>
    %321 = math.exp %320 : vector<8x128xf32>
    %cst_110 = arith.constant 1.000000e+00 : f32
    %322 = vector.broadcast %cst_110 : f32 to vector<8x128xf32>
    %323 = arith.addf %322, %321 : vector<8x128xf32>
    %324 = arith.divf %322, %323 : vector<8x128xf32>
    %325 = vector.extract_strided_slice %324 {offsets = [0, 0], sizes = [8, 32], strides = [1, 1]} : vector<8x128xf32> to vector<8x32xf32>
    %326 = vector.extract_strided_slice %324 {offsets = [0, 32], sizes = [8, 32], strides = [1, 1]} : vector<8x128xf32> to vector<8x32xf32>
    %327 = vector.extract_strided_slice %316 {offsets = [0, 64], sizes = [8, 32], strides = [1, 1]} : vector<8x128xf32> to vector<8x32xf32>
    %328 = vector.extract_strided_slice %318 {offsets = [0, 64], sizes = [8, 32], strides = [1, 1]} : vector<8x128xf32> to vector<8x32xf32>
    %329 = vector.broadcast %8 : vector<1x32xf32> to vector<8x32xf32>
    %330 = arith.addf %328, %329 : vector<8x32xf32>
    %331 = arith.mulf %325, %330 : vector<8x32xf32>
    %332 = arith.addf %327, %331 : vector<8x32xf32>
    %333 = math.tanh %332 : vector<8x32xf32>
    %cst_111 = arith.constant 1.000000e+00 : f32
    %334 = vector.broadcast %cst_111 : f32 to vector<8x32xf32>
    %335 = arith.subf %334, %326 : vector<8x32xf32>
    %336 = arith.mulf %335, %333 : vector<8x32xf32>
    %337 = arith.mulf %326, %308 : vector<8x32xf32>
    %338 = arith.addf %336, %337 : vector<8x32xf32>
    %339 = arith.truncf %338 : vector<8x32xf32> to vector<8x32xbf16>
    %c96 = arith.constant 96 : index
    %c0_112 = arith.constant 0 : index
    %340 = vector.load %arg8[%c96, %c0_112] : memref<256x128xbf16, #tpu.memory_space<vmem>>, vector<32x128xbf16>
    %cst_113 = arith.constant dense<0.000000e+00> : vector<8x128xf32>
    %341 = tpu.matmul %339, %340, %cst_113 {dimension_numbers = #tpu.dot_dimension_numbers<[1], [0], [0], [1], [0, 0, 1, 1], [], []>} : vector<8x32xbf16>, vector<32x128xbf16>, vector<8x128xf32> -> vector<8x128xf32>
    %342 = arith.addf %312, %341 : vector<8x128xf32>
    %c0_114 = arith.constant 0 : index
    %c0_115 = arith.constant 0 : index
    %343 = vector.load %arg4[%c0_114, %c0_115] : memref<32x128xbf16, #tpu.memory_space<vmem>>, vector<32x128xbf16>
    %cst_116 = arith.constant dense<0.000000e+00> : vector<8x128xf32>
    %344 = tpu.matmul %141, %343, %cst_116 {dimension_numbers = #tpu.dot_dimension_numbers<[1], [0], [0], [1], [0, 0, 1, 1], [], []>} : vector<8x32xbf16>, vector<32x128xbf16>, vector<8x128xf32> -> vector<8x128xf32>
    %345 = vector.broadcast %9 : vector<1x128xf32> to vector<8x128xf32>
    %346 = arith.addf %344, %345 : vector<8x128xf32>
    %c0_117 = arith.constant 0 : index
    %c0_118 = arith.constant 0 : index
    %347 = vector.load %arg6[%c0_117, %c0_118] : memref<32x128xbf16, #tpu.memory_space<vmem>>, vector<32x128xbf16>
    %cst_119 = arith.constant dense<0.000000e+00> : vector<8x128xf32>
    %348 = tpu.matmul %339, %347, %cst_119 {dimension_numbers = #tpu.dot_dimension_numbers<[1], [0], [0], [1], [0, 0, 1, 1], [], []>} : vector<8x32xbf16>, vector<32x128xbf16>, vector<8x128xf32> -> vector<8x128xf32>
    %349 = arith.addf %346, %348 : vector<8x128xf32>
    %350 = arith.negf %349 : vector<8x128xf32>
    %351 = math.exp %350 : vector<8x128xf32>
    %cst_120 = arith.constant 1.000000e+00 : f32
    %352 = vector.broadcast %cst_120 : f32 to vector<8x128xf32>
    %353 = arith.addf %352, %351 : vector<8x128xf32>
    %354 = arith.divf %352, %353 : vector<8x128xf32>
    %355 = vector.extract_strided_slice %354 {offsets = [0, 0], sizes = [8, 32], strides = [1, 1]} : vector<8x128xf32> to vector<8x32xf32>
    %356 = vector.extract_strided_slice %354 {offsets = [0, 32], sizes = [8, 32], strides = [1, 1]} : vector<8x128xf32> to vector<8x32xf32>
    %357 = vector.extract_strided_slice %346 {offsets = [0, 64], sizes = [8, 32], strides = [1, 1]} : vector<8x128xf32> to vector<8x32xf32>
    %358 = vector.extract_strided_slice %348 {offsets = [0, 64], sizes = [8, 32], strides = [1, 1]} : vector<8x128xf32> to vector<8x32xf32>
    %359 = vector.broadcast %8 : vector<1x32xf32> to vector<8x32xf32>
    %360 = arith.addf %358, %359 : vector<8x32xf32>
    %361 = arith.mulf %355, %360 : vector<8x32xf32>
    %362 = arith.addf %357, %361 : vector<8x32xf32>
    %363 = math.tanh %362 : vector<8x32xf32>
    %cst_121 = arith.constant 1.000000e+00 : f32
    %364 = vector.broadcast %cst_121 : f32 to vector<8x32xf32>
    %365 = arith.subf %364, %356 : vector<8x32xf32>
    %366 = arith.mulf %365, %363 : vector<8x32xf32>
    %367 = arith.mulf %356, %338 : vector<8x32xf32>
    %368 = arith.addf %366, %367 : vector<8x32xf32>
    %369 = arith.truncf %368 : vector<8x32xf32> to vector<8x32xbf16>
    %c128 = arith.constant 128 : index
    %c0_122 = arith.constant 0 : index
    %370 = vector.load %arg8[%c128, %c0_122] : memref<256x128xbf16, #tpu.memory_space<vmem>>, vector<32x128xbf16>
    %cst_123 = arith.constant dense<0.000000e+00> : vector<8x128xf32>
    %371 = tpu.matmul %369, %370, %cst_123 {dimension_numbers = #tpu.dot_dimension_numbers<[1], [0], [0], [1], [0, 0, 1, 1], [], []>} : vector<8x32xbf16>, vector<32x128xbf16>, vector<8x128xf32> -> vector<8x128xf32>
    %372 = arith.addf %342, %371 : vector<8x128xf32>
    %c0_124 = arith.constant 0 : index
    %c0_125 = arith.constant 0 : index
    %373 = vector.load %arg4[%c0_124, %c0_125] : memref<32x128xbf16, #tpu.memory_space<vmem>>, vector<32x128xbf16>
    %cst_126 = arith.constant dense<0.000000e+00> : vector<8x128xf32>
    %374 = tpu.matmul %167, %373, %cst_126 {dimension_numbers = #tpu.dot_dimension_numbers<[1], [0], [0], [1], [0, 0, 1, 1], [], []>} : vector<8x32xbf16>, vector<32x128xbf16>, vector<8x128xf32> -> vector<8x128xf32>
    %375 = vector.broadcast %9 : vector<1x128xf32> to vector<8x128xf32>
    %376 = arith.addf %374, %375 : vector<8x128xf32>
    %c0_127 = arith.constant 0 : index
    %c0_128 = arith.constant 0 : index
    %377 = vector.load %arg6[%c0_127, %c0_128] : memref<32x128xbf16, #tpu.memory_space<vmem>>, vector<32x128xbf16>
    %cst_129 = arith.constant dense<0.000000e+00> : vector<8x128xf32>
    %378 = tpu.matmul %369, %377, %cst_129 {dimension_numbers = #tpu.dot_dimension_numbers<[1], [0], [0], [1], [0, 0, 1, 1], [], []>} : vector<8x32xbf16>, vector<32x128xbf16>, vector<8x128xf32> -> vector<8x128xf32>
    %379 = arith.addf %376, %378 : vector<8x128xf32>
    %380 = arith.negf %379 : vector<8x128xf32>
    %381 = math.exp %380 : vector<8x128xf32>
    %cst_130 = arith.constant 1.000000e+00 : f32
    %382 = vector.broadcast %cst_130 : f32 to vector<8x128xf32>
    %383 = arith.addf %382, %381 : vector<8x128xf32>
    %384 = arith.divf %382, %383 : vector<8x128xf32>
    %385 = vector.extract_strided_slice %384 {offsets = [0, 0], sizes = [8, 32], strides = [1, 1]} : vector<8x128xf32> to vector<8x32xf32>
    %386 = vector.extract_strided_slice %384 {offsets = [0, 32], sizes = [8, 32], strides = [1, 1]} : vector<8x128xf32> to vector<8x32xf32>
    %387 = vector.extract_strided_slice %376 {offsets = [0, 64], sizes = [8, 32], strides = [1, 1]} : vector<8x128xf32> to vector<8x32xf32>
    %388 = vector.extract_strided_slice %378 {offsets = [0, 64], sizes = [8, 32], strides = [1, 1]} : vector<8x128xf32> to vector<8x32xf32>
    %389 = vector.broadcast %8 : vector<1x32xf32> to vector<8x32xf32>
    %390 = arith.addf %388, %389 : vector<8x32xf32>
    %391 = arith.mulf %385, %390 : vector<8x32xf32>
    %392 = arith.addf %387, %391 : vector<8x32xf32>
    %393 = math.tanh %392 : vector<8x32xf32>
    %cst_131 = arith.constant 1.000000e+00 : f32
    %394 = vector.broadcast %cst_131 : f32 to vector<8x32xf32>
    %395 = arith.subf %394, %386 : vector<8x32xf32>
    %396 = arith.mulf %395, %393 : vector<8x32xf32>
    %397 = arith.mulf %386, %368 : vector<8x32xf32>
    %398 = arith.addf %396, %397 : vector<8x32xf32>
    %399 = arith.truncf %398 : vector<8x32xf32> to vector<8x32xbf16>
    %c160 = arith.constant 160 : index
    %c0_132 = arith.constant 0 : index
    %400 = vector.load %arg8[%c160, %c0_132] : memref<256x128xbf16, #tpu.memory_space<vmem>>, vector<32x128xbf16>
    %cst_133 = arith.constant dense<0.000000e+00> : vector<8x128xf32>
    %401 = tpu.matmul %399, %400, %cst_133 {dimension_numbers = #tpu.dot_dimension_numbers<[1], [0], [0], [1], [0, 0, 1, 1], [], []>} : vector<8x32xbf16>, vector<32x128xbf16>, vector<8x128xf32> -> vector<8x128xf32>
    %402 = arith.addf %372, %401 : vector<8x128xf32>
    %c0_134 = arith.constant 0 : index
    %c0_135 = arith.constant 0 : index
    %403 = vector.load %arg4[%c0_134, %c0_135] : memref<32x128xbf16, #tpu.memory_space<vmem>>, vector<32x128xbf16>
    %cst_136 = arith.constant dense<0.000000e+00> : vector<8x128xf32>
    %404 = tpu.matmul %193, %403, %cst_136 {dimension_numbers = #tpu.dot_dimension_numbers<[1], [0], [0], [1], [0, 0, 1, 1], [], []>} : vector<8x32xbf16>, vector<32x128xbf16>, vector<8x128xf32> -> vector<8x128xf32>
    %405 = vector.broadcast %9 : vector<1x128xf32> to vector<8x128xf32>
    %406 = arith.addf %404, %405 : vector<8x128xf32>
    %c0_137 = arith.constant 0 : index
    %c0_138 = arith.constant 0 : index
    %407 = vector.load %arg6[%c0_137, %c0_138] : memref<32x128xbf16, #tpu.memory_space<vmem>>, vector<32x128xbf16>
    %cst_139 = arith.constant dense<0.000000e+00> : vector<8x128xf32>
    %408 = tpu.matmul %399, %407, %cst_139 {dimension_numbers = #tpu.dot_dimension_numbers<[1], [0], [0], [1], [0, 0, 1, 1], [], []>} : vector<8x32xbf16>, vector<32x128xbf16>, vector<8x128xf32> -> vector<8x128xf32>
    %409 = arith.addf %406, %408 : vector<8x128xf32>
    %410 = arith.negf %409 : vector<8x128xf32>
    %411 = math.exp %410 : vector<8x128xf32>
    %cst_140 = arith.constant 1.000000e+00 : f32
    %412 = vector.broadcast %cst_140 : f32 to vector<8x128xf32>
    %413 = arith.addf %412, %411 : vector<8x128xf32>
    %414 = arith.divf %412, %413 : vector<8x128xf32>
    %415 = vector.extract_strided_slice %414 {offsets = [0, 0], sizes = [8, 32], strides = [1, 1]} : vector<8x128xf32> to vector<8x32xf32>
    %416 = vector.extract_strided_slice %414 {offsets = [0, 32], sizes = [8, 32], strides = [1, 1]} : vector<8x128xf32> to vector<8x32xf32>
    %417 = vector.extract_strided_slice %406 {offsets = [0, 64], sizes = [8, 32], strides = [1, 1]} : vector<8x128xf32> to vector<8x32xf32>
    %418 = vector.extract_strided_slice %408 {offsets = [0, 64], sizes = [8, 32], strides = [1, 1]} : vector<8x128xf32> to vector<8x32xf32>
    %419 = vector.broadcast %8 : vector<1x32xf32> to vector<8x32xf32>
    %420 = arith.addf %418, %419 : vector<8x32xf32>
    %421 = arith.mulf %415, %420 : vector<8x32xf32>
    %422 = arith.addf %417, %421 : vector<8x32xf32>
    %423 = math.tanh %422 : vector<8x32xf32>
    %cst_141 = arith.constant 1.000000e+00 : f32
    %424 = vector.broadcast %cst_141 : f32 to vector<8x32xf32>
    %425 = arith.subf %424, %416 : vector<8x32xf32>
    %426 = arith.mulf %425, %423 : vector<8x32xf32>
    %427 = arith.mulf %416, %398 : vector<8x32xf32>
    %428 = arith.addf %426, %427 : vector<8x32xf32>
    %429 = arith.truncf %428 : vector<8x32xf32> to vector<8x32xbf16>
    %c192 = arith.constant 192 : index
    %c0_142 = arith.constant 0 : index
    %430 = vector.load %arg8[%c192, %c0_142] : memref<256x128xbf16, #tpu.memory_space<vmem>>, vector<32x128xbf16>
    %cst_143 = arith.constant dense<0.000000e+00> : vector<8x128xf32>
    %431 = tpu.matmul %429, %430, %cst_143 {dimension_numbers = #tpu.dot_dimension_numbers<[1], [0], [0], [1], [0, 0, 1, 1], [], []>} : vector<8x32xbf16>, vector<32x128xbf16>, vector<8x128xf32> -> vector<8x128xf32>
    %432 = arith.addf %402, %431 : vector<8x128xf32>
    %c0_144 = arith.constant 0 : index
    %c0_145 = arith.constant 0 : index
    %433 = vector.load %arg4[%c0_144, %c0_145] : memref<32x128xbf16, #tpu.memory_space<vmem>>, vector<32x128xbf16>
    %cst_146 = arith.constant dense<0.000000e+00> : vector<8x128xf32>
    %434 = tpu.matmul %219, %433, %cst_146 {dimension_numbers = #tpu.dot_dimension_numbers<[1], [0], [0], [1], [0, 0, 1, 1], [], []>} : vector<8x32xbf16>, vector<32x128xbf16>, vector<8x128xf32> -> vector<8x128xf32>
    %435 = vector.broadcast %9 : vector<1x128xf32> to vector<8x128xf32>
    %436 = arith.addf %434, %435 : vector<8x128xf32>
    %c0_147 = arith.constant 0 : index
    %c0_148 = arith.constant 0 : index
    %437 = vector.load %arg6[%c0_147, %c0_148] : memref<32x128xbf16, #tpu.memory_space<vmem>>, vector<32x128xbf16>
    %cst_149 = arith.constant dense<0.000000e+00> : vector<8x128xf32>
    %438 = tpu.matmul %429, %437, %cst_149 {dimension_numbers = #tpu.dot_dimension_numbers<[1], [0], [0], [1], [0, 0, 1, 1], [], []>} : vector<8x32xbf16>, vector<32x128xbf16>, vector<8x128xf32> -> vector<8x128xf32>
    %439 = arith.addf %436, %438 : vector<8x128xf32>
    %440 = arith.negf %439 : vector<8x128xf32>
    %441 = math.exp %440 : vector<8x128xf32>
    %cst_150 = arith.constant 1.000000e+00 : f32
    %442 = vector.broadcast %cst_150 : f32 to vector<8x128xf32>
    %443 = arith.addf %442, %441 : vector<8x128xf32>
    %444 = arith.divf %442, %443 : vector<8x128xf32>
    %445 = vector.extract_strided_slice %444 {offsets = [0, 0], sizes = [8, 32], strides = [1, 1]} : vector<8x128xf32> to vector<8x32xf32>
    %446 = vector.extract_strided_slice %444 {offsets = [0, 32], sizes = [8, 32], strides = [1, 1]} : vector<8x128xf32> to vector<8x32xf32>
    %447 = vector.extract_strided_slice %436 {offsets = [0, 64], sizes = [8, 32], strides = [1, 1]} : vector<8x128xf32> to vector<8x32xf32>
    %448 = vector.extract_strided_slice %438 {offsets = [0, 64], sizes = [8, 32], strides = [1, 1]} : vector<8x128xf32> to vector<8x32xf32>
    %449 = vector.broadcast %8 : vector<1x32xf32> to vector<8x32xf32>
    %450 = arith.addf %448, %449 : vector<8x32xf32>
    %451 = arith.mulf %445, %450 : vector<8x32xf32>
    %452 = arith.addf %447, %451 : vector<8x32xf32>
    %453 = math.tanh %452 : vector<8x32xf32>
    %cst_151 = arith.constant 1.000000e+00 : f32
    %454 = vector.broadcast %cst_151 : f32 to vector<8x32xf32>
    %455 = arith.subf %454, %446 : vector<8x32xf32>
    %456 = arith.mulf %455, %453 : vector<8x32xf32>
    %457 = arith.mulf %446, %428 : vector<8x32xf32>
    %458 = arith.addf %456, %457 : vector<8x32xf32>
    %459 = arith.truncf %458 : vector<8x32xf32> to vector<8x32xbf16>
    %c224 = arith.constant 224 : index
    %c0_152 = arith.constant 0 : index
    %460 = vector.load %arg8[%c224, %c0_152] : memref<256x128xbf16, #tpu.memory_space<vmem>>, vector<32x128xbf16>
    %cst_153 = arith.constant dense<0.000000e+00> : vector<8x128xf32>
    %461 = tpu.matmul %459, %460, %cst_153 {dimension_numbers = #tpu.dot_dimension_numbers<[1], [0], [0], [1], [0, 0, 1, 1], [], []>} : vector<8x32xbf16>, vector<32x128xbf16>, vector<8x128xf32> -> vector<8x128xf32>
    %462 = arith.addf %432, %461 : vector<8x128xf32>
    %c0_154 = arith.constant 0 : index
    %c0_155 = arith.constant 0 : index
    %463 = vector.load %arg9[%c0_154, %c0_155] : memref<1x128xf32, #tpu.memory_space<vmem>>, vector<1x128xf32>
    %464 = vector.broadcast %463 : vector<1x128xf32> to vector<8x128xf32>
    %465 = arith.addf %462, %464 : vector<8x128xf32>
    %cst_156 = arith.constant dense<0xFF800000> : vector<8xf32>
    %466 = vector.multi_reduction <maximumf>, %465, %cst_156 [1] : vector<8x128xf32> to vector<8xf32>
    %467 = vector.shape_cast %466 : vector<8xf32> to vector<8x1xf32>
    %468 = vector.broadcast %467 : vector<8x1xf32> to vector<8x128xf32>
    %469 = arith.subf %465, %468 : vector<8x128xf32>
    %470 = math.exp %469 : vector<8x128xf32>
    %cst_157 = arith.constant dense<0.000000e+00> : vector<8xf32>
    %471 = vector.multi_reduction <add>, %470, %cst_157 [1] : vector<8x128xf32> to vector<8xf32>
    %472 = vector.shape_cast %471 : vector<8xf32> to vector<8x1xf32>
    %473 = math.log %472 : vector<8x1xf32>
    %474 = vector.broadcast %473 : vector<8x1xf32> to vector<8x128xf32>
    %475 = arith.subf %469, %474 : vector<8x128xf32>
    %c0_158 = arith.constant 0 : index
    %c0_159 = arith.constant 0 : index
    %476 = vector.load %arg10[%c0_158, %c0_159] : memref<8x128xf32, #tpu.memory_space<vmem>>, vector<8x128xf32>
    tpu.vector_store %arg10[%c0_158, %c0_159], %475 {strides = array<i32>} : memref<8x128xf32, #tpu.memory_space<vmem>>, vector<8x128xf32>,
    return
  }
}

</mosaic_0001>

<llo_original>
// kernel: gru_model_forward.1
$region0: #{gru_model_forward.1}
  #allocation0 [shape = 'u32[]', space=smem, size = 0x4, offset = 0x4, fixed_abs, tag = 'smem constant byte address 0x4 - core index']
  #allocation1 [shape = 'u32[144,128]{1,0:T(1,128)}', space=vmem, size = 0x12000, scoped, tag = 'internal scratch']
  %s0 = inlined_call_operand.vmem [shape: s32[64,1], index: 0, kind: input, shape index: {}]
  %s1 = inlined_call_operand.hbm [shape: bf16[128,128], index: 1, kind: input, shape index: {}]
  %s2 = inlined_call_operand.hbm [shape: bf16[32,128], index: 2, kind: input, shape index: {}]
  %s3 = inlined_call_operand.vmem [shape: f32[1,32], index: 3, kind: input, shape index: {}]
  %s4 = inlined_call_operand.hbm [shape: bf16[32,128], index: 4, kind: input, shape index: {}]
  %s5 = inlined_call_operand.vmem [shape: f32[1,128], index: 5, kind: input, shape index: {}]
  %s6 = inlined_call_operand.hbm [shape: bf16[32,128], index: 6, kind: input, shape index: {}]
  %s7 = inlined_call_operand.hbm [shape: f32[1,32], index: 7, kind: input, shape index: {}]
  %s8 = inlined_call_operand.vmem [shape: bf16[256,128], index: 8, kind: input, shape index: {}]
  %s9 = inlined_call_operand.hbm [shape: f32[1,128], index: 9, kind: input, shape index: {}]
  %s10 = inlined_call_operand.vmem [shape: f32[8,128], index: 10, kind: output, shape index: {}]
  %s11 = sld [smem:[#allocation0]]
  $region74: #{gru_model_forward.1} parent=0
    _
  %s13 = ssub.s32 1, %s11
  %s14 = scalar_select 0, %s13, %s11
  $region1: #{gru_model_forward.1} parent=0
    #allocation2 [shape = 'u8[32768]{0}', space=vmem, size = 0x8000, scoped, tag = 'input window, operand 1, single buffered']
    #allocation3 [shape = 's32[1]{0}', space=sflag, size = 0x4, scoped, tag = 'scoped memory for gru_model_forward.1']
    #allocation4 [shape = 'u8[8192]{0}', space=vmem, size = 0x2000, scoped, tag = 'input window, operand 2, single buffered']
    #allocation5 [shape = 's32[1]{0}', space=sflag, size = 0x4, scoped, tag = 'scoped memory for gru_model_forward.1']
    #allocation6 [shape = 'u8[8192]{0}', space=vmem, size = 0x2000, scoped, tag = 'input window, operand 4, single buffered']
    #allocation7 [shape = 'u8[8192]{0}', space=vmem, size = 0x2000, scoped, tag = 'input window, operand 6, single buffered']
    #allocation8 [shape = 's32[1]{0}', space=sflag, size = 0x4, scoped, tag = 'scoped memory for gru_model_forward.1']
    #allocation9 [shape = 'u8[512]{0}', space=vmem, size = 0x400, scoped, tag = 'input window, operand 7, single buffered']
    #allocation10 [shape = 'u8[512]{0}', space=vmem, size = 0x400, scoped, tag = 'input window, operand 9, single buffered']
    #allocation11 [shape = 's32[1]{0}', space=sflag, size = 0x4, scoped, tag = 'scoped memory for gru_model_forward.1']
    %15 = vsyncpa [#allocation3], 0
    %16 = vsyncpa [#allocation5], 0
    %17 = vsyncpa [#allocation8], 0
    %18 = vsyncpa [#allocation11], 0
    // Predicated region
    $region2: #{gru_model_forward.1} parent=1 // pred_check
      _
    $region3: #{gru_model_forward.1} parent=1 // pred_check_branch
      %20 = sbr.rel (0) target = $region5
    $region4: #{gru_model_forward.1} parent=1 // pred_region
      _
    $region5: #{gru_model_forward.1} parent=1 // pred_fallthru
      _
    // Predicated region
    $region6: #{gru_model_forward.1} parent=1 // pred_check
      _
    $region7: #{gru_model_forward.1} parent=1 // pred_check_branch
      %22 = sbr.rel (0) target = $region9
    $region8: #{gru_model_forward.1} parent=1 // pred_region
      %s24 = ssub.s32 1024, 1024
      %25 = vsyncadd [#allocation3], %s24
      %s26 = sshll.u32 [#allocation2], 4
      %s27 = int_to_ptr.vmem [resolvable:$true] %s26
      %32 = dma.hbm_to_vmem [thread:$0]  %s1, 1024, %s27, [#allocation3], 64, 64, 4
    $region9: #{gru_model_forward.1} parent=1 // pred_fallthru
      _
    // Predicated region
    $region10: #{gru_model_forward.1} parent=1 // pred_check
      _
    $region11: #{gru_model_forward.1} parent=1 // pred_check_branch
      %34 = sbr.rel (0) target = $region13
    $region12: #{gru_model_forward.1} parent=1 // pred_region
      %s36 = ssub.s32 256, 256
      %37 = vsyncadd [#allocation5], %s36
      %s38 = sshll.u32 [#allocation4], 4
      %s39 = int_to_ptr.vmem [resolvable:$true] %s38
      %44 = dma.hbm_to_vmem [thread:$0]  %s2, 256, %s39, [#allocation5], 64, 64, 4
    $region13: #{gru_model_forward.1} parent=1 // pred_fallthru
      _
    // Predicated region
    $region14: #{gru_model_forward.1} parent=1 // pred_check
      _
    $region15: #{gru_model_forward.1} parent=1 // pred_check_branch
      %46 = sbr.rel (0) target = $region17
    $region16: #{gru_model_forward.1} parent=1 // pred_region
      _
    $region17: #{gru_model_forward.1} parent=1 // pred_fallthru
      _
    // Predicated region
    $region18: #{gru_model_forward.1} parent=1 // pred_check
      _
    $region19: #{gru_model_forward.1} parent=1 // pred_check_branch
      %48 = sbr.rel (0) target = $region21
    $region20: #{gru_model_forward.1} parent=1 // pred_region
      %s50 = ssub.s32 256, 256
      %51 = vsyncadd [#allocation5], %s50
      %s52 = sshll.u32 [#allocation6], 4
      %s53 = int_to_ptr.vmem [resolvable:$true] %s52
      %58 = dma.hbm_to_vmem [thread:$0]  %s4, 256, %s53, [#allocation5], 64, 64, 4
    $region21: #{gru_model_forward.1} parent=1 // pred_fallthru
      _
    // Predicated region
    $region22: #{gru_model_forward.1} parent=1 // pred_check
      _
    $region23: #{gru_model_forward.1} parent=1 // pred_check_branch
      %60 = sbr.rel (0) target = $region25
    $region24: #{gru_model_forward.1} parent=1 // pred_region
      _
    $region25: #{gru_model_forward.1} parent=1 // pred_fallthru
      _
    // Predicated region
    $region26: #{gru_model_forward.1} parent=1 // pred_check
      _
    $region27: #{gru_model_forward.1} parent=1 // pred_check_branch
      %62 = sbr.rel (0) target = $region29
    $region28: #{gru_model_forward.1} parent=1 // pred_region
      %s64 = ssub.s32 256, 256
      %65 = vsyncadd [#allocation8], %s64
      %s66 = sshll.u32 [#allocation7], 4
      %s67 = int_to_ptr.vmem [resolvable:$true] %s66
      %72 = dma.hbm_to_vmem [thread:$0]  %s6, 256, %s67, [#allocation8], 64, 64, 4
    $region29: #{gru_model_forward.1} parent=1 // pred_fallthru
      _
    // Predicated region
    $region30: #{gru_model_forward.1} parent=1 // pred_check
      _
    $region31: #{gru_model_forward.1} parent=1 // pred_check_branch
      %74 = sbr.rel (0) target = $region33
    $region32: #{gru_model_forward.1} parent=1 // pred_region
      %s76 = ssub.s32 16, 16
      %77 = vsyncadd [#allocation8], %s76
      %s79 = sshll.u32 [#allocation9], 4
      %s80 = int_to_ptr.vmem [resolvable:$true] %s79
      %82 = dma.hbm_to_vmem [thread:$0]  %s7, 16, %s80, [#allocation8]
    $region33: #{gru_model_forward.1} parent=1 // pred_fallthru
      _
    // Predicated region
    $region34: #{gru_model_forward.1} parent=1 // pred_check
      _
    $region35: #{gru_model_forward.1} parent=1 // pred_check_branch
      %84 = sbr.rel (0) target = $region37
    $region36: #{gru_model_forward.1} parent=1 // pred_region
      _
    $region37: #{gru_model_forward.1} parent=1 // pred_fallthru
      _
    // Predicated region
    $region38: #{gru_model_forward.1} parent=1 // pred_check
      _
    $region39: #{gru_model_forward.1} parent=1 // pred_check_branch
      %86 = sbr.rel (0) target = $region41
    $region40: #{gru_model_forward.1} parent=1 // pred_region
      %s88 = ssub.s32 16, 16
      %89 = vsyncadd [#allocation11], %s88
      %s91 = sshll.u32 [#allocation10], 4
      %s92 = int_to_ptr.vmem [resolvable:$true] %s91
      %94 = dma.hbm_to_vmem [thread:$0]  %s9, 16, %s92, [#allocation11]
    $region41: #{gru_model_forward.1} parent=1 // pred_fallthru
      _
    // Predicated region
    $region42: #{gru_model_forward.1} parent=1 // pred_check
      _
    $region43: #{gru_model_forward.1} parent=1 // pred_check_branch
      %96 = sbr.rel (0) target = $region45
    $region44: #{gru_model_forward.1} parent=1 // pred_region
      %97 = dma.done [#allocation3], 1024
    $region45: #{gru_model_forward.1} parent=1 // pred_fallthru
      _
    // Predicated region
    $region46: #{gru_model_forward.1} parent=1 // pred_check
      _
    $region47: #{gru_model_forward.1} parent=1 // pred_check_branch
      %99 = sbr.rel (0) target = $region49
    $region48: #{gru_model_forward.1} parent=1 // pred_region
      %100 = dma.done [#allocation5], 256
    $region49: #{gru_model_forward.1} parent=1 // pred_fallthru
      _
    // Predicated region
    $region50: #{gru_model_forward.1} parent=1 // pred_check
      _
    $region51: #{gru_model_forward.1} parent=1 // pred_check_branch
      %102 = sbr.rel (0) target = $region53
    $region52: #{gru_model_forward.1} parent=1 // pred_region
      %103 = dma.done [#allocation5], 256
    $region53: #{gru_model_forward.1} parent=1 // pred_fallthru
      _
    // Predicated region
    $region54: #{gru_model_forward.1} parent=1 // pred_check
      _
    $region55: #{gru_model_forward.1} parent=1 // pred_check_branch
      %105 = sbr.rel (0) target = $region57
    $region56: #{gru_model_forward.1} parent=1 // pred_region
      %106 = dma.done [#allocation8], 256
    $region57: #{gru_model_forward.1} parent=1 // pred_fallthru
      _
    // Predicated region
    $region58: #{gru_model_forward.1} parent=1 // pred_check
      _
    $region59: #{gru_model_forward.1} parent=1 // pred_check_branch
      %108 = sbr.rel (0) target = $region61
    $region60: #{gru_model_forward.1} parent=1 // pred_region
      %109 = dma.done [#allocation8], 16
    $region61: #{gru_model_forward.1} parent=1 // pred_fallthru
      _
    // Predicated region
    $region62: #{gru_model_forward.1} parent=1 // pred_check
      _
    $region63: #{gru_model_forward.1} parent=1 // pred_check_branch
      %111 = sbr.rel (0) target = $region65
    $region64: #{gru_model_forward.1} parent=1 // pred_region
      %112 = dma.done [#allocation11], 16
    $region65: #{gru_model_forward.1} parent=1 // pred_fallthru
      _
    %v114 = vld [vmem:[%s0] sm:$0xff]
    %v115 = vld [vmem:[%s0 + $0x8] sm:$0xff]
    %v116 = vld [vmem:[%s0 + $0x10] sm:$0xff]
    %v117 = vld [vmem:[%s0 + $0x18] sm:$0xff]
    %v118 = vld [vmem:[%s0 + $0x20] sm:$0xff]
    %v119 = vld [vmem:[%s0 + $0x28] sm:$0xff]
    %v120 = vld [vmem:[%s0 + $0x30] sm:$0xff]
    %v121 = vld [vmem:[%s0 + $0x38] sm:$0xff]
    %v122 = vlaneseq
    %v123 = vand.u32 %v122, 127
    %124 = vset.pattern.permute.xlu0 0
    %125 = vperm.xlu0 %124, %v114
    %v126 = vpop.permute.xlu0 %125
    %127 = vset.pattern.permute.xlu0 0
    %128 = vperm.xlu0 %127, %v115
    %v129 = vpop.permute.xlu0 %128
    %130 = vset.pattern.permute.xlu0 0
    %131 = vperm.xlu0 %130, %v116
    %v132 = vpop.permute.xlu0 %131
    %133 = vset.pattern.permute.xlu0 0
    %134 = vperm.xlu0 %133, %v117
    %v135 = vpop.permute.xlu0 %134
    %136 = vset.pattern.permute.xlu0 0
    %137 = vperm.xlu0 %136, %v118
    %v138 = vpop.permute.xlu0 %137
    %139 = vset.pattern.permute.xlu0 0
    %140 = vperm.xlu0 %139, %v119
    %v141 = vpop.permute.xlu0 %140
    %142 = vset.pattern.permute.xlu0 0
    %143 = vperm.xlu0 %142, %v120
    %v144 = vpop.permute.xlu0 %143
    %145 = vset.pattern.permute.xlu0 0
    %146 = vperm.xlu0 %145, %v121
    %v147 = vpop.permute.xlu0 %146
    %vm148 = vcmp.eq.s32.totalorder %v123, %v126
    %vm149 = vcmp.eq.s32.totalorder %v123, %v129
    %vm150 = vcmp.eq.s32.totalorder %v123, %v132
    %vm151 = vcmp.eq.s32.totalorder %v123, %v135
    %vm152 = vcmp.eq.s32.totalorder %v123, %v138
    %vm153 = vcmp.eq.s32.totalorder %v123, %v141
    %vm154 = vcmp.eq.s32.totalorder %v123, %v144
    %vm155 = vcmp.eq.s32.totalorder %v123, %v147
    %v156 = vsel %vm148, 1, 0
    %v157 = vsel %vm149, 1, 0
    %v158 = vsel %vm150, 1, 0
    %v159 = vsel %vm151, 1, 0
    %v160 = vsel %vm152, 1, 0
    %v161 = vsel %vm153, 1, 0
    %v162 = vsel %vm154, 1, 0
    %v163 = vsel %vm155, 1, 0
    %v164 = vcvt.s32.f32 %v156
    %v165 = vcvt.s32.f32 %v157
    %v166 = vcvt.s32.f32 %v158
    %v167 = vcvt.s32.f32 %v159
    %v168 = vcvt.s32.f32 %v160
    %v169 = vcvt.s32.f32 %v161
    %v170 = vcvt.s32.f32 %v162
    %v171 = vcvt.s32.f32 %v163
    %v172 = vpack.c.bf16 %v165, %v164
    %v173 = vpack.c.bf16 %v167, %v166
    %v174 = vpack.c.bf16 %v169, %v168
    %v175 = vpack.c.bf16 %v171, %v170
    %v176 = vld [vmem:[%s3] sm:$0x1]
    %v177 = vld [vmem:[#allocation9] sm:$0x1]
    %v178 = vld [vmem:[%s5] sm:$0x1]
    %v179 = vld [vmem:[#allocation2] sm:$0xf]
    %v180 = vld [vmem:[#allocation2 + $0x4] sm:$0xf]
    %v181 = vld [vmem:[#allocation2 + $0x8] sm:$0xf]
    %v182 = vld [vmem:[#allocation2 + $0xc] sm:$0xf]
    %v183 = vld [vmem:[#allocation2 + $0x10] sm:$0xf]
    %v184 = vld [vmem:[#allocation2 + $0x14] sm:$0xf]
    %v185 = vld [vmem:[#allocation2 + $0x18] sm:$0xf]
    %v186 = vld [vmem:[#allocation2 + $0x1c] sm:$0xf]
    %v187 = vld [vmem:[#allocation2 + $0x20] sm:$0xf]
    %v188 = vld [vmem:[#allocation2 + $0x24] sm:$0xf]
    %v189 = vld [vmem:[#allocation2 + $0x28] sm:$0xf]
    %v190 = vld [vmem:[#allocation2 + $0x2c] sm:$0xf]
    %v191 = vld [vmem:[#allocation2 + $0x30] sm:$0xf]
    %v192 = vld [vmem:[#allocation2 + $0x34] sm:$0xf]
    %v193 = vld [vmem:[#allocation2 + $0x38] sm:$0xf]
    %v194 = vld [vmem:[#allocation2 + $0x3c] sm:$0xf]
    %v211 = vunpack.c.l.b16 %v179
    %v212 = vunpack.c.l.b16 %v180
    %v213 = vunpack.c.l.b16 %v181
    %v214 = vunpack.c.l.b16 %v182
    %v215 = vunpack.c.l.b16 %v183
    %v216 = vunpack.c.l.b16 %v184
    %v217 = vunpack.c.l.b16 %v185
    %v218 = vunpack.c.l.b16 %v186
    %v219 = vunpack.c.l.b16 %v187
    %v220 = vunpack.c.l.b16 %v188
    %v221 = vunpack.c.l.b16 %v189
    %v222 = vunpack.c.l.b16 %v190
    %v223 = vunpack.c.l.b16 %v191
    %v224 = vunpack.c.l.b16 %v192
    %v225 = vunpack.c.l.b16 %v193
    %v226 = vunpack.c.l.b16 %v194
    %v227 = vpack.c.b16 %v212, %v211
    %v228 = vpack.c.b16 %v214, %v213
    %v229 = vpack.c.b16 %v216, %v215
    %v230 = vpack.c.b16 %v218, %v217
    %v231 = vpack.c.b16 %v220, %v219
    %v232 = vpack.c.b16 %v222, %v221
    %v233 = vpack.c.b16 %v224, %v223
    %v234 = vpack.c.b16 %v226, %v225
    %243 = vmatprep.subr.bf16.mxu0 0
    %244 = vmatpush1.bf16.msra.mxu0 %v227
    %245 = vmatprep.subr.bf16.mxu0 0
    %246 = vmatpush1.bf16.msra.mxu0 %v228
    %247 = vmatprep.subr.bf16.mxu0 0
    %248 = vmatpush1.bf16.msra.mxu0 %v229
    %249 = vmatprep.subr.bf16.mxu0 0
    %250 = vmatpush1.bf16.msra.mxu0 %v230
    %251 = vmatprep.subr.bf16.mxu0 0
    %252 = vmatpush1.bf16.msra.mxu0 %v231
    %253 = vmatprep.subr.bf16.mxu0 0
    %254 = vmatpush1.bf16.msra.mxu0 %v232
    %255 = vmatprep.subr.bf16.mxu0 0
    %256 = vmatpush1.bf16.msra.mxu0 %v233
    %257 = vmatprep.subr.bf16.mxu0 0
    %258 = vmatpush1.bf16.msra.mxu0 %v234
    %259 = vmatprep.subr.bf16.mxu0 0
    %260 = vmatpush1.bf16.msra.mxu0 0
    %261 = vmatprep.subr.bf16.mxu0 0
    %262 = vmatpush1.bf16.msra.mxu0 0
    %263 = vmatprep.subr.bf16.mxu0 0
    %264 = vmatpush1.bf16.msra.mxu0 0
    %265 = vmatprep.subr.bf16.mxu0 0
    %266 = vmatpush1.bf16.msra.mxu0 0
    %267 = vmatprep.subr.bf16.mxu0 0
    %268 = vmatpush1.bf16.msra.mxu0 0
    %269 = vmatprep.subr.bf16.mxu0 0
    %270 = vmatpush1.bf16.msra.mxu0 0
    %271 = vmatprep.subr.bf16.mxu0 0
    %272 = vmatpush1.bf16.msra.mxu0 0
    %273 = vmatprep.subr.bf16.mxu0 0
    %274 = vmatpush1.bf16.msra.mxu0 0
    %275 = vmatprep.mubr.bf16.mxu0 0
    %276 = vmatmul.mubr.bf16.gmra.mrb[0].mxu0 %v172
    %v277 = vpop.f32.mrb[0].mxu0
    %v278 = vadd.f32 0.0, %v277
    %v279 = vpop.f32.mrb[0].mxu0
    %v280 = vpop.f32.mrb[0].mxu0
    %v281 = vpop.f32.mrb[0].mxu0
    %282 = vdwg.mxu0
    %v283 = vld [vmem:[#allocation4] sm:$0xf]
    %v284 = vld [vmem:[#allocation4 + $0x4] sm:$0xf]
    %v285 = vld [vmem:[#allocation4 + $0x8] sm:$0xf]
    %v286 = vld [vmem:[#allocation4 + $0xc] sm:$0xf]
    %v291 = vunpack.c.l.b16 %v283
    %v292 = vunpack.c.l.b16 %v284
    %v293 = vunpack.c.l.b16 %v285
    %v294 = vunpack.c.l.b16 %v286
    %v295 = vpack.c.b16 %v292, %v291
    %v296 = vpack.c.b16 %v294, %v293
    %vm299 = vcmask 261120
    %v301 = vsel %vm299, 0, 0
    %303 = vmatprep.subr.bf16.mxu0 0
    %304 = vmatpush1.bf16.msra.mxu0 %v295
    %305 = vmatprep.subr.bf16.mxu0 0
    %306 = vmatpush1.bf16.msra.mxu0 %v296
    %307 = vmatprep.subr.bf16.mxu0 0
    %308 = vmatpush1.bf16.msra.mxu0 0
    %309 = vmatprep.subr.bf16.mxu0 0
    %310 = vmatpush1.bf16.msra.mxu0 0
    %311 = vmatprep.subr.bf16.mxu0 0
    %312 = vmatpush1.bf16.msra.mxu0 0
    %313 = vmatprep.subr.bf16.mxu0 0
    %314 = vmatpush1.bf16.msra.mxu0 0
    %315 = vmatprep.subr.bf16.mxu0 0
    %316 = vmatpush1.bf16.msra.mxu0 0
    %317 = vmatprep.subr.bf16.mxu0 0
    %318 = vmatpush1.bf16.msra.mxu0 0
    %319 = vmatprep.subr.bf16.mxu0 0
    %320 = vmatpush1.bf16.msra.mxu0 0
    %321 = vmatprep.subr.bf16.mxu0 0
    %322 = vmatpush1.bf16.msra.mxu0 0
    %323 = vmatprep.subr.bf16.mxu0 0
    %324 = vmatpush1.bf16.msra.mxu0 0
    %325 = vmatprep.subr.bf16.mxu0 0
    %326 = vmatpush1.bf16.msra.mxu0 0
    %327 = vmatprep.subr.bf16.mxu0 0
    %328 = vmatpush1.bf16.msra.mxu0 0
    %329 = vmatprep.subr.bf16.mxu0 0
    %330 = vmatpush1.bf16.msra.mxu0 0
    %331 = vmatprep.subr.bf16.mxu0 0
    %332 = vmatpush1.bf16.msra.mxu0 0
    %333 = vmatprep.subr.bf16.mxu0 0
    %334 = vmatpush1.bf16.msra.mxu0 0
    %335 = vmatprep.mubr.bf16.mxu0 0
    %336 = vmatmul.mubr.bf16.gmra.mrb[0].mxu0 %v301
    %v337 = vpop.f32.mrb[0].mxu0
    %v338 = vadd.f32 0.0, %v337
    %v339 = vpop.f32.mrb[0].mxu0
    %v340 = vpop.f32.mrb[0].mxu0
    %v341 = vpop.f32.mrb[0].mxu0
    %342 = vdwg.mxu0
    %v343 = vadd.f32 %v278, %v338
    %v344 = vxor.u32 %v343, 2147483648
    %v345 = vmul.f32 %v344, 1.442695
    %v346 = vpow.pop %v345
    %v347 = vadd.f32 %v346, 1.0
    %v348 = vrcp.pop %v347
    %v349 = vmul.f32 1.0, %v348
    %v351 = vlaneseq
    %v352 = vshrl.u32 %v351, 7
    %v353 = vsub.s32 0, %v352
    %v354 = vrot.slane %v176, %v353
    %355 = vrot.lane.b32.xlu0 %v354, 64
    %v356 = vpop.permute.xlu0 %355
    %v358 = vadd.f32 %v338, %v356
    %360 = vrot.lane.b32.xlu0 %v358, 64
    %v361 = vpop.permute.xlu0 %360
    %v363 = vmul.f32 %v349, %v361
    %365 = vrot.lane.b32.xlu0 %v363, 64
    %v366 = vpop.permute.xlu0 %365
    %v368 = vadd.f32 %v278, %v366
    %v369 = vtanh.pop %v368
    %v370 = vsub.f32 1.0, %v349
    %372 = vrot.lane.b32.xlu0 %v369, 96
    %v373 = vpop.permute.xlu0 %372
    %v375 = vmul.f32 %v370, %v373
    %v376 = vmul.f32 %v349, 0.0
    %v377 = vadd.f32 %v375, %v376
    %v378 = vpack.c.bf16 %v377, %v377
    %v380 = vrot.slane %v172, 4
    %382 = vmatprep.subr.bf16.mxu0 0
    %383 = vmatpush1.bf16.msra.mxu0 %v227
    %384 = vmatprep.subr.bf16.mxu0 0
    %385 = vmatpush1.bf16.msra.mxu0 %v228
    %386 = vmatprep.subr.bf16.mxu0 0
    %387 = vmatpush1.bf16.msra.mxu0 %v229
    %388 = vmatprep.subr.bf16.mxu0 0
    %389 = vmatpush1.bf16.msra.mxu0 %v230
    %390 = vmatprep.subr.bf16.mxu0 0
    %391 = vmatpush1.bf16.msra.mxu0 %v231
    %392 = vmatprep.subr.bf16.mxu0 0
    %393 = vmatpush1.bf16.msra.mxu0 %v232
    %394 = vmatprep.subr.bf16.mxu0 0
    %395 = vmatpush1.bf16.msra.mxu0 %v233
    %396 = vmatprep.subr.bf16.mxu0 0
    %397 = vmatpush1.bf16.msra.mxu0 %v234
    %398 = vmatprep.subr.bf16.mxu0 0
    %399 = vmatpush1.bf16.msra.mxu0 0
    %400 = vmatprep.subr.bf16.mxu0 0
    %401 = vmatpush1.bf16.msra.mxu0 0
    %402 = vmatprep.subr.bf16.mxu0 0
    %403 = vmatpush1.bf16.msra.mxu0 0
    %404 = vmatprep.subr.bf16.mxu0 0
    %405 = vmatpush1.bf16.msra.mxu0 0
    %406 = vmatprep.subr.bf16.mxu0 0
    %407 = vmatpush1.bf16.msra.mxu0 0
    %408 = vmatprep.subr.bf16.mxu0 0
    %409 = vmatpush1.bf16.msra.mxu0 0
    %410 = vmatprep.subr.bf16.mxu0 0
    %411 = vmatpush1.bf16.msra.mxu0 0
    %412 = vmatprep.subr.bf16.mxu0 0
    %413 = vmatpush1.bf16.msra.mxu0 0
    %414 = vmatprep.mubr.bf16.mxu0 0
    %415 = vmatmul.mubr.bf16.gmra.mrb[0].mxu0 %v380
    %v416 = vpop.f32.mrb[0].mxu0
    %v417 = vadd.f32 0.0, %v416
    %v418 = vpop.f32.mrb[0].mxu0
    %v419 = vpop.f32.mrb[0].mxu0
    %v420 = vpop.f32.mrb[0].mxu0
    %421 = vdwg.mxu0
    %423 = vrot.lane.b32.xlu0 %v378, 96
    %v424 = vpop.permute.xlu0 %423
    %v426 = vsel %vm299, %v424, 0
    %428 = vmatprep.subr.bf16.mxu0 0
    %429 = vmatpush1.bf16.msra.mxu0 %v295
    %430 = vmatprep.subr.bf16.mxu0 0
    %431 = vmatpush1.bf16.msra.mxu0 %v296
    %432 = vmatprep.subr.bf16.mxu0 0
    %433 = vmatpush1.bf16.msra.mxu0 0
    %434 = vmatprep.subr.bf16.mxu0 0
    %435 = vmatpush1.bf16.msra.mxu0 0
    %436 = vmatprep.subr.bf16.mxu0 0
    %437 = vmatpush1.bf16.msra.mxu0 0
    %438 = vmatprep.subr.bf16.mxu0 0
    %439 = vmatpush1.bf16.msra.mxu0 0
    %440 = vmatprep.subr.bf16.mxu0 0
    %441 = vmatpush1.bf16.msra.mxu0 0
    %442 = vmatprep.subr.bf16.mxu0 0
    %443 = vmatpush1.bf16.msra.mxu0 0
    %444 = vmatprep.subr.bf16.mxu0 0
    %445 = vmatpush1.bf16.msra.mxu0 0
    %446 = vmatprep.subr.bf16.mxu0 0
    %447 = vmatpush1.bf16.msra.mxu0 0
    %448 = vmatprep.subr.bf16.mxu0 0
    %449 = vmatpush1.bf16.msra.mxu0 0
    %450 = vmatprep.subr.bf16.mxu0 0
    %451 = vmatpush1.bf16.msra.mxu0 0
    %452 = vmatprep.subr.bf16.mxu0 0
    %453 = vmatpush1.bf16.msra.mxu0 0
    %454 = vmatprep.subr.bf16.mxu0 0
    %455 = vmatpush1.bf16.msra.mxu0 0
    %456 = vmatprep.subr.bf16.mxu0 0
    %457 = vmatpush1.bf16.msra.mxu0 0
    %458 = vmatprep.subr.bf16.mxu0 0
    %459 = vmatpush1.bf16.msra.mxu0 0
    %460 = vmatprep.mubr.bf16.mxu0 0
    %461 = vmatmul.mubr.bf16.gmra.mrb[0].mxu0 %v426
    %v462 = vpop.f32.mrb[0].mxu0
    %v463 = vadd.f32 0.0, %v462
    %v464 = vpop.f32.mrb[0].mxu0
    %v465 = vpop.f32.mrb[0].mxu0
    %v466 = vpop.f32.mrb[0].mxu0
    %467 = vdwg.mxu0
    %v468 = vadd.f32 %v417, %v463
    %v469 = vxor.u32 %v468, 2147483648
    %v470 = vmul.f32 %v469, 1.442695
    %v471 = vpow.pop %v470
    %v472 = vadd.f32 %v471, 1.0
    %v473 = vrcp.pop %v472
    %v474 = vmul.f32 1.0, %v473
    %v475 = vadd.f32 %v463, %v356
    %477 = vrot.lane.b32.xlu0 %v475, 64
    %v478 = vpop.permute.xlu0 %477
    %v480 = vmul.f32 %v474, %v478
    %482 = vrot.lane.b32.xlu0 %v480, 64
    %v483 = vpop.permute.xlu0 %482
    %v485 = vadd.f32 %v417, %v483
    %v486 = vtanh.pop %v485
    %v487 = vsub.f32 1.0, %v474
    %489 = vrot.lane.b32.xlu0 %v486, 96
    %v490 = vpop.permute.xlu0 %489
    %v492 = vmul.f32 %v487, %v490
    %v493 = vmul.f32 %v474, %v377
    %v494 = vadd.f32 %v492, %v493
    %v495 = vpack.c.bf16 %v494, %v494
    %496 = vmatprep.subr.bf16.mxu0 0
    %497 = vmatpush1.bf16.msra.mxu0 %v227
    %498 = vmatprep.subr.bf16.mxu0 0
    %499 = vmatpush1.bf16.msra.mxu0 %v228
    %500 = vmatprep.subr.bf16.mxu0 0
    %501 = vmatpush1.bf16.msra.mxu0 %v229
    %502 = vmatprep.subr.bf16.mxu0 0
    %503 = vmatpush1.bf16.msra.mxu0 %v230
    %504 = vmatprep.subr.bf16.mxu0 0
    %505 = vmatpush1.bf16.msra.mxu0 %v231
    %506 = vmatprep.subr.bf16.mxu0 0
    %507 = vmatpush1.bf16.msra.mxu0 %v232
    %508 = vmatprep.subr.bf16.mxu0 0
    %509 = vmatpush1.bf16.msra.mxu0 %v233
    %510 = vmatprep.subr.bf16.mxu0 0
    %511 = vmatpush1.bf16.msra.mxu0 %v234
    %512 = vmatprep.subr.bf16.mxu0 0
    %513 = vmatpush1.bf16.msra.mxu0 0
    %514 = vmatprep.subr.bf16.mxu0 0
    %515 = vmatpush1.bf16.msra.mxu0 0
    %516 = vmatprep.subr.bf16.mxu0 0
    %517 = vmatpush1.bf16.msra.mxu0 0
    %518 = vmatprep.subr.bf16.mxu0 0
    %519 = vmatpush1.bf16.msra.mxu0 0
    %520 = vmatprep.subr.bf16.mxu0 0
    %521 = vmatpush1.bf16.msra.mxu0 0
    %522 = vmatprep.subr.bf16.mxu0 0
    %523 = vmatpush1.bf16.msra.mxu0 0
    %524 = vmatprep.subr.bf16.mxu0 0
    %525 = vmatpush1.bf16.msra.mxu0 0
    %526 = vmatprep.subr.bf16.mxu0 0
    %527 = vmatpush1.bf16.msra.mxu0 0
    %528 = vmatprep.mubr.bf16.mxu0 0
    %529 = vmatmul.mubr.bf16.gmra.mrb[0].mxu0 %v173
    %v530 = vpop.f32.mrb[0].mxu0
    %v531 = vadd.f32 0.0, %v530
    %v532 = vpop.f32.mrb[0].mxu0
    %v533 = vpop.f32.mrb[0].mxu0
    %v534 = vpop.f32.mrb[0].mxu0
    %535 = vdwg.mxu0
    %537 = vrot.lane.b32.xlu0 %v495, 96
    %v538 = vpop.permute.xlu0 %537
    %v540 = vsel %vm299, %v538, 0
    %542 = vmatprep.subr.bf16.mxu0 0
    %543 = vmatpush1.bf16.msra.mxu0 %v295
    %544 = vmatprep.subr.bf16.mxu0 0
    %545 = vmatpush1.bf16.msra.mxu0 %v296
    %546 = vmatprep.subr.bf16.mxu0 0
    %547 = vmatpush1.bf16.msra.mxu0 0
    %548 = vmatprep.subr.bf16.mxu0 0
    %549 = vmatpush1.bf16.msra.mxu0 0
    %550 = vmatprep.subr.bf16.mxu0 0
    %551 = vmatpush1.bf16.msra.mxu0 0
    %552 = vmatprep.subr.bf16.mxu0 0
    %553 = vmatpush1.bf16.msra.mxu0 0
    %554 = vmatprep.subr.bf16.mxu0 0
    %555 = vmatpush1.bf16.msra.mxu0 0
    %556 = vmatprep.subr.bf16.mxu0 0
    %557 = vmatpush1.bf16.msra.mxu0 0
    %558 = vmatprep.subr.bf16.mxu0 0
    %559 = vmatpush1.bf16.msra.mxu0 0
    %560 = vmatprep.subr.bf16.mxu0 0
    %561 = vmatpush1.bf16.msra.mxu0 0
    %562 = vmatprep.subr.bf16.mxu0 0
    %563 = vmatpush1.bf16.msra.mxu0 0
    %564 = vmatprep.subr.bf16.mxu0 0
    %565 = vmatpush1.bf16.msra.mxu0 0
    %566 = vmatprep.subr.bf16.mxu0 0
    %567 = vmatpush1.bf16.msra.mxu0 0
    %568 = vmatprep.subr.bf16.mxu0 0
    %569 = vmatpush1.bf16.msra.mxu0 0
    %570 = vmatprep.subr.bf16.mxu0 0
    %571 = vmatpush1.bf16.msra.mxu0 0
    %572 = vmatprep.subr.bf16.mxu0 0
    %573 = vmatpush1.bf16.msra.mxu0 0
    %574 = vmatprep.mubr.bf16.mxu0 0
    %575 = vmatmul.mubr.bf16.gmra.mrb[0].mxu0 %v540
    %v576 = vpop.f32.mrb[0].mxu0
    %v577 = vadd.f32 0.0, %v576
    %v578 = vpop.f32.mrb[0].mxu0
    %v579 = vpop.f32.mrb[0].mxu0
    %v580 = vpop.f32.mrb[0].mxu0
    %581 = vdwg.mxu0
    %v582 = vadd.f32 %v531, %v577
    %v583 = vxor.u32 %v582, 2147483648
    %v584 = vmul.f32 %v583, 1.442695
    %v585 = vpow.pop %v584
    %v586 = vadd.f32 %v585, 1.0
    %v587 = vrcp.pop %v586
    %v588 = vmul.f32 1.0, %v587
    %v589 = vadd.f32 %v577, %v356
    %591 = vrot.lane.b32.xlu0 %v589, 64
    %v592 = vpop.permute.xlu0 %591
    %v594 = vmul.f32 %v588, %v592
    %596 = vrot.lane.b32.xlu0 %v594, 64
    %v597 = vpop.permute.xlu0 %596
    %v599 = vadd.f32 %v531, %v597
    %v600 = vtanh.pop %v599
    %v601 = vsub.f32 1.0, %v588
    %603 = vrot.lane.b32.xlu0 %v600, 96
    %v604 = vpop.permute.xlu0 %603
    %v606 = vmul.f32 %v601, %v604
    %v607 = vmul.f32 %v588, %v494
    %v608 = vadd.f32 %v606, %v607
    %v609 = vpack.c.bf16 %v608, %v608
    %v611 = vrot.slane %v173, 4
    %613 = vmatprep.subr.bf16.mxu0 0
    %614 = vmatpush1.bf16.msra.mxu0 %v227
    %615 = vmatprep.subr.bf16.mxu0 0
    %616 = vmatpush1.bf16.msra.mxu0 %v228
    %617 = vmatprep.subr.bf16.mxu0 0
    %618 = vmatpush1.bf16.msra.mxu0 %v229
    %619 = vmatprep.subr.bf16.mxu0 0
    %620 = vmatpush1.bf16.msra.mxu0 %v230
    %621 = vmatprep.subr.bf16.mxu0 0
    %622 = vmatpush1.bf16.msra.mxu0 %v231
    %623 = vmatprep.subr.bf16.mxu0 0
    %624 = vmatpush1.bf16.msra.mxu0 %v232
    %625 = vmatprep.subr.bf16.mxu0 0
    %626 = vmatpush1.bf16.msra.mxu0 %v233
    %627 = vmatprep.subr.bf16.mxu0 0
    %628 = vmatpush1.bf16.msra.mxu0 %v234
    %629 = vmatprep.subr.bf16.mxu0 0
    %630 = vmatpush1.bf16.msra.mxu0 0
    %631 = vmatprep.subr.bf16.mxu0 0
    %632 = vmatpush1.bf16.msra.mxu0 0
    %633 = vmatprep.subr.bf16.mxu0 0
    %634 = vmatpush1.bf16.msra.mxu0 0
    %635 = vmatprep.subr.bf16.mxu0 0
    %636 = vmatpush1.bf16.msra.mxu0 0
    %637 = vmatprep.subr.bf16.mxu0 0
    %638 = vmatpush1.bf16.msra.mxu0 0
    %639 = vmatprep.subr.bf16.mxu0 0
    %640 = vmatpush1.bf16.msra.mxu0 0
    %641 = vmatprep.subr.bf16.mxu0 0
    %642 = vmatpush1.bf16.msra.mxu0 0
    %643 = vmatprep.subr.bf16.mxu0 0
    %644 = vmatpush1.bf16.msra.mxu0 0
    %645 = vmatprep.mubr.bf16.mxu0 0
    %646 = vmatmul.mubr.bf16.gmra.mrb[0].mxu0 %v611
    %v647 = vpop.f32.mrb[0].mxu0
    %v648 = vadd.f32 0.0, %v647
    %v649 = vpop.f32.mrb[0].mxu0
    %v650 = vpop.f32.mrb[0].mxu0
    %v651 = vpop.f32.mrb[0].mxu0
    %652 = vdwg.mxu0
    %654 = vrot.lane.b32.xlu0 %v609, 96
    %v655 = vpop.permute.xlu0 %654
    %v657 = vsel %vm299, %v655, 0
    %659 = vmatprep.subr.bf16.mxu0 0
    %660 = vmatpush1.bf16.msra.mxu0 %v295
    %661 = vmatprep.subr.bf16.mxu0 0
    %662 = vmatpush1.bf16.msra.mxu0 %v296
    %663 = vmatprep.subr.bf16.mxu0 0
    %664 = vmatpush1.bf16.msra.mxu0 0
    %665 = vmatprep.subr.bf16.mxu0 0
    %666 = vmatpush1.bf16.msra.mxu0 0
    %667 = vmatprep.subr.bf16.mxu0 0
    %668 = vmatpush1.bf16.msra.mxu0 0
    %669 = vmatprep.subr.bf16.mxu0 0
    %670 = vmatpush1.bf16.msra.mxu0 0
    %671 = vmatprep.subr.bf16.mxu0 0
    %672 = vmatpush1.bf16.msra.mxu0 0
    %673 = vmatprep.subr.bf16.mxu0 0
    %674 = vmatpush1.bf16.msra.mxu0 0
    %675 = vmatprep.subr.bf16.mxu0 0
    %676 = vmatpush1.bf16.msra.mxu0 0
    %677 = vmatprep.subr.bf16.mxu0 0
    %678 = vmatpush1.bf16.msra.mxu0 0
    %679 = vmatprep.subr.bf16.mxu0 0
    %680 = vmatpush1.bf16.msra.mxu0 0
    %681 = vmatprep.subr.bf16.mxu0 0
    %682 = vmatpush1.bf16.msra.mxu0 0
    %683 = vmatprep.subr.bf16.mxu0 0
    %684 = vmatpush1.bf16.msra.mxu0 0
    %685 = vmatprep.subr.bf16.mxu0 0
    %686 = vmatpush1.bf16.msra.mxu0 0
    %687 = vmatprep.subr.bf16.mxu0 0
    %688 = vmatpush1.bf16.msra.mxu0 0
    %689 = vmatprep.subr.bf16.mxu0 0
    %690 = vmatpush1.bf16.msra.mxu0 0
    %691 = vmatprep.mubr.bf16.mxu0 0
    %692 = vmatmul.mubr.bf16.gmra.mrb[0].mxu0 %v657
    %v693 = vpop.f32.mrb[0].mxu0
    %v694 = vadd.f32 0.0, %v693
    %v695 = vpop.f32.mrb[0].mxu0
    %v696 = vpop.f32.mrb[0].mxu0
    %v697 = vpop.f32.mrb[0].mxu0
    %698 = vdwg.mxu0
    %v699 = vadd.f32 %v648, %v694
    %v700 = vxor.u32 %v699, 2147483648
    %v701 = vmul.f32 %v700, 1.442695
    %v702 = vpow.pop %v701
    %v703 = vadd.f32 %v702, 1.0
    %v704 = vrcp.pop %v703
    %v705 = vmul.f32 1.0, %v704
    %v706 = vadd.f32 %v694, %v356
    %708 = vrot.lane.b32.xlu0 %v706, 64
    %v709 = vpop.permute.xlu0 %708
    %v711 = vmul.f32 %v705, %v709
    %713 = vrot.lane.b32.xlu0 %v711, 64
    %v714 = vpop.permute.xlu0 %713
    %v716 = vadd.f32 %v648, %v714
    %v717 = vtanh.pop %v716
    %v718 = vsub.f32 1.0, %v705
    %720 = vrot.lane.b32.xlu0 %v717, 96
    %v721 = vpop.permute.xlu0 %720
    %v723 = vmul.f32 %v718, %v721
    %v724 = vmul.f32 %v705, %v608
    %v725 = vadd.f32 %v723, %v724
    %v726 = vpack.c.bf16 %v725, %v725
    %727 = vmatprep.subr.bf16.mxu0 0
    %728 = vmatpush1.bf16.msra.mxu0 %v227
    %729 = vmatprep.subr.bf16.mxu0 0
    %730 = vmatpush1.bf16.msra.mxu0 %v228
    %731 = vmatprep.subr.bf16.mxu0 0
    %732 = vmatpush1.bf16.msra.mxu0 %v229
    %733 = vmatprep.subr.bf16.mxu0 0
    %734 = vmatpush1.bf16.msra.mxu0 %v230
    %735 = vmatprep.subr.bf16.mxu0 0
    %736 = vmatpush1.bf16.msra.mxu0 %v231
    %737 = vmatprep.subr.bf16.mxu0 0
    %738 = vmatpush1.bf16.msra.mxu0 %v232
    %739 = vmatprep.subr.bf16.mxu0 0
    %740 = vmatpush1.bf16.msra.mxu0 %v233
    %741 = vmatprep.subr.bf16.mxu0 0
    %742 = vmatpush1.bf16.msra.mxu0 %v234
    %743 = vmatprep.subr.bf16.mxu0 0
    %744 = vmatpush1.bf16.msra.mxu0 0
    %745 = vmatprep.subr.bf16.mxu0 0
    %746 = vmatpush1.bf16.msra.mxu0 0
    %747 = vmatprep.subr.bf16.mxu0 0
    %748 = vmatpush1.bf16.msra.mxu0 0
    %749 = vmatprep.subr.bf16.mxu0 0
    %750 = vmatpush1.bf16.msra.mxu0 0
    %751 = vmatprep.subr.bf16.mxu0 0
    %752 = vmatpush1.bf16.msra.mxu0 0
    %753 = vmatprep.subr.bf16.mxu0 0
    %754 = vmatpush1.bf16.msra.mxu0 0
    %755 = vmatprep.subr.bf16.mxu0 0
    %756 = vmatpush1.bf16.msra.mxu0 0
    %757 = vmatprep.subr.bf16.mxu0 0
    %758 = vmatpush1.bf16.msra.mxu0 0
    %759 = vmatprep.mubr.bf16.mxu0 0
    %760 = vmatmul.mubr.bf16.gmra.mrb[0].mxu0 %v174
    %v761 = vpop.f32.mrb[0].mxu0
    %v762 = vadd.f32 0.0, %v761
    %v763 = vpop.f32.mrb[0].mxu0
    %v764 = vpop.f32.mrb[0].mxu0
    %v765 = vpop.f32.mrb[0].mxu0
    %766 = vdwg.mxu0
    %768 = vrot.lane.b32.xlu0 %v726, 96
    %v769 = vpop.permute.xlu0 %768
    %v771 = vsel %vm299, %v769, 0
    %773 = vmatprep.subr.bf16.mxu0 0
    %774 = vmatpush1.bf16.msra.mxu0 %v295
    %775 = vmatprep.subr.bf16.mxu0 0
    %776 = vmatpush1.bf16.msra.mxu0 %v296
    %777 = vmatprep.subr.bf16.mxu0 0
    %778 = vmatpush1.bf16.msra.mxu0 0
    %779 = vmatprep.subr.bf16.mxu0 0
    %780 = vmatpush1.bf16.msra.mxu0 0
    %781 = vmatprep.subr.bf16.mxu0 0
    %782 = vmatpush1.bf16.msra.mxu0 0
    %783 = vmatprep.subr.bf16.mxu0 0
    %784 = vmatpush1.bf16.msra.mxu0 0
    %785 = vmatprep.subr.bf16.mxu0 0
    %786 = vmatpush1.bf16.msra.mxu0 0
    %787 = vmatprep.subr.bf16.mxu0 0
    %788 = vmatpush1.bf16.msra.mxu0 0
    %789 = vmatprep.subr.bf16.mxu0 0
    %790 = vmatpush1.bf16.msra.mxu0 0
    %791 = vmatprep.subr.bf16.mxu0 0
    %792 = vmatpush1.bf16.msra.mxu0 0
    %793 = vmatprep.subr.bf16.mxu0 0
    %794 = vmatpush1.bf16.msra.mxu0 0
    %795 = vmatprep.subr.bf16.mxu0 0
    %796 = vmatpush1.bf16.msra.mxu0 0
    %797 = vmatprep.subr.bf16.mxu0 0
    %798 = vmatpush1.bf16.msra.mxu0 0
    %799 = vmatprep.subr.bf16.mxu0 0
    %800 = vmatpush1.bf16.msra.mxu0 0
    %801 = vmatprep.subr.bf16.mxu0 0
    %802 = vmatpush1.bf16.msra.mxu0 0
    %803 = vmatprep.subr.bf16.mxu0 0
    %804 = vmatpush1.bf16.msra.mxu0 0
    %805 = vmatprep.mubr.bf16.mxu0 0
    %806 = vmatmul.mubr.bf16.gmra.mrb[0].mxu0 %v771
    %v807 = vpop.f32.mrb[0].mxu0
    %v808 = vadd.f32 0.0, %v807
    %v809 = vpop.f32.mrb[0].mxu0
    %v810 = vpop.f32.mrb[0].mxu0
    %v811 = vpop.f32.mrb[0].mxu0
    %812 = vdwg.mxu0
    %v813 = vadd.f32 %v762, %v808
    %v814 = vxor.u32 %v813, 2147483648
    %v815 = vmul.f32 %v814, 1.442695
    %v816 = vpow.pop %v815
    %v817 = vadd.f32 %v816, 1.0
    %v818 = vrcp.pop %v817
    %v819 = vmul.f32 1.0, %v818
    %v820 = vadd.f32 %v808, %v356
    %822 = vrot.lane.b32.xlu0 %v820, 64
    %v823 = vpop.permute.xlu0 %822
    %v825 = vmul.f32 %v819, %v823
    %827 = vrot.lane.b32.xlu0 %v825, 64
    %v828 = vpop.permute.xlu0 %827
    %v830 = vadd.f32 %v762, %v828
    %v831 = vtanh.pop %v830
    %v832 = vsub.f32 1.0, %v819
    %834 = vrot.lane.b32.xlu0 %v831, 96
    %v835 = vpop.permute.xlu0 %834
    %v837 = vmul.f32 %v832, %v835
    %v838 = vmul.f32 %v819, %v725
    %v839 = vadd.f32 %v837, %v838
    %v840 = vpack.c.bf16 %v839, %v839
    %v842 = vrot.slane %v174, 4
    %844 = vmatprep.subr.bf16.mxu0 0
    %845 = vmatpush1.bf16.msra.mxu0 %v227
    %846 = vmatprep.subr.bf16.mxu0 0
    %847 = vmatpush1.bf16.msra.mxu0 %v228
    %848 = vmatprep.subr.bf16.mxu0 0
    %849 = vmatpush1.bf16.msra.mxu0 %v229
    %850 = vmatprep.subr.bf16.mxu0 0
    %851 = vmatpush1.bf16.msra.mxu0 %v230
    %852 = vmatprep.subr.bf16.mxu0 0
    %853 = vmatpush1.bf16.msra.mxu0 %v231
    %854 = vmatprep.subr.bf16.mxu0 0
    %855 = vmatpush1.bf16.msra.mxu0 %v232
    %856 = vmatprep.subr.bf16.mxu0 0
    %857 = vmatpush1.bf16.msra.mxu0 %v233
    %858 = vmatprep.subr.bf16.mxu0 0
    %859 = vmatpush1.bf16.msra.mxu0 %v234
    %860 = vmatprep.subr.bf16.mxu0 0
    %861 = vmatpush1.bf16.msra.mxu0 0
    %862 = vmatprep.subr.bf16.mxu0 0
    %863 = vmatpush1.bf16.msra.mxu0 0
    %864 = vmatprep.subr.bf16.mxu0 0
    %865 = vmatpush1.bf16.msra.mxu0 0
    %866 = vmatprep.subr.bf16.mxu0 0
    %867 = vmatpush1.bf16.msra.mxu0 0
    %868 = vmatprep.subr.bf16.mxu0 0
    %869 = vmatpush1.bf16.msra.mxu0 0
    %870 = vmatprep.subr.bf16.mxu0 0
    %871 = vmatpush1.bf16.msra.mxu0 0
    %872 = vmatprep.subr.bf16.mxu0 0
    %873 = vmatpush1.bf16.msra.mxu0 0
    %874 = vmatprep.subr.bf16.mxu0 0
    %875 = vmatpush1.bf16.msra.mxu0 0
    %876 = vmatprep.mubr.bf16.mxu0 0
    %877 = vmatmul.mubr.bf16.gmra.mrb[0].mxu0 %v842
    %v878 = vpop.f32.mrb[0].mxu0
    %v879 = vadd.f32 0.0, %v878
    %v880 = vpop.f32.mrb[0].mxu0
    %v881 = vpop.f32.mrb[0].mxu0
    %v882 = vpop.f32.mrb[0].mxu0
    %883 = vdwg.mxu0
    %885 = vrot.lane.b32.xlu0 %v840, 96
    %v886 = vpop.permute.xlu0 %885
    %v888 = vsel %vm299, %v886, 0
    %890 = vmatprep.subr.bf16.mxu0 0
    %891 = vmatpush1.bf16.msra.mxu0 %v295
    %892 = vmatprep.subr.bf16.mxu0 0
    %893 = vmatpush1.bf16.msra.mxu0 %v296
    %894 = vmatprep.subr.bf16.mxu0 0
    %895 = vmatpush1.bf16.msra.mxu0 0
    %896 = vmatprep.subr.bf16.mxu0 0
    %897 = vmatpush1.bf16.msra.mxu0 0
    %898 = vmatprep.subr.bf16.mxu0 0
    %899 = vmatpush1.bf16.msra.mxu0 0
    %900 = vmatprep.subr.bf16.mxu0 0
    %901 = vmatpush1.bf16.msra.mxu0 0
    %902 = vmatprep.subr.bf16.mxu0 0
    %903 = vmatpush1.bf16.msra.mxu0 0
    %904 = vmatprep.subr.bf16.mxu0 0
    %905 = vmatpush1.bf16.msra.mxu0 0
    %906 = vmatprep.subr.bf16.mxu0 0
    %907 = vmatpush1.bf16.msra.mxu0 0
    %908 = vmatprep.subr.bf16.mxu0 0
    %909 = vmatpush1.bf16.msra.mxu0 0
    %910 = vmatprep.subr.bf16.mxu0 0
    %911 = vmatpush1.bf16.msra.mxu0 0
    %912 = vmatprep.subr.bf16.mxu0 0
    %913 = vmatpush1.bf16.msra.mxu0 0
    %914 = vmatprep.subr.bf16.mxu0 0
    %915 = vmatpush1.bf16.msra.mxu0 0
    %916 = vmatprep.subr.bf16.mxu0 0
    %917 = vmatpush1.bf16.msra.mxu0 0
    %918 = vmatprep.subr.bf16.mxu0 0
    %919 = vmatpush1.bf16.msra.mxu0 0
    %920 = vmatprep.subr.bf16.mxu0 0
    %921 = vmatpush1.bf16.msra.mxu0 0
    %922 = vmatprep.mubr.bf16.mxu0 0
    %923 = vmatmul.mubr.bf16.gmra.mrb[0].mxu0 %v888
    %v924 = vpop.f32.mrb[0].mxu0
    %v925 = vadd.f32 0.0, %v924
    %v926 = vpop.f32.mrb[0].mxu0
    %v927 = vpop.f32.mrb[0].mxu0
    %v928 = vpop.f32.mrb[0].mxu0
    %929 = vdwg.mxu0
    %v930 = vadd.f32 %v879, %v925
    %v931 = vxor.u32 %v930, 2147483648
    %v932 = vmul.f32 %v931, 1.442695
    %v933 = vpow.pop %v932
    %v934 = vadd.f32 %v933, 1.0
    %v935 = vrcp.pop %v934
    %v936 = vmul.f32 1.0, %v935
    %v937 = vadd.f32 %v925, %v356
    %939 = vrot.lane.b32.xlu0 %v937, 64
    %v940 = vpop.permute.xlu0 %939
    %v942 = vmul.f32 %v936, %v940
    %944 = vrot.lane.b32.xlu0 %v942, 64
    %v945 = vpop.permute.xlu0 %944
    %v947 = vadd.f32 %v879, %v945
    %v948 = vtanh.pop %v947
    %v949 = vsub.f32 1.0, %v936
    %951 = vrot.lane.b32.xlu0 %v948, 96
    %v952 = vpop.permute.xlu0 %951
    %v954 = vmul.f32 %v949, %v952
    %v955 = vmul.f32 %v936, %v839
    %v956 = vadd.f32 %v954, %v955
    %v957 = vpack.c.bf16 %v956, %v956
    %958 = vmatprep.subr.bf16.mxu0 0
    %959 = vmatpush1.bf16.msra.mxu0 %v227
    %960 = vmatprep.subr.bf16.mxu0 0
    %961 = vmatpush1.bf16.msra.mxu0 %v228
    %962 = vmatprep.subr.bf16.mxu0 0
    %963 = vmatpush1.bf16.msra.mxu0 %v229
    %964 = vmatprep.subr.bf16.mxu0 0
    %965 = vmatpush1.bf16.msra.mxu0 %v230
    %966 = vmatprep.subr.bf16.mxu0 0
    %967 = vmatpush1.bf16.msra.mxu0 %v231
    %968 = vmatprep.subr.bf16.mxu0 0
    %969 = vmatpush1.bf16.msra.mxu0 %v232
    %970 = vmatprep.subr.bf16.mxu0 0
    %971 = vmatpush1.bf16.msra.mxu0 %v233
    %972 = vmatprep.subr.bf16.mxu0 0
    %973 = vmatpush1.bf16.msra.mxu0 %v234
    %974 = vmatprep.subr.bf16.mxu0 0
    %975 = vmatpush1.bf16.msra.mxu0 0
    %976 = vmatprep.subr.bf16.mxu0 0
    %977 = vmatpush1.bf16.msra.mxu0 0
    %978 = vmatprep.subr.bf16.mxu0 0
    %979 = vmatpush1.bf16.msra.mxu0 0
    %980 = vmatprep.subr.bf16.mxu0 0
    %981 = vmatpush1.bf16.msra.mxu0 0
    %982 = vmatprep.subr.bf16.mxu0 0
    %983 = vmatpush1.bf16.msra.mxu0 0
    %984 = vmatprep.subr.bf16.mxu0 0
    %985 = vmatpush1.bf16.msra.mxu0 0
    %986 = vmatprep.subr.bf16.mxu0 0
    %987 = vmatpush1.bf16.msra.mxu0 0
    %988 = vmatprep.subr.bf16.mxu0 0
    %989 = vmatpush1.bf16.msra.mxu0 0
    %990 = vmatprep.mubr.bf16.mxu0 0
    %991 = vmatmul.mubr.bf16.gmra.mrb[0].mxu0 %v175
    %v992 = vpop.f32.mrb[0].mxu0
    %v993 = vadd.f32 0.0, %v992
    %v994 = vpop.f32.mrb[0].mxu0
    %v995 = vpop.f32.mrb[0].mxu0
    %v996 = vpop.f32.mrb[0].mxu0
    %997 = vdwg.mxu0
    %999 = vrot.lane.b32.xlu0 %v957, 96
    %v1000 = vpop.permute.xlu0 %999
    %v1002 = vsel %vm299, %v1000, 0
    %1004 = vmatprep.subr.bf16.mxu0 0
    %1005 = vmatpush1.bf16.msra.mxu0 %v295
    %1006 = vmatprep.subr.bf16.mxu0 0
    %1007 = vmatpush1.bf16.msra.mxu0 %v296
    %1008 = vmatprep.subr.bf16.mxu0 0
    %1009 = vmatpush1.bf16.msra.mxu0 0
    %1010 = vmatprep.subr.bf16.mxu0 0
    %1011 = vmatpush1.bf16.msra.mxu0 0
    %1012 = vmatprep.subr.bf16.mxu0 0
    %1013 = vmatpush1.bf16.msra.mxu0 0
    %1014 = vmatprep.subr.bf16.mxu0 0
    %1015 = vmatpush1.bf16.msra.mxu0 0
    %1016 = vmatprep.subr.bf16.mxu0 0
    %1017 = vmatpush1.bf16.msra.mxu0 0
    %1018 = vmatprep.subr.bf16.mxu0 0
    %1019 = vmatpush1.bf16.msra.mxu0 0
    %1020 = vmatprep.subr.bf16.mxu0 0
    %1021 = vmatpush1.bf16.msra.mxu0 0
    %1022 = vmatprep.subr.bf16.mxu0 0
    %1023 = vmatpush1.bf16.msra.mxu0 0
    %1024 = vmatprep.subr.bf16.mxu0 0
    %1025 = vmatpush1.bf16.msra.mxu0 0
    %1026 = vmatprep.subr.bf16.mxu0 0
    %1027 = vmatpush1.bf16.msra.mxu0 0
    %1028 = vmatprep.subr.bf16.mxu0 0
    %1029 = vmatpush1.bf16.msra.mxu0 0
    %1030 = vmatprep.subr.bf16.mxu0 0
    %1031 = vmatpush1.bf16.msra.mxu0 0
    %1032 = vmatprep.subr.bf16.mxu0 0
    %1033 = vmatpush1.bf16.msra.mxu0 0
    %1034 = vmatprep.subr.bf16.mxu0 0
    %1035 = vmatpush1.bf16.msra.mxu0 0
    %1036 = vmatprep.mubr.bf16.mxu0 0
    %1037 = vmatmul.mubr.bf16.gmra.mrb[0].mxu0 %v1002
    %v1038 = vpop.f32.mrb[0].mxu0
    %v1039 = vadd.f32 0.0, %v1038
    %v1040 = vpop.f32.mrb[0].mxu0
    %v1041 = vpop.f32.mrb[0].mxu0
    %v1042 = vpop.f32.mrb[0].mxu0
    %1043 = vdwg.mxu0
    %v1044 = vadd.f32 %v993, %v1039
    %v1045 = vxor.u32 %v1044, 2147483648
    %v1046 = vmul.f32 %v1045, 1.442695
    %v1047 = vpow.pop %v1046
    %v1048 = vadd.f32 %v1047, 1.0
    %v1049 = vrcp.pop %v1048
    %v1050 = vmul.f32 1.0, %v1049
    %v1051 = vadd.f32 %v1039, %v356
    %1053 = vrot.lane.b32.xlu0 %v1051, 64
    %v1054 = vpop.permute.xlu0 %1053
    %v1056 = vmul.f32 %v1050, %v1054
    %1058 = vrot.lane.b32.xlu0 %v1056, 64
    %v1059 = vpop.permute.xlu0 %1058
    %v1061 = vadd.f32 %v993, %v1059
    %v1062 = vtanh.pop %v1061
    %v1063 = vsub.f32 1.0, %v1050
    %1065 = vrot.lane.b32.xlu0 %v1062, 96
    %v1066 = vpop.permute.xlu0 %1065
    %v1068 = vmul.f32 %v1063, %v1066
    %v1069 = vmul.f32 %v1050, %v956
    %v1070 = vadd.f32 %v1068, %v1069
    %v1071 = vpack.c.bf16 %v1070, %v1070
    %v1073 = vrot.slane %v175, 4
    %1075 = vmatprep.subr.bf16.mxu0 0
    %1076 = vmatpush1.bf16.msra.mxu0 %v227
    %1077 = vmatprep.subr.bf16.mxu0 0
    %1078 = vmatpush1.bf16.msra.mxu0 %v228
    %1079 = vmatprep.subr.bf16.mxu0 0
    %1080 = vmatpush1.bf16.msra.mxu0 %v229
    %1081 = vmatprep.subr.bf16.mxu0 0
    %1082 = vmatpush1.bf16.msra.mxu0 %v230
    %1083 = vmatprep.subr.bf16.mxu0 0
    %1084 = vmatpush1.bf16.msra.mxu0 %v231
    %1085 = vmatprep.subr.bf16.mxu0 0
    %1086 = vmatpush1.bf16.msra.mxu0 %v232
    %1087 = vmatprep.subr.bf16.mxu0 0
    %1088 = vmatpush1.bf16.msra.mxu0 %v233
    %1089 = vmatprep.subr.bf16.mxu0 0
    %1090 = vmatpush1.bf16.msra.mxu0 %v234
    %1091 = vmatprep.subr.bf16.mxu0 0
    %1092 = vmatpush1.bf16.msra.mxu0 0
    %1093 = vmatprep.subr.bf16.mxu0 0
    %1094 = vmatpush1.bf16.msra.mxu0 0
    %1095 = vmatprep.subr.bf16.mxu0 0
    %1096 = vmatpush1.bf16.msra.mxu0 0
    %1097 = vmatprep.subr.bf16.mxu0 0
    %1098 = vmatpush1.bf16.msra.mxu0 0
    %1099 = vmatprep.subr.bf16.mxu0 0
    %1100 = vmatpush1.bf16.msra.mxu0 0
    %1101 = vmatprep.subr.bf16.mxu0 0
    %1102 = vmatpush1.bf16.msra.mxu0 0
    %1103 = vmatprep.subr.bf16.mxu0 0
    %1104 = vmatpush1.bf16.msra.mxu0 0
    %1105 = vmatprep.subr.bf16.mxu0 0
    %1106 = vmatpush1.bf16.msra.mxu0 0
    %1107 = vmatprep.mubr.bf16.mxu0 0
    %1108 = vmatmul.mubr.bf16.gmra.mrb[0].mxu0 %v1073
    %v1109 = vpop.f32.mrb[0].mxu0
    %v1110 = vadd.f32 0.0, %v1109
    %v1111 = vpop.f32.mrb[0].mxu0
    %v1112 = vpop.f32.mrb[0].mxu0
    %v1113 = vpop.f32.mrb[0].mxu0
    %1114 = vdwg.mxu0
    %1116 = vrot.lane.b32.xlu0 %v1071, 96
    %v1117 = vpop.permute.xlu0 %1116
    %v1119 = vsel %vm299, %v1117, 0
    %1121 = vmatprep.subr.bf16.mxu0 0
    %1122 = vmatpush1.bf16.msra.mxu0 %v295
    %1123 = vmatprep.subr.bf16.mxu0 0
    %1124 = vmatpush1.bf16.msra.mxu0 %v296
    %1125 = vmatprep.subr.bf16.mxu0 0
    %1126 = vmatpush1.bf16.msra.mxu0 0
    %1127 = vmatprep.subr.bf16.mxu0 0
    %1128 = vmatpush1.bf16.msra.mxu0 0
    %1129 = vmatprep.subr.bf16.mxu0 0
    %1130 = vmatpush1.bf16.msra.mxu0 0
    %1131 = vmatprep.subr.bf16.mxu0 0
    %1132 = vmatpush1.bf16.msra.mxu0 0
    %1133 = vmatprep.subr.bf16.mxu0 0
    %1134 = vmatpush1.bf16.msra.mxu0 0
    %1135 = vmatprep.subr.bf16.mxu0 0
    %1136 = vmatpush1.bf16.msra.mxu0 0
    %1137 = vmatprep.subr.bf16.mxu0 0
    %1138 = vmatpush1.bf16.msra.mxu0 0
    %1139 = vmatprep.subr.bf16.mxu0 0
    %1140 = vmatpush1.bf16.msra.mxu0 0
    %1141 = vmatprep.subr.bf16.mxu0 0
    %1142 = vmatpush1.bf16.msra.mxu0 0
    %1143 = vmatprep.subr.bf16.mxu0 0
    %1144 = vmatpush1.bf16.msra.mxu0 0
    %1145 = vmatprep.subr.bf16.mxu0 0
    %1146 = vmatpush1.bf16.msra.mxu0 0
    %1147 = vmatprep.subr.bf16.mxu0 0
    %1148 = vmatpush1.bf16.msra.mxu0 0
    %1149 = vmatprep.subr.bf16.mxu0 0
    %1150 = vmatpush1.bf16.msra.mxu0 0
    %1151 = vmatprep.subr.bf16.mxu0 0
    %1152 = vmatpush1.bf16.msra.mxu0 0
    %1153 = vmatprep.mubr.bf16.mxu0 0
    %1154 = vmatmul.mubr.bf16.gmra.mrb[0].mxu0 %v1119
    %v1155 = vpop.f32.mrb[0].mxu0
    %v1156 = vadd.f32 0.0, %v1155
    %v1157 = vpop.f32.mrb[0].mxu0
    %v1158 = vpop.f32.mrb[0].mxu0
    %v1159 = vpop.f32.mrb[0].mxu0
    %1160 = vdwg.mxu0
    %v1161 = vadd.f32 %v1110, %v1156
    %v1162 = vxor.u32 %v1161, 2147483648
    %v1163 = vmul.f32 %v1162, 1.442695
    %v1164 = vpow.pop %v1163
    %v1165 = vadd.f32 %v1164, 1.0
    %v1166 = vrcp.pop %v1165
    %v1167 = vmul.f32 1.0, %v1166
    %v1168 = vadd.f32 %v1156, %v356
    %1170 = vrot.lane.b32.xlu0 %v1168, 64
    %v1171 = vpop.permute.xlu0 %1170
    %v1173 = vmul.f32 %v1167, %v1171
    %1175 = vrot.lane.b32.xlu0 %v1173, 64
    %v1176 = vpop.permute.xlu0 %1175
    %v1178 = vadd.f32 %v1110, %v1176
    %v1179 = vtanh.pop %v1178
    %v1180 = vsub.f32 1.0, %v1167
    %1182 = vrot.lane.b32.xlu0 %v1179, 96
    %v1183 = vpop.permute.xlu0 %1182
    %v1185 = vmul.f32 %v1180, %v1183
    %v1186 = vmul.f32 %v1167, %v1070
    %v1187 = vadd.f32 %v1185, %v1186
    %v1188 = vpack.c.bf16 %v1187, %v1187
    %v1189 = vld [vmem:[#allocation6] sm:$0xf]
    %v1190 = vld [vmem:[#allocation6 + $0x4] sm:$0xf]
    %v1191 = vld [vmem:[#allocation6 + $0x8] sm:$0xf]
    %v1192 = vld [vmem:[#allocation6 + $0xc] sm:$0xf]
    %v1194 = vlaneseq
    %v1195 = vshrl.u32 %v1194, 7
    %v1196 = vsub.s32 0, %v1195
    %v1197 = vrot.slane %v178, %v1196
    %v1203 = vunpack.c.l.b16 %v1189
    %v1204 = vunpack.c.l.b16 %v1190
    %v1205 = vunpack.c.l.b16 %v1191
    %v1206 = vunpack.c.l.b16 %v1192
    %v1207 = vpack.c.b16 %v1204, %v1203
    %v1208 = vpack.c.b16 %v1206, %v1205
    %1211 = vmatprep.subr.bf16.mxu0 0
    %1212 = vmatpush1.bf16.msra.mxu0 %v1207
    %1213 = vmatprep.subr.bf16.mxu0 0
    %1214 = vmatpush1.bf16.msra.mxu0 %v1208
    %1215 = vmatprep.subr.bf16.mxu0 0
    %1216 = vmatpush1.bf16.msra.mxu0 0
    %1217 = vmatprep.subr.bf16.mxu0 0
    %1218 = vmatpush1.bf16.msra.mxu0 0
    %1219 = vmatprep.subr.bf16.mxu0 0
    %1220 = vmatpush1.bf16.msra.mxu0 0
    %1221 = vmatprep.subr.bf16.mxu0 0
    %1222 = vmatpush1.bf16.msra.mxu0 0
    %1223 = vmatprep.subr.bf16.mxu0 0
    %1224 = vmatpush1.bf16.msra.mxu0 0
    %1225 = vmatprep.subr.bf16.mxu0 0
    %1226 = vmatpush1.bf16.msra.mxu0 0
    %1227 = vmatprep.subr.bf16.mxu0 0
    %1228 = vmatpush1.bf16.msra.mxu0 0
    %1229 = vmatprep.subr.bf16.mxu0 0
    %1230 = vmatpush1.bf16.msra.mxu0 0
    %1231 = vmatprep.subr.bf16.mxu0 0
    %1232 = vmatpush1.bf16.msra.mxu0 0
    %1233 = vmatprep.subr.bf16.mxu0 0
    %1234 = vmatpush1.bf16.msra.mxu0 0
    %1235 = vmatprep.subr.bf16.mxu0 0
    %1236 = vmatpush1.bf16.msra.mxu0 0
    %1237 = vmatprep.subr.bf16.mxu0 0
    %1238 = vmatpush1.bf16.msra.mxu0 0
    %1239 = vmatprep.subr.bf16.mxu0 0
    %1240 = vmatpush1.bf16.msra.mxu0 0
    %1241 = vmatprep.subr.bf16.mxu0 0
    %1242 = vmatpush1.bf16.msra.mxu0 0
    %1243 = vmatprep.mubr.bf16.mxu0 0
    %1244 = vmatmul.mubr.bf16.gmra.mrb[0].mxu0 %v426
    %v1245 = vpop.f32.mrb[0].mxu0
    %v1246 = vadd.f32 %v1197, %v1245
    %v1247 = vpop.f32.mrb[0].mxu0
    %v1248 = vpop.f32.mrb[0].mxu0
    %v1249 = vpop.f32.mrb[0].mxu0
    %1250 = vdwg.mxu0
    %v1251 = vld [vmem:[#allocation7] sm:$0xf]
    %v1252 = vld [vmem:[#allocation7 + $0x4] sm:$0xf]
    %v1253 = vld [vmem:[#allocation7 + $0x8] sm:$0xf]
    %v1254 = vld [vmem:[#allocation7 + $0xc] sm:$0xf]
    %v1259 = vunpack.c.l.b16 %v1251
    %v1260 = vunpack.c.l.b16 %v1252
    %v1261 = vunpack.c.l.b16 %v1253
    %v1262 = vunpack.c.l.b16 %v1254
    %v1263 = vpack.c.b16 %v1260, %v1259
    %v1264 = vpack.c.b16 %v1262, %v1261
    %1267 = vmatprep.subr.bf16.mxu0 0
    %1268 = vmatpush1.bf16.msra.mxu0 %v1263
    %1269 = vmatprep.subr.bf16.mxu0 0
    %1270 = vmatpush1.bf16.msra.mxu0 %v1264
    %1271 = vmatprep.subr.bf16.mxu0 0
    %1272 = vmatpush1.bf16.msra.mxu0 0
    %1273 = vmatprep.subr.bf16.mxu0 0
    %1274 = vmatpush1.bf16.msra.mxu0 0
    %1275 = vmatprep.subr.bf16.mxu0 0
    %1276 = vmatpush1.bf16.msra.mxu0 0
    %1277 = vmatprep.subr.bf16.mxu0 0
    %1278 = vmatpush1.bf16.msra.mxu0 0
    %1279 = vmatprep.subr.bf16.mxu0 0
    %1280 = vmatpush1.bf16.msra.mxu0 0
    %1281 = vmatprep.subr.bf16.mxu0 0
    %1282 = vmatpush1.bf16.msra.mxu0 0
    %1283 = vmatprep.subr.bf16.mxu0 0
    %1284 = vmatpush1.bf16.msra.mxu0 0
    %1285 = vmatprep.subr.bf16.mxu0 0
    %1286 = vmatpush1.bf16.msra.mxu0 0
    %1287 = vmatprep.subr.bf16.mxu0 0
    %1288 = vmatpush1.bf16.msra.mxu0 0
    %1289 = vmatprep.subr.bf16.mxu0 0
    %1290 = vmatpush1.bf16.msra.mxu0 0
    %1291 = vmatprep.subr.bf16.mxu0 0
    %1292 = vmatpush1.bf16.msra.mxu0 0
    %1293 = vmatprep.subr.bf16.mxu0 0
    %1294 = vmatpush1.bf16.msra.mxu0 0
    %1295 = vmatprep.subr.bf16.mxu0 0
    %1296 = vmatpush1.bf16.msra.mxu0 0
    %1297 = vmatprep.subr.bf16.mxu0 0
    %1298 = vmatpush1.bf16.msra.mxu0 0
    %1299 = vmatprep.mubr.bf16.mxu0 0
    %1300 = vmatmul.mubr.bf16.gmra.mrb[0].mxu0 %v301
    %v1301 = vpop.f32.mrb[0].mxu0
    %v1302 = vadd.f32 0.0, %v1301
    %v1303 = vpop.f32.mrb[0].mxu0
    %v1304 = vpop.f32.mrb[0].mxu0
    %v1305 = vpop.f32.mrb[0].mxu0
    %1306 = vdwg.mxu0
    %v1307 = vadd.f32 %v1246, %v1302
    %v1308 = vxor.u32 %v1307, 2147483648
    %v1309 = vmul.f32 %v1308, 1.442695
    %v1310 = vpow.pop %v1309
    %v1311 = vadd.f32 %v1310, 1.0
    %v1312 = vrcp.pop %v1311
    %v1313 = vmul.f32 1.0, %v1312
    %v1315 = vlaneseq
    %v1316 = vshrl.u32 %v1315, 7
    %v1317 = vsub.s32 0, %v1316
    %v1318 = vrot.slane %v177, %v1317
    %1319 = vrot.lane.b32.xlu0 %v1318, 64
    %v1320 = vpop.permute.xlu0 %1319
    %v1322 = vadd.f32 %v1302, %v1320
    %1324 = vrot.lane.b32.xlu0 %v1322, 64
    %v1325 = vpop.permute.xlu0 %1324
    %v1327 = vmul.f32 %v1313, %v1325
    %1329 = vrot.lane.b32.xlu0 %v1327, 64
    %v1330 = vpop.permute.xlu0 %1329
    %v1332 = vadd.f32 %v1246, %v1330
    %v1333 = vtanh.pop %v1332
    %v1334 = vsub.f32 1.0, %v1313
    %1336 = vrot.lane.b32.xlu0 %v1333, 96
    %v1337 = vpop.permute.xlu0 %1336
    %v1339 = vmul.f32 %v1334, %v1337
    %v1340 = vmul.f32 %v1313, 0.0
    %v1341 = vadd.f32 %v1339, %v1340
    %v1342 = vpack.c.bf16 %v1341, %v1341
    %v1343 = vld [vmem:[%s8] sm:$0xf]
    %v1344 = vld [vmem:[%s8 + $0x4] sm:$0xf]
    %v1345 = vld [vmem:[%s8 + $0x8] sm:$0xf]
    %v1346 = vld [vmem:[%s8 + $0xc] sm:$0xf]
    %1347 = vmatprep.subr.bf16.mxu0 0
    %1348 = vmatpush1.bf16.msra.mxu0 %v1207
    %1349 = vmatprep.subr.bf16.mxu0 0
    %1350 = vmatpush1.bf16.msra.mxu0 %v1208
    %1351 = vmatprep.subr.bf16.mxu0 0
    %1352 = vmatpush1.bf16.msra.mxu0 0
    %1353 = vmatprep.subr.bf16.mxu0 0
    %1354 = vmatpush1.bf16.msra.mxu0 0
    %1355 = vmatprep.subr.bf16.mxu0 0
    %1356 = vmatpush1.bf16.msra.mxu0 0
    %1357 = vmatprep.subr.bf16.mxu0 0
    %1358 = vmatpush1.bf16.msra.mxu0 0
    %1359 = vmatprep.subr.bf16.mxu0 0
    %1360 = vmatpush1.bf16.msra.mxu0 0
    %1361 = vmatprep.subr.bf16.mxu0 0
    %1362 = vmatpush1.bf16.msra.mxu0 0
    %1363 = vmatprep.subr.bf16.mxu0 0
    %1364 = vmatpush1.bf16.msra.mxu0 0
    %1365 = vmatprep.subr.bf16.mxu0 0
    %1366 = vmatpush1.bf16.msra.mxu0 0
    %1367 = vmatprep.subr.bf16.mxu0 0
    %1368 = vmatpush1.bf16.msra.mxu0 0
    %1369 = vmatprep.subr.bf16.mxu0 0
    %1370 = vmatpush1.bf16.msra.mxu0 0
    %1371 = vmatprep.subr.bf16.mxu0 0
    %1372 = vmatpush1.bf16.msra.mxu0 0
    %1373 = vmatprep.subr.bf16.mxu0 0
    %1374 = vmatpush1.bf16.msra.mxu0 0
    %1375 = vmatprep.subr.bf16.mxu0 0
    %1376 = vmatpush1.bf16.msra.mxu0 0
    %1377 = vmatprep.subr.bf16.mxu0 0
    %1378 = vmatpush1.bf16.msra.mxu0 0
    %1379 = vmatprep.mubr.bf16.mxu0 0
    %1380 = vmatmul.mubr.bf16.gmra.mrb[0].mxu0 %v540
    %v1381 = vpop.f32.mrb[0].mxu0
    %v1382 = vadd.f32 %v1197, %v1381
    %v1383 = vpop.f32.mrb[0].mxu0
    %v1384 = vpop.f32.mrb[0].mxu0
    %v1385 = vpop.f32.mrb[0].mxu0
    %1386 = vdwg.mxu0
    %1388 = vrot.lane.b32.xlu0 %v1342, 96
    %v1389 = vpop.permute.xlu0 %1388
    %v1391 = vsel %vm299, %v1389, 0
    %1393 = vmatprep.subr.bf16.mxu0 0
    %1394 = vmatpush1.bf16.msra.mxu0 %v1263
    %1395 = vmatprep.subr.bf16.mxu0 0
    %1396 = vmatpush1.bf16.msra.mxu0 %v1264
    %1397 = vmatprep.subr.bf16.mxu0 0
    %1398 = vmatpush1.bf16.msra.mxu0 0
    %1399 = vmatprep.subr.bf16.mxu0 0
    %1400 = vmatpush1.bf16.msra.mxu0 0
    %1401 = vmatprep.subr.bf16.mxu0 0
    %1402 = vmatpush1.bf16.msra.mxu0 0
    %1403 = vmatprep.subr.bf16.mxu0 0
    %1404 = vmatpush1.bf16.msra.mxu0 0
    %1405 = vmatprep.subr.bf16.mxu0 0
    %1406 = vmatpush1.bf16.msra.mxu0 0
    %1407 = vmatprep.subr.bf16.mxu0 0
    %1408 = vmatpush1.bf16.msra.mxu0 0
    %1409 = vmatprep.subr.bf16.mxu0 0
    %1410 = vmatpush1.bf16.msra.mxu0 0
    %1411 = vmatprep.subr.bf16.mxu0 0
    %1412 = vmatpush1.bf16.msra.mxu0 0
    %1413 = vmatprep.subr.bf16.mxu0 0
    %1414 = vmatpush1.bf16.msra.mxu0 0
    %1415 = vmatprep.subr.bf16.mxu0 0
    %1416 = vmatpush1.bf16.msra.mxu0 0
    %1417 = vmatprep.subr.bf16.mxu0 0
    %1418 = vmatpush1.bf16.msra.mxu0 0
    %1419 = vmatprep.subr.bf16.mxu0 0
    %1420 = vmatpush1.bf16.msra.mxu0 0
    %1421 = vmatprep.subr.bf16.mxu0 0
    %1422 = vmatpush1.bf16.msra.mxu0 0
    %1423 = vmatprep.subr.bf16.mxu0 0
    %1424 = vmatpush1.bf16.msra.mxu0 0
    %1425 = vmatprep.mubr.bf16.mxu0 0
    %1426 = vmatmul.mubr.bf16.gmra.mrb[0].mxu0 %v1391
    %v1427 = vpop.f32.mrb[0].mxu0
    %v1428 = vadd.f32 0.0, %v1427
    %v1429 = vpop.f32.mrb[0].mxu0
    %v1430 = vpop.f32.mrb[0].mxu0
    %v1431 = vpop.f32.mrb[0].mxu0
    %1432 = vdwg.mxu0
    %v1433 = vadd.f32 %v1382, %v1428
    %v1434 = vxor.u32 %v1433, 2147483648
    %v1435 = vmul.f32 %v1434, 1.442695
    %v1436 = vpow.pop %v1435
    %v1437 = vadd.f32 %v1436, 1.0
    %v1438 = vrcp.pop %v1437
    %v1439 = vmul.f32 1.0, %v1438
    %v1440 = vadd.f32 %v1428, %v1320
    %1442 = vrot.lane.b32.xlu0 %v1440, 64
    %v1443 = vpop.permute.xlu0 %1442
    %v1445 = vmul.f32 %v1439, %v1443
    %1447 = vrot.lane.b32.xlu0 %v1445, 64
    %v1448 = vpop.permute.xlu0 %1447
    %v1450 = vadd.f32 %v1382, %v1448
    %v1451 = vtanh.pop %v1450
    %v1452 = vsub.f32 1.0, %v1439
    %1454 = vrot.lane.b32.xlu0 %v1451, 96
    %v1455 = vpop.permute.xlu0 %1454
    %v1457 = vmul.f32 %v1452, %v1455
    %v1458 = vmul.f32 %v1439, %v1341
    %v1459 = vadd.f32 %v1457, %v1458
    %v1460 = vpack.c.bf16 %v1459, %v1459
    %v1461 = vld [vmem:[%s8 + $0x10] sm:$0xf]
    %v1462 = vld [vmem:[%s8 + $0x14] sm:$0xf]
    %v1463 = vld [vmem:[%s8 + $0x18] sm:$0xf]
    %v1464 = vld [vmem:[%s8 + $0x1c] sm:$0xf]
    %1466 = vrot.lane.b32.xlu0 %v1460, 96
    %v1467 = vpop.permute.xlu0 %1466
    %v1472 = vunpack.c.l.b16 %v1461
    %v1473 = vunpack.c.l.b16 %v1462
    %v1474 = vunpack.c.l.b16 %v1463
    %v1475 = vunpack.c.l.b16 %v1464
    %v1476 = vpack.c.b16 %v1473, %v1472
    %v1477 = vpack.c.b16 %v1475, %v1474
    %v1481 = vsel %vm299, %v1467, 0
    %1483 = vmatprep.subr.bf16.mxu0 0
    %1484 = vmatpush1.bf16.msra.mxu0 %v1476
    %1485 = vmatprep.subr.bf16.mxu0 0
    %1486 = vmatpush1.bf16.msra.mxu0 %v1477
    %1487 = vmatprep.subr.bf16.mxu0 0
    %1488 = vmatpush1.bf16.msra.mxu0 0
    %1489 = vmatprep.subr.bf16.mxu0 0
    %1490 = vmatpush1.bf16.msra.mxu0 0
    %1491 = vmatprep.subr.bf16.mxu0 0
    %1492 = vmatpush1.bf16.msra.mxu0 0
    %1493 = vmatprep.subr.bf16.mxu0 0
    %1494 = vmatpush1.bf16.msra.mxu0 0
    %1495 = vmatprep.subr.bf16.mxu0 0
    %1496 = vmatpush1.bf16.msra.mxu0 0
    %1497 = vmatprep.subr.bf16.mxu0 0
    %1498 = vmatpush1.bf16.msra.mxu0 0
    %1499 = vmatprep.subr.bf16.mxu0 0
    %1500 = vmatpush1.bf16.msra.mxu0 0
    %1501 = vmatprep.subr.bf16.mxu0 0
    %1502 = vmatpush1.bf16.msra.mxu0 0
    %1503 = vmatprep.subr.bf16.mxu0 0
    %1504 = vmatpush1.bf16.msra.mxu0 0
    %1505 = vmatprep.subr.bf16.mxu0 0
    %1506 = vmatpush1.bf16.msra.mxu0 0
    %1507 = vmatprep.subr.bf16.mxu0 0
    %1508 = vmatpush1.bf16.msra.mxu0 0
    %1509 = vmatprep.subr.bf16.mxu0 0
    %1510 = vmatpush1.bf16.msra.mxu0 0
    %1511 = vmatprep.subr.bf16.mxu0 0
    %1512 = vmatpush1.bf16.msra.mxu0 0
    %1513 = vmatprep.subr.bf16.mxu0 0
    %1514 = vmatpush1.bf16.msra.mxu0 0
    %1515 = vmatprep.mubr.bf16.mxu0 0
    %1516 = vmatmul.mubr.bf16.gmra.mrb[0].mxu0 %v1481
    %v1517 = vpop.f32.mrb[0].mxu0
    %v1518 = vadd.f32 0.0, %v1517
    %v1519 = vpop.f32.mrb[0].mxu0
    %v1520 = vpop.f32.mrb[0].mxu0
    %v1521 = vpop.f32.mrb[0].mxu0
    %1522 = vdwg.mxu0
    %v1527 = vunpack.c.l.b16 %v1343
    %v1528 = vunpack.c.l.b16 %v1344
    %v1529 = vunpack.c.l.b16 %v1345
    %v1530 = vunpack.c.l.b16 %v1346
    %v1531 = vpack.c.b16 %v1528, %v1527
    %v1532 = vpack.c.b16 %v1530, %v1529
    %1535 = vmatprep.subr.bf16.mxu0 0
    %1536 = vmatpush1.bf16.msra.mxu0 %v1531
    %1537 = vmatprep.subr.bf16.mxu0 0
    %1538 = vmatpush1.bf16.msra.mxu0 %v1532
    %1539 = vmatprep.subr.bf16.mxu0 0
    %1540 = vmatpush1.bf16.msra.mxu0 0
    %1541 = vmatprep.subr.bf16.mxu0 0
    %1542 = vmatpush1.bf16.msra.mxu0 0
    %1543 = vmatprep.subr.bf16.mxu0 0
    %1544 = vmatpush1.bf16.msra.mxu0 0
    %1545 = vmatprep.subr.bf16.mxu0 0
    %1546 = vmatpush1.bf16.msra.mxu0 0
    %1547 = vmatprep.subr.bf16.mxu0 0
    %1548 = vmatpush1.bf16.msra.mxu0 0
    %1549 = vmatprep.subr.bf16.mxu0 0
    %1550 = vmatpush1.bf16.msra.mxu0 0
    %1551 = vmatprep.subr.bf16.mxu0 0
    %1552 = vmatpush1.bf16.msra.mxu0 0
    %1553 = vmatprep.subr.bf16.mxu0 0
    %1554 = vmatpush1.bf16.msra.mxu0 0
    %1555 = vmatprep.subr.bf16.mxu0 0
    %1556 = vmatpush1.bf16.msra.mxu0 0
    %1557 = vmatprep.subr.bf16.mxu0 0
    %1558 = vmatpush1.bf16.msra.mxu0 0
    %1559 = vmatprep.subr.bf16.mxu0 0
    %1560 = vmatpush1.bf16.msra.mxu0 0
    %1561 = vmatprep.subr.bf16.mxu0 0
    %1562 = vmatpush1.bf16.msra.mxu0 0
    %1563 = vmatprep.subr.bf16.mxu0 0
    %1564 = vmatpush1.bf16.msra.mxu0 0
    %1565 = vmatprep.subr.bf16.mxu0 0
    %1566 = vmatpush1.bf16.msra.mxu0 0
    %1567 = vmatprep.mubr.bf16.mxu0 0
    %1568 = vmatmul.mubr.bf16.gmra.mrb[0].mxu0 %v1391
    %v1569 = vpop.f32.mrb[0].mxu0
    %v1570 = vadd.f32 %v1518, %v1569
    %v1571 = vpop.f32.mrb[0].mxu0
    %v1572 = vpop.f32.mrb[0].mxu0
    %v1573 = vpop.f32.mrb[0].mxu0
    %1574 = vdwg.mxu0
    %1575 = vmatprep.subr.bf16.mxu0 0
    %1576 = vmatpush1.bf16.msra.mxu0 %v1207
    %1577 = vmatprep.subr.bf16.mxu0 0
    %1578 = vmatpush1.bf16.msra.mxu0 %v1208
    %1579 = vmatprep.subr.bf16.mxu0 0
    %1580 = vmatpush1.bf16.msra.mxu0 0
    %1581 = vmatprep.subr.bf16.mxu0 0
    %1582 = vmatpush1.bf16.msra.mxu0 0
    %1583 = vmatprep.subr.bf16.mxu0 0
    %1584 = vmatpush1.bf16.msra.mxu0 0
    %1585 = vmatprep.subr.bf16.mxu0 0
    %1586 = vmatpush1.bf16.msra.mxu0 0
    %1587 = vmatprep.subr.bf16.mxu0 0
    %1588 = vmatpush1.bf16.msra.mxu0 0
    %1589 = vmatprep.subr.bf16.mxu0 0
    %1590 = vmatpush1.bf16.msra.mxu0 0
    %1591 = vmatprep.subr.bf16.mxu0 0
    %1592 = vmatpush1.bf16.msra.mxu0 0
    %1593 = vmatprep.subr.bf16.mxu0 0
    %1594 = vmatpush1.bf16.msra.mxu0 0
    %1595 = vmatprep.subr.bf16.mxu0 0
    %1596 = vmatpush1.bf16.msra.mxu0 0
    %1597 = vmatprep.subr.bf16.mxu0 0
    %1598 = vmatpush1.bf16.msra.mxu0 0
    %1599 = vmatprep.subr.bf16.mxu0 0
    %1600 = vmatpush1.bf16.msra.mxu0 0
    %1601 = vmatprep.subr.bf16.mxu0 0
    %1602 = vmatpush1.bf16.msra.mxu0 0
    %1603 = vmatprep.subr.bf16.mxu0 0
    %1604 = vmatpush1.bf16.msra.mxu0 0
    %1605 = vmatprep.subr.bf16.mxu0 0
    %1606 = vmatpush1.bf16.msra.mxu0 0
    %1607 = vmatprep.mubr.bf16.mxu0 0
    %1608 = vmatmul.mubr.bf16.gmra.mrb[0].mxu0 %v657
    %v1609 = vpop.f32.mrb[0].mxu0
    %v1610 = vadd.f32 %v1197, %v1609
    %v1611 = vpop.f32.mrb[0].mxu0
    %v1612 = vpop.f32.mrb[0].mxu0
    %v1613 = vpop.f32.mrb[0].mxu0
    %1614 = vdwg.mxu0
    %1615 = vmatprep.subr.bf16.mxu0 0
    %1616 = vmatpush1.bf16.msra.mxu0 %v1263
    %1617 = vmatprep.subr.bf16.mxu0 0
    %1618 = vmatpush1.bf16.msra.mxu0 %v1264
    %1619 = vmatprep.subr.bf16.mxu0 0
    %1620 = vmatpush1.bf16.msra.mxu0 0
    %1621 = vmatprep.subr.bf16.mxu0 0
    %1622 = vmatpush1.bf16.msra.mxu0 0
    %1623 = vmatprep.subr.bf16.mxu0 0
    %1624 = vmatpush1.bf16.msra.mxu0 0
    %1625 = vmatprep.subr.bf16.mxu0 0
    %1626 = vmatpush1.bf16.msra.mxu0 0
    %1627 = vmatprep.subr.bf16.mxu0 0
    %1628 = vmatpush1.bf16.msra.mxu0 0
    %1629 = vmatprep.subr.bf16.mxu0 0
    %1630 = vmatpush1.bf16.msra.mxu0 0
    %1631 = vmatprep.subr.bf16.mxu0 0
    %1632 = vmatpush1.bf16.msra.mxu0 0
    %1633 = vmatprep.subr.bf16.mxu0 0
    %1634 = vmatpush1.bf16.msra.mxu0 0
    %1635 = vmatprep.subr.bf16.mxu0 0
    %1636 = vmatpush1.bf16.msra.mxu0 0
    %1637 = vmatprep.subr.bf16.mxu0 0
    %1638 = vmatpush1.bf16.msra.mxu0 0
    %1639 = vmatprep.subr.bf16.mxu0 0
    %1640 = vmatpush1.bf16.msra.mxu0 0
    %1641 = vmatprep.subr.bf16.mxu0 0
    %1642 = vmatpush1.bf16.msra.mxu0 0
    %1643 = vmatprep.subr.bf16.mxu0 0
    %1644 = vmatpush1.bf16.msra.mxu0 0
    %1645 = vmatprep.subr.bf16.mxu0 0
    %1646 = vmatpush1.bf16.msra.mxu0 0
    %1647 = vmatprep.mubr.bf16.mxu0 0
    %1648 = vmatmul.mubr.bf16.gmra.mrb[0].mxu0 %v1481
    %v1649 = vpop.f32.mrb[0].mxu0
    %v1650 = vadd.f32 0.0, %v1649
    %v1651 = vpop.f32.mrb[0].mxu0
    %v1652 = vpop.f32.mrb[0].mxu0
    %v1653 = vpop.f32.mrb[0].mxu0
    %1654 = vdwg.mxu0
    %v1655 = vadd.f32 %v1610, %v1650
    %v1656 = vxor.u32 %v1655, 2147483648
    %v1657 = vmul.f32 %v1656, 1.442695
    %v1658 = vpow.pop %v1657
    %v1659 = vadd.f32 %v1658, 1.0
    %v1660 = vrcp.pop %v1659
    %v1661 = vmul.f32 1.0, %v1660
    %v1662 = vadd.f32 %v1650, %v1320
    %1664 = vrot.lane.b32.xlu0 %v1662, 64
    %v1665 = vpop.permute.xlu0 %1664
    %v1667 = vmul.f32 %v1661, %v1665
    %1669 = vrot.lane.b32.xlu0 %v1667, 64
    %v1670 = vpop.permute.xlu0 %1669
    %v1672 = vadd.f32 %v1610, %v1670
    %v1673 = vtanh.pop %v1672
    %v1674 = vsub.f32 1.0, %v1661
    %1676 = vrot.lane.b32.xlu0 %v1673, 96
    %v1677 = vpop.permute.xlu0 %1676
    %v1679 = vmul.f32 %v1674, %v1677
    %v1680 = vmul.f32 %v1661, %v1459
    %v1681 = vadd.f32 %v1679, %v1680
    %v1682 = vpack.c.bf16 %v1681, %v1681
    %v1683 = vld [vmem:[%s8 + $0x20] sm:$0xf]
    %v1684 = vld [vmem:[%s8 + $0x24] sm:$0xf]
    %v1685 = vld [vmem:[%s8 + $0x28] sm:$0xf]
    %v1686 = vld [vmem:[%s8 + $0x2c] sm:$0xf]
    %1688 = vrot.lane.b32.xlu0 %v1682, 96
    %v1689 = vpop.permute.xlu0 %1688
    %v1694 = vunpack.c.l.b16 %v1683
    %v1695 = vunpack.c.l.b16 %v1684
    %v1696 = vunpack.c.l.b16 %v1685
    %v1697 = vunpack.c.l.b16 %v1686
    %v1698 = vpack.c.b16 %v1695, %v1694
    %v1699 = vpack.c.b16 %v1697, %v1696
    %v1703 = vsel %vm299, %v1689, 0
    %1705 = vmatprep.subr.bf16.mxu0 0
    %1706 = vmatpush1.bf16.msra.mxu0 %v1698
    %1707 = vmatprep.subr.bf16.mxu0 0
    %1708 = vmatpush1.bf16.msra.mxu0 %v1699
    %1709 = vmatprep.subr.bf16.mxu0 0
    %1710 = vmatpush1.bf16.msra.mxu0 0
    %1711 = vmatprep.subr.bf16.mxu0 0
    %1712 = vmatpush1.bf16.msra.mxu0 0
    %1713 = vmatprep.subr.bf16.mxu0 0
    %1714 = vmatpush1.bf16.msra.mxu0 0
    %1715 = vmatprep.subr.bf16.mxu0 0
    %1716 = vmatpush1.bf16.msra.mxu0 0
    %1717 = vmatprep.subr.bf16.mxu0 0
    %1718 = vmatpush1.bf16.msra.mxu0 0
    %1719 = vmatprep.subr.bf16.mxu0 0
    %1720 = vmatpush1.bf16.msra.mxu0 0
    %1721 = vmatprep.subr.bf16.mxu0 0
    %1722 = vmatpush1.bf16.msra.mxu0 0
    %1723 = vmatprep.subr.bf16.mxu0 0
    %1724 = vmatpush1.bf16.msra.mxu0 0
    %1725 = vmatprep.subr.bf16.mxu0 0
    %1726 = vmatpush1.bf16.msra.mxu0 0
    %1727 = vmatprep.subr.bf16.mxu0 0
    %1728 = vmatpush1.bf16.msra.mxu0 0
    %1729 = vmatprep.subr.bf16.mxu0 0
    %1730 = vmatpush1.bf16.msra.mxu0 0
    %1731 = vmatprep.subr.bf16.mxu0 0
    %1732 = vmatpush1.bf16.msra.mxu0 0
    %1733 = vmatprep.subr.bf16.mxu0 0
    %1734 = vmatpush1.bf16.msra.mxu0 0
    %1735 = vmatprep.subr.bf16.mxu0 0
    %1736 = vmatpush1.bf16.msra.mxu0 0
    %1737 = vmatprep.mubr.bf16.mxu0 0
    %1738 = vmatmul.mubr.bf16.gmra.mrb[0].mxu0 %v1703
    %v1739 = vpop.f32.mrb[0].mxu0
    %v1740 = vadd.f32 0.0, %v1739
    %v1741 = vpop.f32.mrb[0].mxu0
    %v1742 = vpop.f32.mrb[0].mxu0
    %v1743 = vpop.f32.mrb[0].mxu0
    %1744 = vdwg.mxu0
    %v1745 = vadd.f32 %v1570, %v1740
    %1746 = vmatprep.subr.bf16.mxu0 0
    %1747 = vmatpush1.bf16.msra.mxu0 %v1207
    %1748 = vmatprep.subr.bf16.mxu0 0
    %1749 = vmatpush1.bf16.msra.mxu0 %v1208
    %1750 = vmatprep.subr.bf16.mxu0 0
    %1751 = vmatpush1.bf16.msra.mxu0 0
    %1752 = vmatprep.subr.bf16.mxu0 0
    %1753 = vmatpush1.bf16.msra.mxu0 0
    %1754 = vmatprep.subr.bf16.mxu0 0
    %1755 = vmatpush1.bf16.msra.mxu0 0
    %1756 = vmatprep.subr.bf16.mxu0 0
    %1757 = vmatpush1.bf16.msra.mxu0 0
    %1758 = vmatprep.subr.bf16.mxu0 0
    %1759 = vmatpush1.bf16.msra.mxu0 0
    %1760 = vmatprep.subr.bf16.mxu0 0
    %1761 = vmatpush1.bf16.msra.mxu0 0
    %1762 = vmatprep.subr.bf16.mxu0 0
    %1763 = vmatpush1.bf16.msra.mxu0 0
    %1764 = vmatprep.subr.bf16.mxu0 0
    %1765 = vmatpush1.bf16.msra.mxu0 0
    %1766 = vmatprep.subr.bf16.mxu0 0
    %1767 = vmatpush1.bf16.msra.mxu0 0
    %1768 = vmatprep.subr.bf16.mxu0 0
    %1769 = vmatpush1.bf16.msra.mxu0 0
    %1770 = vmatprep.subr.bf16.mxu0 0
    %1771 = vmatpush1.bf16.msra.mxu0 0
    %1772 = vmatprep.subr.bf16.mxu0 0
    %1773 = vmatpush1.bf16.msra.mxu0 0
    %1774 = vmatprep.subr.bf16.mxu0 0
    %1775 = vmatpush1.bf16.msra.mxu0 0
    %1776 = vmatprep.subr.bf16.mxu0 0
    %1777 = vmatpush1.bf16.msra.mxu0 0
    %1778 = vmatprep.mubr.bf16.mxu0 0
    %1779 = vmatmul.mubr.bf16.gmra.mrb[0].mxu0 %v771
    %v1780 = vpop.f32.mrb[0].mxu0
    %v1781 = vadd.f32 %v1197, %v1780
    %v1782 = vpop.f32.mrb[0].mxu0
    %v1783 = vpop.f32.mrb[0].mxu0
    %v1784 = vpop.f32.mrb[0].mxu0
    %1785 = vdwg.mxu0
    %1786 = vmatprep.subr.bf16.mxu0 0
    %1787 = vmatpush1.bf16.msra.mxu0 %v1263
    %1788 = vmatprep.subr.bf16.mxu0 0
    %1789 = vmatpush1.bf16.msra.mxu0 %v1264
    %1790 = vmatprep.subr.bf16.mxu0 0
    %1791 = vmatpush1.bf16.msra.mxu0 0
    %1792 = vmatprep.subr.bf16.mxu0 0
    %1793 = vmatpush1.bf16.msra.mxu0 0
    %1794 = vmatprep.subr.bf16.mxu0 0
    %1795 = vmatpush1.bf16.msra.mxu0 0
    %1796 = vmatprep.subr.bf16.mxu0 0
    %1797 = vmatpush1.bf16.msra.mxu0 0
    %1798 = vmatprep.subr.bf16.mxu0 0
    %1799 = vmatpush1.bf16.msra.mxu0 0
    %1800 = vmatprep.subr.bf16.mxu0 0
    %1801 = vmatpush1.bf16.msra.mxu0 0
    %1802 = vmatprep.subr.bf16.mxu0 0
    %1803 = vmatpush1.bf16.msra.mxu0 0
    %1804 = vmatprep.subr.bf16.mxu0 0
    %1805 = vmatpush1.bf16.msra.mxu0 0
    %1806 = vmatprep.subr.bf16.mxu0 0
    %1807 = vmatpush1.bf16.msra.mxu0 0
    %1808 = vmatprep.subr.bf16.mxu0 0
    %1809 = vmatpush1.bf16.msra.mxu0 0
    %1810 = vmatprep.subr.bf16.mxu0 0
    %1811 = vmatpush1.bf16.msra.mxu0 0
    %1812 = vmatprep.subr.bf16.mxu0 0
    %1813 = vmatpush1.bf16.msra.mxu0 0
    %1814 = vmatprep.subr.bf16.mxu0 0
    %1815 = vmatpush1.bf16.msra.mxu0 0
    %1816 = vmatprep.subr.bf16.mxu0 0
    %1817 = vmatpush1.bf16.msra.mxu0 0
    %1818 = vmatprep.mubr.bf16.mxu0 0
    %1819 = vmatmul.mubr.bf16.gmra.mrb[0].mxu0 %v1703
    %v1820 = vpop.f32.mrb[0].mxu0
    %v1821 = vadd.f32 0.0, %v1820
    %v1822 = vpop.f32.mrb[0].mxu0
    %v1823 = vpop.f32.mrb[0].mxu0
    %v1824 = vpop.f32.mrb[0].mxu0
    %1825 = vdwg.mxu0
    %v1826 = vadd.f32 %v1781, %v1821
    %v1827 = vxor.u32 %v1826, 2147483648
    %v1828 = vmul.f32 %v1827, 1.442695
    %v1829 = vpow.pop %v1828
    %v1830 = vadd.f32 %v1829, 1.0
    %v1831 = vrcp.pop %v1830
    %v1832 = vmul.f32 1.0, %v1831
    %v1833 = vadd.f32 %v1821, %v1320
    %1835 = vrot.lane.b32.xlu0 %v1833, 64
    %v1836 = vpop.permute.xlu0 %1835
    %v1838 = vmul.f32 %v1832, %v1836
    %1840 = vrot.lane.b32.xlu0 %v1838, 64
    %v1841 = vpop.permute.xlu0 %1840
    %v1843 = vadd.f32 %v1781, %v1841
    %v1844 = vtanh.pop %v1843
    %v1845 = vsub.f32 1.0, %v1832
    %1847 = vrot.lane.b32.xlu0 %v1844, 96
    %v1848 = vpop.permute.xlu0 %1847
    %v1850 = vmul.f32 %v1845, %v1848
    %v1851 = vmul.f32 %v1832, %v1681
    %v1852 = vadd.f32 %v1850, %v1851
    %v1853 = vpack.c.bf16 %v1852, %v1852
    %v1854 = vld [vmem:[%s8 + $0x30] sm:$0xf]
    %v1855 = vld [vmem:[%s8 + $0x34] sm:$0xf]
    %v1856 = vld [vmem:[%s8 + $0x38] sm:$0xf]
    %v1857 = vld [vmem:[%s8 + $0x3c] sm:$0xf]
    %1859 = vrot.lane.b32.xlu0 %v1853, 96
    %v1860 = vpop.permute.xlu0 %1859
    %v1865 = vunpack.c.l.b16 %v1854
    %v1866 = vunpack.c.l.b16 %v1855
    %v1867 = vunpack.c.l.b16 %v1856
    %v1868 = vunpack.c.l.b16 %v1857
    %v1869 = vpack.c.b16 %v1866, %v1865
    %v1870 = vpack.c.b16 %v1868, %v1867
    %v1874 = vsel %vm299, %v1860, 0
    %1876 = vmatprep.subr.bf16.mxu0 0
    %1877 = vmatpush1.bf16.msra.mxu0 %v1869
    %1878 = vmatprep.subr.bf16.mxu0 0
    %1879 = vmatpush1.bf16.msra.mxu0 %v1870
    %1880 = vmatprep.subr.bf16.mxu0 0
    %1881 = vmatpush1.bf16.msra.mxu0 0
    %1882 = vmatprep.subr.bf16.mxu0 0
    %1883 = vmatpush1.bf16.msra.mxu0 0
    %1884 = vmatprep.subr.bf16.mxu0 0
    %1885 = vmatpush1.bf16.msra.mxu0 0
    %1886 = vmatprep.subr.bf16.mxu0 0
    %1887 = vmatpush1.bf16.msra.mxu0 0
    %1888 = vmatprep.subr.bf16.mxu0 0
    %1889 = vmatpush1.bf16.msra.mxu0 0
    %1890 = vmatprep.subr.bf16.mxu0 0
    %1891 = vmatpush1.bf16.msra.mxu0 0
    %1892 = vmatprep.subr.bf16.mxu0 0
    %1893 = vmatpush1.bf16.msra.mxu0 0
    %1894 = vmatprep.subr.bf16.mxu0 0
    %1895 = vmatpush1.bf16.msra.mxu0 0
    %1896 = vmatprep.subr.bf16.mxu0 0
    %1897 = vmatpush1.bf16.msra.mxu0 0
    %1898 = vmatprep.subr.bf16.mxu0 0
    %1899 = vmatpush1.bf16.msra.mxu0 0
    %1900 = vmatprep.subr.bf16.mxu0 0
    %1901 = vmatpush1.bf16.msra.mxu0 0
    %1902 = vmatprep.subr.bf16.mxu0 0
    %1903 = vmatpush1.bf16.msra.mxu0 0
    %1904 = vmatprep.subr.bf16.mxu0 0
    %1905 = vmatpush1.bf16.msra.mxu0 0
    %1906 = vmatprep.subr.bf16.mxu0 0
    %1907 = vmatpush1.bf16.msra.mxu0 0
    %1908 = vmatprep.mubr.bf16.mxu0 0
    %1909 = vmatmul.mubr.bf16.gmra.mrb[0].mxu0 %v1874
    %v1910 = vpop.f32.mrb[0].mxu0
    %v1911 = vadd.f32 0.0, %v1910
    %v1912 = vpop.f32.mrb[0].mxu0
    %v1913 = vpop.f32.mrb[0].mxu0
    %v1914 = vpop.f32.mrb[0].mxu0
    %1915 = vdwg.mxu0
    %v1916 = vadd.f32 %v1745, %v1911
    %1917 = vmatprep.subr.bf16.mxu0 0
    %1918 = vmatpush1.bf16.msra.mxu0 %v1207
    %1919 = vmatprep.subr.bf16.mxu0 0
    %1920 = vmatpush1.bf16.msra.mxu0 %v1208
    %1921 = vmatprep.subr.bf16.mxu0 0
    %1922 = vmatpush1.bf16.msra.mxu0 0
    %1923 = vmatprep.subr.bf16.mxu0 0
    %1924 = vmatpush1.bf16.msra.mxu0 0
    %1925 = vmatprep.subr.bf16.mxu0 0
    %1926 = vmatpush1.bf16.msra.mxu0 0
    %1927 = vmatprep.subr.bf16.mxu0 0
    %1928 = vmatpush1.bf16.msra.mxu0 0
    %1929 = vmatprep.subr.bf16.mxu0 0
    %1930 = vmatpush1.bf16.msra.mxu0 0
    %1931 = vmatprep.subr.bf16.mxu0 0
    %1932 = vmatpush1.bf16.msra.mxu0 0
    %1933 = vmatprep.subr.bf16.mxu0 0
    %1934 = vmatpush1.bf16.msra.mxu0 0
    %1935 = vmatprep.subr.bf16.mxu0 0
    %1936 = vmatpush1.bf16.msra.mxu0 0
    %1937 = vmatprep.subr.bf16.mxu0 0
    %1938 = vmatpush1.bf16.msra.mxu0 0
    %1939 = vmatprep.subr.bf16.mxu0 0
    %1940 = vmatpush1.bf16.msra.mxu0 0
    %1941 = vmatprep.subr.bf16.mxu0 0
    %1942 = vmatpush1.bf16.msra.mxu0 0
    %1943 = vmatprep.subr.bf16.mxu0 0
    %1944 = vmatpush1.bf16.msra.mxu0 0
    %1945 = vmatprep.subr.bf16.mxu0 0
    %1946 = vmatpush1.bf16.msra.mxu0 0
    %1947 = vmatprep.subr.bf16.mxu0 0
    %1948 = vmatpush1.bf16.msra.mxu0 0
    %1949 = vmatprep.mubr.bf16.mxu0 0
    %1950 = vmatmul.mubr.bf16.gmra.mrb[0].mxu0 %v888
    %v1951 = vpop.f32.mrb[0].mxu0
    %v1952 = vadd.f32 %v1197, %v1951
    %v1953 = vpop.f32.mrb[0].mxu0
    %v1954 = vpop.f32.mrb[0].mxu0
    %v1955 = vpop.f32.mrb[0].mxu0
    %1956 = vdwg.mxu0
    %1957 = vmatprep.subr.bf16.mxu0 0
    %1958 = vmatpush1.bf16.msra.mxu0 %v1263
    %1959 = vmatprep.subr.bf16.mxu0 0
    %1960 = vmatpush1.bf16.msra.mxu0 %v1264
    %1961 = vmatprep.subr.bf16.mxu0 0
    %1962 = vmatpush1.bf16.msra.mxu0 0
    %1963 = vmatprep.subr.bf16.mxu0 0
    %1964 = vmatpush1.bf16.msra.mxu0 0
    %1965 = vmatprep.subr.bf16.mxu0 0
    %1966 = vmatpush1.bf16.msra.mxu0 0
    %1967 = vmatprep.subr.bf16.mxu0 0
    %1968 = vmatpush1.bf16.msra.mxu0 0
    %1969 = vmatprep.subr.bf16.mxu0 0
    %1970 = vmatpush1.bf16.msra.mxu0 0
    %1971 = vmatprep.subr.bf16.mxu0 0
    %1972 = vmatpush1.bf16.msra.mxu0 0
    %1973 = vmatprep.subr.bf16.mxu0 0
    %1974 = vmatpush1.bf16.msra.mxu0 0
    %1975 = vmatprep.subr.bf16.mxu0 0
    %1976 = vmatpush1.bf16.msra.mxu0 0
    %1977 = vmatprep.subr.bf16.mxu0 0
    %1978 = vmatpush1.bf16.msra.mxu0 0
    %1979 = vmatprep.subr.bf16.mxu0 0
    %1980 = vmatpush1.bf16.msra.mxu0 0
    %1981 = vmatprep.subr.bf16.mxu0 0
    %1982 = vmatpush1.bf16.msra.mxu0 0
    %1983 = vmatprep.subr.bf16.mxu0 0
    %1984 = vmatpush1.bf16.msra.mxu0 0
    %1985 = vmatprep.subr.bf16.mxu0 0
    %1986 = vmatpush1.bf16.msra.mxu0 0
    %1987 = vmatprep.subr.bf16.mxu0 0
    %1988 = vmatpush1.bf16.msra.mxu0 0
    %1989 = vmatprep.mubr.bf16.mxu0 0
    %1990 = vmatmul.mubr.bf16.gmra.mrb[0].mxu0 %v1874
    %v1991 = vpop.f32.mrb[0].mxu0
    %v1992 = vadd.f32 0.0, %v1991
    %v1993 = vpop.f32.mrb[0].mxu0
    %v1994 = vpop.f32.mrb[0].mxu0
    %v1995 = vpop.f32.mrb[0].mxu0
    %1996 = vdwg.mxu0
    %v1997 = vadd.f32 %v1952, %v1992
    %v1998 = vxor.u32 %v1997, 2147483648
    %v1999 = vmul.f32 %v1998, 1.442695
    %v2000 = vpow.pop %v1999
    %v2001 = vadd.f32 %v2000, 1.0
    %v2002 = vrcp.pop %v2001
    %v2003 = vmul.f32 1.0, %v2002
    %v2004 = vadd.f32 %v1992, %v1320
    %2006 = vrot.lane.b32.xlu0 %v2004, 64
    %v2007 = vpop.permute.xlu0 %2006
    %v2009 = vmul.f32 %v2003, %v2007
    %2011 = vrot.lane.b32.xlu0 %v2009, 64
    %v2012 = vpop.permute.xlu0 %2011
    %v2014 = vadd.f32 %v1952, %v2012
    %v2015 = vtanh.pop %v2014
    %v2016 = vsub.f32 1.0, %v2003
    %2018 = vrot.lane.b32.xlu0 %v2015, 96
    %v2019 = vpop.permute.xlu0 %2018
    %v2021 = vmul.f32 %v2016, %v2019
    %v2022 = vmul.f32 %v2003, %v1852
    %v2023 = vadd.f32 %v2021, %v2022
    %v2024 = vpack.c.bf16 %v2023, %v2023
    %v2025 = vld [vmem:[%s8 + $0x40] sm:$0xf]
    %v2026 = vld [vmem:[%s8 + $0x44] sm:$0xf]
    %v2027 = vld [vmem:[%s8 + $0x48] sm:$0xf]
    %v2028 = vld [vmem:[%s8 + $0x4c] sm:$0xf]
    %2030 = vrot.lane.b32.xlu0 %v2024, 96
    %v2031 = vpop.permute.xlu0 %2030
    %v2036 = vunpack.c.l.b16 %v2025
    %v2037 = vunpack.c.l.b16 %v2026
    %v2038 = vunpack.c.l.b16 %v2027
    %v2039 = vunpack.c.l.b16 %v2028
    %v2040 = vpack.c.b16 %v2037, %v2036
    %v2041 = vpack.c.b16 %v2039, %v2038
    %v2045 = vsel %vm299, %v2031, 0
    %2047 = vmatprep.subr.bf16.mxu0 0
    %2048 = vmatpush1.bf16.msra.mxu0 %v2040
    %2049 = vmatprep.subr.bf16.mxu0 0
    %2050 = vmatpush1.bf16.msra.mxu0 %v2041
    %2051 = vmatprep.subr.bf16.mxu0 0
    %2052 = vmatpush1.bf16.msra.mxu0 0
    %2053 = vmatprep.subr.bf16.mxu0 0
    %2054 = vmatpush1.bf16.msra.mxu0 0
    %2055 = vmatprep.subr.bf16.mxu0 0
    %2056 = vmatpush1.bf16.msra.mxu0 0
    %2057 = vmatprep.subr.bf16.mxu0 0
    %2058 = vmatpush1.bf16.msra.mxu0 0
    %2059 = vmatprep.subr.bf16.mxu0 0
    %2060 = vmatpush1.bf16.msra.mxu0 0
    %2061 = vmatprep.subr.bf16.mxu0 0
    %2062 = vmatpush1.bf16.msra.mxu0 0
    %2063 = vmatprep.subr.bf16.mxu0 0
    %2064 = vmatpush1.bf16.msra.mxu0 0
    %2065 = vmatprep.subr.bf16.mxu0 0
    %2066 = vmatpush1.bf16.msra.mxu0 0
    %2067 = vmatprep.subr.bf16.mxu0 0
    %2068 = vmatpush1.bf16.msra.mxu0 0
    %2069 = vmatprep.subr.bf16.mxu0 0
    %2070 = vmatpush1.bf16.msra.mxu0 0
    %2071 = vmatprep.subr.bf16.mxu0 0
    %2072 = vmatpush1.bf16.msra.mxu0 0
    %2073 = vmatprep.subr.bf16.mxu0 0
    %2074 = vmatpush1.bf16.msra.mxu0 0
    %2075 = vmatprep.subr.bf16.mxu0 0
    %2076 = vmatpush1.bf16.msra.mxu0 0
    %2077 = vmatprep.subr.bf16.mxu0 0
    %2078 = vmatpush1.bf16.msra.mxu0 0
    %2079 = vmatprep.mubr.bf16.mxu0 0
    %2080 = vmatmul.mubr.bf16.gmra.mrb[0].mxu0 %v2045
    %v2081 = vpop.f32.mrb[0].mxu0
    %v2082 = vadd.f32 0.0, %v2081
    %v2083 = vpop.f32.mrb[0].mxu0
    %v2084 = vpop.f32.mrb[0].mxu0
    %v2085 = vpop.f32.mrb[0].mxu0
    %2086 = vdwg.mxu0
    %v2087 = vadd.f32 %v1916, %v2082
    %2088 = vmatprep.subr.bf16.mxu0 0
    %2089 = vmatpush1.bf16.msra.mxu0 %v1207
    %2090 = vmatprep.subr.bf16.mxu0 0
    %2091 = vmatpush1.bf16.msra.mxu0 %v1208
    %2092 = vmatprep.subr.bf16.mxu0 0
    %2093 = vmatpush1.bf16.msra.mxu0 0
    %2094 = vmatprep.subr.bf16.mxu0 0
    %2095 = vmatpush1.bf16.msra.mxu0 0
    %2096 = vmatprep.subr.bf16.mxu0 0
    %2097 = vmatpush1.bf16.msra.mxu0 0
    %2098 = vmatprep.subr.bf16.mxu0 0
    %2099 = vmatpush1.bf16.msra.mxu0 0
    %2100 = vmatprep.subr.bf16.mxu0 0
    %2101 = vmatpush1.bf16.msra.mxu0 0
    %2102 = vmatprep.subr.bf16.mxu0 0
    %2103 = vmatpush1.bf16.msra.mxu0 0
    %2104 = vmatprep.subr.bf16.mxu0 0
    %2105 = vmatpush1.bf16.msra.mxu0 0
    %2106 = vmatprep.subr.bf16.mxu0 0
    %2107 = vmatpush1.bf16.msra.mxu0 0
    %2108 = vmatprep.subr.bf16.mxu0 0
    %2109 = vmatpush1.bf16.msra.mxu0 0
    %2110 = vmatprep.subr.bf16.mxu0 0
    %2111 = vmatpush1.bf16.msra.mxu0 0
    %2112 = vmatprep.subr.bf16.mxu0 0
    %2113 = vmatpush1.bf16.msra.mxu0 0
    %2114 = vmatprep.subr.bf16.mxu0 0
    %2115 = vmatpush1.bf16.msra.mxu0 0
    %2116 = vmatprep.subr.bf16.mxu0 0
    %2117 = vmatpush1.bf16.msra.mxu0 0
    %2118 = vmatprep.subr.bf16.mxu0 0
    %2119 = vmatpush1.bf16.msra.mxu0 0
    %2120 = vmatprep.mubr.bf16.mxu0 0
    %2121 = vmatmul.mubr.bf16.gmra.mrb[0].mxu0 %v1002
    %v2122 = vpop.f32.mrb[0].mxu0
    %v2123 = vadd.f32 %v1197, %v2122
    %v2124 = vpop.f32.mrb[0].mxu0
    %v2125 = vpop.f32.mrb[0].mxu0
    %v2126 = vpop.f32.mrb[0].mxu0
    %2127 = vdwg.mxu0
    %2128 = vmatprep.subr.bf16.mxu0 0
    %2129 = vmatpush1.bf16.msra.mxu0 %v1263
    %2130 = vmatprep.subr.bf16.mxu0 0
    %2131 = vmatpush1.bf16.msra.mxu0 %v1264
    %2132 = vmatprep.subr.bf16.mxu0 0
    %2133 = vmatpush1.bf16.msra.mxu0 0
    %2134 = vmatprep.subr.bf16.mxu0 0
    %2135 = vmatpush1.bf16.msra.mxu0 0
    %2136 = vmatprep.subr.bf16.mxu0 0
    %2137 = vmatpush1.bf16.msra.mxu0 0
    %2138 = vmatprep.subr.bf16.mxu0 0
    %2139 = vmatpush1.bf16.msra.mxu0 0
    %2140 = vmatprep.subr.bf16.mxu0 0
    %2141 = vmatpush1.bf16.msra.mxu0 0
    %2142 = vmatprep.subr.bf16.mxu0 0
    %2143 = vmatpush1.bf16.msra.mxu0 0
    %2144 = vmatprep.subr.bf16.mxu0 0
    %2145 = vmatpush1.bf16.msra.mxu0 0
    %2146 = vmatprep.subr.bf16.mxu0 0
    %2147 = vmatpush1.bf16.msra.mxu0 0
    %2148 = vmatprep.subr.bf16.mxu0 0
    %2149 = vmatpush1.bf16.msra.mxu0 0
    %2150 = vmatprep.subr.bf16.mxu0 0
    %2151 = vmatpush1.bf16.msra.mxu0 0
    %2152 = vmatprep.subr.bf16.mxu0 0
    %2153 = vmatpush1.bf16.msra.mxu0 0
    %2154 = vmatprep.subr.bf16.mxu0 0
    %2155 = vmatpush1.bf16.msra.mxu0 0
    %2156 = vmatprep.subr.bf16.mxu0 0
    %2157 = vmatpush1.bf16.msra.mxu0 0
    %2158 = vmatprep.subr.bf16.mxu0 0
    %2159 = vmatpush1.bf16.msra.mxu0 0
    %2160 = vmatprep.mubr.bf16.mxu0 0
    %2161 = vmatmul.mubr.bf16.gmra.mrb[0].mxu0 %v2045
    %v2162 = vpop.f32.mrb[0].mxu0
    %v2163 = vadd.f32 0.0, %v2162
    %v2164 = vpop.f32.mrb[0].mxu0
    %v2165 = vpop.f32.mrb[0].mxu0
    %v2166 = vpop.f32.mrb[0].mxu0
    %2167 = vdwg.mxu0
    %v2168 = vadd.f32 %v2123, %v2163
    %v2169 = vxor.u32 %v2168, 2147483648
    %v2170 = vmul.f32 %v2169, 1.442695
    %v2171 = vpow.pop %v2170
    %v2172 = vadd.f32 %v2171, 1.0
    %v2173 = vrcp.pop %v2172
    %v2174 = vmul.f32 1.0, %v2173
    %v2175 = vadd.f32 %v2163, %v1320
    %2177 = vrot.lane.b32.xlu0 %v2175, 64
    %v2178 = vpop.permute.xlu0 %2177
    %v2180 = vmul.f32 %v2174, %v2178
    %2182 = vrot.lane.b32.xlu0 %v2180, 64
    %v2183 = vpop.permute.xlu0 %2182
    %v2185 = vadd.f32 %v2123, %v2183
    %v2186 = vtanh.pop %v2185
    %v2187 = vsub.f32 1.0, %v2174
    %2189 = vrot.lane.b32.xlu0 %v2186, 96
    %v2190 = vpop.permute.xlu0 %2189
    %v2192 = vmul.f32 %v2187, %v2190
    %v2193 = vmul.f32 %v2174, %v2023
    %v2194 = vadd.f32 %v2192, %v2193
    %v2195 = vpack.c.bf16 %v2194, %v2194
    %v2196 = vld [vmem:[%s8 + $0x50] sm:$0xf]
    %v2197 = vld [vmem:[%s8 + $0x54] sm:$0xf]
    %v2198 = vld [vmem:[%s8 + $0x58] sm:$0xf]
    %v2199 = vld [vmem:[%s8 + $0x5c] sm:$0xf]
    %2201 = vrot.lane.b32.xlu0 %v2195, 96
    %v2202 = vpop.permute.xlu0 %2201
    %v2207 = vunpack.c.l.b16 %v2196
    %v2208 = vunpack.c.l.b16 %v2197
    %v2209 = vunpack.c.l.b16 %v2198
    %v2210 = vunpack.c.l.b16 %v2199
    %v2211 = vpack.c.b16 %v2208, %v2207
    %v2212 = vpack.c.b16 %v2210, %v2209
    %v2216 = vsel %vm299, %v2202, 0
    %2218 = vmatprep.subr.bf16.mxu0 0
    %2219 = vmatpush1.bf16.msra.mxu0 %v2211
    %2220 = vmatprep.subr.bf16.mxu0 0
    %2221 = vmatpush1.bf16.msra.mxu0 %v2212
    %2222 = vmatprep.subr.bf16.mxu0 0
    %2223 = vmatpush1.bf16.msra.mxu0 0
    %2224 = vmatprep.subr.bf16.mxu0 0
    %2225 = vmatpush1.bf16.msra.mxu0 0
    %2226 = vmatprep.subr.bf16.mxu0 0
    %2227 = vmatpush1.bf16.msra.mxu0 0
    %2228 = vmatprep.subr.bf16.mxu0 0
    %2229 = vmatpush1.bf16.msra.mxu0 0
    %2230 = vmatprep.subr.bf16.mxu0 0
    %2231 = vmatpush1.bf16.msra.mxu0 0
    %2232 = vmatprep.subr.bf16.mxu0 0
    %2233 = vmatpush1.bf16.msra.mxu0 0
    %2234 = vmatprep.subr.bf16.mxu0 0
    %2235 = vmatpush1.bf16.msra.mxu0 0
    %2236 = vmatprep.subr.bf16.mxu0 0
    %2237 = vmatpush1.bf16.msra.mxu0 0
    %2238 = vmatprep.subr.bf16.mxu0 0
    %2239 = vmatpush1.bf16.msra.mxu0 0
    %2240 = vmatprep.subr.bf16.mxu0 0
    %2241 = vmatpush1.bf16.msra.mxu0 0
    %2242 = vmatprep.subr.bf16.mxu0 0
    %2243 = vmatpush1.bf16.msra.mxu0 0
    %2244 = vmatprep.subr.bf16.mxu0 0
    %2245 = vmatpush1.bf16.msra.mxu0 0
    %2246 = vmatprep.subr.bf16.mxu0 0
    %2247 = vmatpush1.bf16.msra.mxu0 0
    %2248 = vmatprep.subr.bf16.mxu0 0
    %2249 = vmatpush1.bf16.msra.mxu0 0
    %2250 = vmatprep.mubr.bf16.mxu0 0
    %2251 = vmatmul.mubr.bf16.gmra.mrb[0].mxu0 %v2216
    %v2252 = vpop.f32.mrb[0].mxu0
    %v2253 = vadd.f32 0.0, %v2252
    %v2254 = vpop.f32.mrb[0].mxu0
    %v2255 = vpop.f32.mrb[0].mxu0
    %v2256 = vpop.f32.mrb[0].mxu0
    %2257 = vdwg.mxu0
    %v2258 = vadd.f32 %v2087, %v2253
    %2259 = vmatprep.subr.bf16.mxu0 0
    %2260 = vmatpush1.bf16.msra.mxu0 %v1207
    %2261 = vmatprep.subr.bf16.mxu0 0
    %2262 = vmatpush1.bf16.msra.mxu0 %v1208
    %2263 = vmatprep.subr.bf16.mxu0 0
    %2264 = vmatpush1.bf16.msra.mxu0 0
    %2265 = vmatprep.subr.bf16.mxu0 0
    %2266 = vmatpush1.bf16.msra.mxu0 0
    %2267 = vmatprep.subr.bf16.mxu0 0
    %2268 = vmatpush1.bf16.msra.mxu0 0
    %2269 = vmatprep.subr.bf16.mxu0 0
    %2270 = vmatpush1.bf16.msra.mxu0 0
    %2271 = vmatprep.subr.bf16.mxu0 0
    %2272 = vmatpush1.bf16.msra.mxu0 0
    %2273 = vmatprep.subr.bf16.mxu0 0
    %2274 = vmatpush1.bf16.msra.mxu0 0
    %2275 = vmatprep.subr.bf16.mxu0 0
    %2276 = vmatpush1.bf16.msra.mxu0 0
    %2277 = vmatprep.subr.bf16.mxu0 0
    %2278 = vmatpush1.bf16.msra.mxu0 0
    %2279 = vmatprep.subr.bf16.mxu0 0
    %2280 = vmatpush1.bf16.msra.mxu0 0
    %2281 = vmatprep.subr.bf16.mxu0 0
    %2282 = vmatpush1.bf16.msra.mxu0 0
    %2283 = vmatprep.subr.bf16.mxu0 0
    %2284 = vmatpush1.bf16.msra.mxu0 0
    %2285 = vmatprep.subr.bf16.mxu0 0
    %2286 = vmatpush1.bf16.msra.mxu0 0
    %2287 = vmatprep.subr.bf16.mxu0 0
    %2288 = vmatpush1.bf16.msra.mxu0 0
    %2289 = vmatprep.subr.bf16.mxu0 0
    %2290 = vmatpush1.bf16.msra.mxu0 0
    %2291 = vmatprep.mubr.bf16.mxu0 0
    %2292 = vmatmul.mubr.bf16.gmra.mrb[0].mxu0 %v1119
    %v2293 = vpop.f32.mrb[0].mxu0
    %v2294 = vadd.f32 %v1197, %v2293
    %v2295 = vpop.f32.mrb[0].mxu0
    %v2296 = vpop.f32.mrb[0].mxu0
    %v2297 = vpop.f32.mrb[0].mxu0
    %2298 = vdwg.mxu0
    %2299 = vmatprep.subr.bf16.mxu0 0
    %2300 = vmatpush1.bf16.msra.mxu0 %v1263
    %2301 = vmatprep.subr.bf16.mxu0 0
    %2302 = vmatpush1.bf16.msra.mxu0 %v1264
    %2303 = vmatprep.subr.bf16.mxu0 0
    %2304 = vmatpush1.bf16.msra.mxu0 0
    %2305 = vmatprep.subr.bf16.mxu0 0
    %2306 = vmatpush1.bf16.msra.mxu0 0
    %2307 = vmatprep.subr.bf16.mxu0 0
    %2308 = vmatpush1.bf16.msra.mxu0 0
    %2309 = vmatprep.subr.bf16.mxu0 0
    %2310 = vmatpush1.bf16.msra.mxu0 0
    %2311 = vmatprep.subr.bf16.mxu0 0
    %2312 = vmatpush1.bf16.msra.mxu0 0
    %2313 = vmatprep.subr.bf16.mxu0 0
    %2314 = vmatpush1.bf16.msra.mxu0 0
    %2315 = vmatprep.subr.bf16.mxu0 0
    %2316 = vmatpush1.bf16.msra.mxu0 0
    %2317 = vmatprep.subr.bf16.mxu0 0
    %2318 = vmatpush1.bf16.msra.mxu0 0
    %2319 = vmatprep.subr.bf16.mxu0 0
    %2320 = vmatpush1.bf16.msra.mxu0 0
    %2321 = vmatprep.subr.bf16.mxu0 0
    %2322 = vmatpush1.bf16.msra.mxu0 0
    %2323 = vmatprep.subr.bf16.mxu0 0
    %2324 = vmatpush1.bf16.msra.mxu0 0
    %2325 = vmatprep.subr.bf16.mxu0 0
    %2326 = vmatpush1.bf16.msra.mxu0 0
    %2327 = vmatprep.subr.bf16.mxu0 0
    %2328 = vmatpush1.bf16.msra.mxu0 0
    %2329 = vmatprep.subr.bf16.mxu0 0
    %2330 = vmatpush1.bf16.msra.mxu0 0
    %2331 = vmatprep.mubr.bf16.mxu0 0
    %2332 = vmatmul.mubr.bf16.gmra.mrb[0].mxu0 %v2216
    %v2333 = vpop.f32.mrb[0].mxu0
    %v2334 = vadd.f32 0.0, %v2333
    %v2335 = vpop.f32.mrb[0].mxu0
    %v2336 = vpop.f32.mrb[0].mxu0
    %v2337 = vpop.f32.mrb[0].mxu0
    %2338 = vdwg.mxu0
    %v2339 = vadd.f32 %v2294, %v2334
    %v2340 = vxor.u32 %v2339, 2147483648
    %v2341 = vmul.f32 %v2340, 1.442695
    %v2342 = vpow.pop %v2341
    %v2343 = vadd.f32 %v2342, 1.0
    %v2344 = vrcp.pop %v2343
    %v2345 = vmul.f32 1.0, %v2344
    %v2346 = vadd.f32 %v2334, %v1320
    %2348 = vrot.lane.b32.xlu0 %v2346, 64
    %v2349 = vpop.permute.xlu0 %2348
    %v2351 = vmul.f32 %v2345, %v2349
    %2353 = vrot.lane.b32.xlu0 %v2351, 64
    %v2354 = vpop.permute.xlu0 %2353
    %v2356 = vadd.f32 %v2294, %v2354
    %v2357 = vtanh.pop %v2356
    %v2358 = vsub.f32 1.0, %v2345
    %2360 = vrot.lane.b32.xlu0 %v2357, 96
    %v2361 = vpop.permute.xlu0 %2360
    %v2363 = vmul.f32 %v2358, %v2361
    %v2364 = vmul.f32 %v2345, %v2194
    %v2365 = vadd.f32 %v2363, %v2364
    %v2366 = vpack.c.bf16 %v2365, %v2365
    %v2367 = vld [vmem:[%s8 + $0x60] sm:$0xf]
    %v2368 = vld [vmem:[%s8 + $0x64] sm:$0xf]
    %v2369 = vld [vmem:[%s8 + $0x68] sm:$0xf]
    %v2370 = vld [vmem:[%s8 + $0x6c] sm:$0xf]
    %2372 = vrot.lane.b32.xlu0 %v2366, 96
    %v2373 = vpop.permute.xlu0 %2372
    %v2378 = vunpack.c.l.b16 %v2367
    %v2379 = vunpack.c.l.b16 %v2368
    %v2380 = vunpack.c.l.b16 %v2369
    %v2381 = vunpack.c.l.b16 %v2370
    %v2382 = vpack.c.b16 %v2379, %v2378
    %v2383 = vpack.c.b16 %v2381, %v2380
    %v2387 = vsel %vm299, %v2373, 0
    %2389 = vmatprep.subr.bf16.mxu0 0
    %2390 = vmatpush1.bf16.msra.mxu0 %v2382
    %2391 = vmatprep.subr.bf16.mxu0 0
    %2392 = vmatpush1.bf16.msra.mxu0 %v2383
    %2393 = vmatprep.subr.bf16.mxu0 0
    %2394 = vmatpush1.bf16.msra.mxu0 0
    %2395 = vmatprep.subr.bf16.mxu0 0
    %2396 = vmatpush1.bf16.msra.mxu0 0
    %2397 = vmatprep.subr.bf16.mxu0 0
    %2398 = vmatpush1.bf16.msra.mxu0 0
    %2399 = vmatprep.subr.bf16.mxu0 0
    %2400 = vmatpush1.bf16.msra.mxu0 0
    %2401 = vmatprep.subr.bf16.mxu0 0
    %2402 = vmatpush1.bf16.msra.mxu0 0
    %2403 = vmatprep.subr.bf16.mxu0 0
    %2404 = vmatpush1.bf16.msra.mxu0 0
    %2405 = vmatprep.subr.bf16.mxu0 0
    %2406 = vmatpush1.bf16.msra.mxu0 0
    %2407 = vmatprep.subr.bf16.mxu0 0
    %2408 = vmatpush1.bf16.msra.mxu0 0
    %2409 = vmatprep.subr.bf16.mxu0 0
    %2410 = vmatpush1.bf16.msra.mxu0 0
    %2411 = vmatprep.subr.bf16.mxu0 0
    %2412 = vmatpush1.bf16.msra.mxu0 0
    %2413 = vmatprep.subr.bf16.mxu0 0
    %2414 = vmatpush1.bf16.msra.mxu0 0
    %2415 = vmatprep.subr.bf16.mxu0 0
    %2416 = vmatpush1.bf16.msra.mxu0 0
    %2417 = vmatprep.subr.bf16.mxu0 0
    %2418 = vmatpush1.bf16.msra.mxu0 0
    %2419 = vmatprep.subr.bf16.mxu0 0
    %2420 = vmatpush1.bf16.msra.mxu0 0
    %2421 = vmatprep.mubr.bf16.mxu0 0
    %2422 = vmatmul.mubr.bf16.gmra.mrb[0].mxu0 %v2387
    %v2423 = vpop.f32.mrb[0].mxu0
    %v2424 = vadd.f32 0.0, %v2423
    %v2425 = vpop.f32.mrb[0].mxu0
    %v2426 = vpop.f32.mrb[0].mxu0
    %v2427 = vpop.f32.mrb[0].mxu0
    %2428 = vdwg.mxu0
    %v2429 = vadd.f32 %v2258, %v2424
    %2431 = vrot.lane.b32.xlu0 %v1188, 96
    %v2432 = vpop.permute.xlu0 %2431
    %v2434 = vsel %vm299, %v2432, 0
    %2436 = vmatprep.subr.bf16.mxu0 0
    %2437 = vmatpush1.bf16.msra.mxu0 %v1207
    %2438 = vmatprep.subr.bf16.mxu0 0
    %2439 = vmatpush1.bf16.msra.mxu0 %v1208
    %2440 = vmatprep.subr.bf16.mxu0 0
    %2441 = vmatpush1.bf16.msra.mxu0 0
    %2442 = vmatprep.subr.bf16.mxu0 0
    %2443 = vmatpush1.bf16.msra.mxu0 0
    %2444 = vmatprep.subr.bf16.mxu0 0
    %2445 = vmatpush1.bf16.msra.mxu0 0
    %2446 = vmatprep.subr.bf16.mxu0 0
    %2447 = vmatpush1.bf16.msra.mxu0 0
    %2448 = vmatprep.subr.bf16.mxu0 0
    %2449 = vmatpush1.bf16.msra.mxu0 0
    %2450 = vmatprep.subr.bf16.mxu0 0
    %2451 = vmatpush1.bf16.msra.mxu0 0
    %2452 = vmatprep.subr.bf16.mxu0 0
    %2453 = vmatpush1.bf16.msra.mxu0 0
    %2454 = vmatprep.subr.bf16.mxu0 0
    %2455 = vmatpush1.bf16.msra.mxu0 0
    %2456 = vmatprep.subr.bf16.mxu0 0
    %2457 = vmatpush1.bf16.msra.mxu0 0
    %2458 = vmatprep.subr.bf16.mxu0 0
    %2459 = vmatpush1.bf16.msra.mxu0 0
    %2460 = vmatprep.subr.bf16.mxu0 0
    %2461 = vmatpush1.bf16.msra.mxu0 0
    %2462 = vmatprep.subr.bf16.mxu0 0
    %2463 = vmatpush1.bf16.msra.mxu0 0
    %2464 = vmatprep.subr.bf16.mxu0 0
    %2465 = vmatpush1.bf16.msra.mxu0 0
    %2466 = vmatprep.subr.bf16.mxu0 0
    %2467 = vmatpush1.bf16.msra.mxu0 0
    %2468 = vmatprep.mubr.bf16.mxu0 0
    %2469 = vmatmul.mubr.bf16.gmra.mrb[0].mxu0 %v2434
    %v2470 = vpop.f32.mrb[0].mxu0
    %v2471 = vadd.f32 %v1197, %v2470
    %v2472 = vpop.f32.mrb[0].mxu0
    %v2473 = vpop.f32.mrb[0].mxu0
    %v2474 = vpop.f32.mrb[0].mxu0
    %2475 = vdwg.mxu0
    %2476 = vmatprep.subr.bf16.mxu0 0
    %2477 = vmatpush1.bf16.msra.mxu0 %v1263
    %2478 = vmatprep.subr.bf16.mxu0 0
    %2479 = vmatpush1.bf16.msra.mxu0 %v1264
    %2480 = vmatprep.subr.bf16.mxu0 0
    %2481 = vmatpush1.bf16.msra.mxu0 0
    %2482 = vmatprep.subr.bf16.mxu0 0
    %2483 = vmatpush1.bf16.msra.mxu0 0
    %2484 = vmatprep.subr.bf16.mxu0 0
    %2485 = vmatpush1.bf16.msra.mxu0 0
    %2486 = vmatprep.subr.bf16.mxu0 0
    %2487 = vmatpush1.bf16.msra.mxu0 0
    %2488 = vmatprep.subr.bf16.mxu0 0
    %2489 = vmatpush1.bf16.msra.mxu0 0
    %2490 = vmatprep.subr.bf16.mxu0 0
    %2491 = vmatpush1.bf16.msra.mxu0 0
    %2492 = vmatprep.subr.bf16.mxu0 0
    %2493 = vmatpush1.bf16.msra.mxu0 0
    %2494 = vmatprep.subr.bf16.mxu0 0
    %2495 = vmatpush1.bf16.msra.mxu0 0
    %2496 = vmatprep.subr.bf16.mxu0 0
    %2497 = vmatpush1.bf16.msra.mxu0 0
    %2498 = vmatprep.subr.bf16.mxu0 0
    %2499 = vmatpush1.bf16.msra.mxu0 0
    %2500 = vmatprep.subr.bf16.mxu0 0
    %2501 = vmatpush1.bf16.msra.mxu0 0
    %2502 = vmatprep.subr.bf16.mxu0 0
    %2503 = vmatpush1.bf16.msra.mxu0 0
    %2504 = vmatprep.subr.bf16.mxu0 0
    %2505 = vmatpush1.bf16.msra.mxu0 0
    %2506 = vmatprep.subr.bf16.mxu0 0
    %2507 = vmatpush1.bf16.msra.mxu0 0
    %2508 = vmatprep.mubr.bf16.mxu0 0
    %2509 = vmatmul.mubr.bf16.gmra.mrb[0].mxu0 %v2387
    %v2510 = vpop.f32.mrb[0].mxu0
    %v2511 = vadd.f32 0.0, %v2510
    %v2512 = vpop.f32.mrb[0].mxu0
    %v2513 = vpop.f32.mrb[0].mxu0
    %v2514 = vpop.f32.mrb[0].mxu0
    %2515 = vdwg.mxu0
    %v2516 = vadd.f32 %v2471, %v2511
    %v2517 = vxor.u32 %v2516, 2147483648
    %v2518 = vmul.f32 %v2517, 1.442695
    %v2519 = vpow.pop %v2518
    %v2520 = vadd.f32 %v2519, 1.0
    %v2521 = vrcp.pop %v2520
    %v2522 = vmul.f32 1.0, %v2521
    %v2523 = vadd.f32 %v2511, %v1320
    %2525 = vrot.lane.b32.xlu0 %v2523, 64
    %v2526 = vpop.permute.xlu0 %2525
    %v2528 = vmul.f32 %v2522, %v2526
    %2530 = vrot.lane.b32.xlu0 %v2528, 64
    %v2531 = vpop.permute.xlu0 %2530
    %v2533 = vadd.f32 %v2471, %v2531
    %v2534 = vtanh.pop %v2533
    %v2535 = vsub.f32 1.0, %v2522
    %2537 = vrot.lane.b32.xlu0 %v2534, 96
    %v2538 = vpop.permute.xlu0 %2537
    %v2540 = vmul.f32 %v2535, %v2538
    %v2541 = vmul.f32 %v2522, %v2365
    %v2542 = vadd.f32 %v2540, %v2541
    %v2543 = vpack.c.bf16 %v2542, %v2542
    %v2544 = vld [vmem:[%s8 + $0x70] sm:$0xf]
    %v2545 = vld [vmem:[%s8 + $0x74] sm:$0xf]
    %v2546 = vld [vmem:[%s8 + $0x78] sm:$0xf]
    %v2547 = vld [vmem:[%s8 + $0x7c] sm:$0xf]
    %2549 = vrot.lane.b32.xlu0 %v2543, 96
    %v2550 = vpop.permute.xlu0 %2549
    %v2555 = vunpack.c.l.b16 %v2544
    %v2556 = vunpack.c.l.b16 %v2545
    %v2557 = vunpack.c.l.b16 %v2546
    %v2558 = vunpack.c.l.b16 %v2547
    %v2559 = vpack.c.b16 %v2556, %v2555
    %v2560 = vpack.c.b16 %v2558, %v2557
    %v2564 = vsel %vm299, %v2550, 0
    %2566 = vmatprep.subr.bf16.mxu0 0
    %2567 = vmatpush1.bf16.msra.mxu0 %v2559
    %2568 = vmatprep.subr.bf16.mxu0 0
    %2569 = vmatpush1.bf16.msra.mxu0 %v2560
    %2570 = vmatprep.subr.bf16.mxu0 0
    %2571 = vmatpush1.bf16.msra.mxu0 0
    %2572 = vmatprep.subr.bf16.mxu0 0
    %2573 = vmatpush1.bf16.msra.mxu0 0
    %2574 = vmatprep.subr.bf16.mxu0 0
    %2575 = vmatpush1.bf16.msra.mxu0 0
    %2576 = vmatprep.subr.bf16.mxu0 0
    %2577 = vmatpush1.bf16.msra.mxu0 0
    %2578 = vmatprep.subr.bf16.mxu0 0
    %2579 = vmatpush1.bf16.msra.mxu0 0
    %2580 = vmatprep.subr.bf16.mxu0 0
    %2581 = vmatpush1.bf16.msra.mxu0 0
    %2582 = vmatprep.subr.bf16.mxu0 0
    %2583 = vmatpush1.bf16.msra.mxu0 0
    %2584 = vmatprep.subr.bf16.mxu0 0
    %2585 = vmatpush1.bf16.msra.mxu0 0
    %2586 = vmatprep.subr.bf16.mxu0 0
    %2587 = vmatpush1.bf16.msra.mxu0 0
    %2588 = vmatprep.subr.bf16.mxu0 0
    %2589 = vmatpush1.bf16.msra.mxu0 0
    %2590 = vmatprep.subr.bf16.mxu0 0
    %2591 = vmatpush1.bf16.msra.mxu0 0
    %2592 = vmatprep.subr.bf16.mxu0 0
    %2593 = vmatpush1.bf16.msra.mxu0 0
    %2594 = vmatprep.subr.bf16.mxu0 0
    %2595 = vmatpush1.bf16.msra.mxu0 0
    %2596 = vmatprep.subr.bf16.mxu0 0
    %2597 = vmatpush1.bf16.msra.mxu0 0
    %2598 = vmatprep.mubr.bf16.mxu0 0
    %2599 = vmatmul.mubr.bf16.gmra.mrb[0].mxu0 %v2564
    %v2600 = vpop.f32.mrb[0].mxu0
    %v2601 = vadd.f32 0.0, %v2600
    %v2602 = vpop.f32.mrb[0].mxu0
    %v2603 = vpop.f32.mrb[0].mxu0
    %v2604 = vpop.f32.mrb[0].mxu0
    %2605 = vdwg.mxu0
    %v2606 = vadd.f32 %v2429, %v2601
    %v2607 = vld [vmem:[#allocation10] sm:$0x1]
    %v2609 = vlaneseq
    %v2610 = vshrl.u32 %v2609, 7
    %v2611 = vsub.s32 0, %v2610
    %v2612 = vrot.slane %v2607, %v2611
    %v2614 = vadd.f32 %v2606, %v2612
    %2615 = vmax.xlane.f32.xlu0 %v2614
    %v2616 = vpop.xlane.xlu0 %2615
    %v2617 = vsub.f32 %v2614, %v2616
    %v2618 = vmul.f32 %v2617, 1.442695
    %v2619 = vpow.pop %v2618
    %2620 = vadd.xlane.f32.xlu0 %v2619
    %v2621 = vpop.xlane.xlu0 %2620
    %v2622 = vlog2.pop %v2621
    %v2623 = vmul.f32 %v2622, 0.6931472
    %v2624 = vsub.f32 %v2617, %v2623
    %2625 = vst [vmem:[%s10] sm:$0xff] %v2624
    // Predicated region
    $region66: #{gru_model_forward.1} parent=1 // pred_check
      _
    $region67: #{gru_model_forward.1} parent=1 // pred_check_branch
      %2627 = sbr.rel (0) target = $region69
    $region68: #{gru_model_forward.1} parent=1 // pred_region
      _
    $region69: #{gru_model_forward.1} parent=1 // pred_fallthru
      _
    // Predicated region
    $region70: #{gru_model_forward.1} parent=1 // pred_check
      _
    $region71: #{gru_model_forward.1} parent=1 // pred_check_branch
      %2629 = sbr.rel (0) target = $region73
    $region72: #{gru_model_forward.1} parent=1 // pred_region
      _
    $region73: #{gru_model_forward.1} parent=1 // pred_fallthru
      _
    %2630 = vsyncpa [#allocation3], 1
    %2631 = vsyncpa [#allocation5], 1
    %2632 = vsyncpa [#allocation8], 1
    %2633 = vsyncpa [#allocation11], 1

</llo_original>
